<compile_context>
chip_gen: v6e
topology: v6e:2x2x1
jax: 0.10.0
libtpu: 0.0.40
codegen_flags: <defaults>
</compile_context>

<pallas_src>
import functools

import jax
import jax.numpy as jnp
from jax import lax
from jax.experimental import pallas as pl
from jax.experimental.pallas import tpu as pltpu


# ---------------------------------------------------------------------------
# Parameter folding / repacking (one-time, load-time work)
# ---------------------------------------------------------------------------
def fold_bn(gamma, beta, mean, var, eps=1e-5):
    a = gamma / jnp.sqrt(var + eps)
    b = beta - mean * a
    return a, b


def choose_hw_tile(hw):
    """Lane-dense HW tile: a multiple of 128, capped at 1024 so the double-buffered
    x tile (2 MB/buffer at C=512, f32) stays far under v5e's 16 MiB scoped VMEM."""
    return int(min(1024, ((hw + 127) // 128) * 128))


def prepare_kernel_params(params, H, W, t_hw):
    """Fold BN2d / (BN1d+Linear) and build the per-tap averaging matrix."""
    a2, b2 = fold_bn(params["bn2_gamma"], params["bn2_beta"],
                     params["bn2_mean"], params["bn2_var"])
    a1, b1 = fold_bn(params["bn1_gamma"], params["bn1_beta"],
                     params["bn1_mean"], params["bn1_var"])

    conv_w = params["conv_w"][..., 0]                 # (Cout, Cin, K)
    cout, cin, K = conv_w.shape
    lin_w_t = params["lin_w"].T                       # (Cout, E)

    # Fold BN1d + Linear into the conv weight (exact):
    m = a1[:, None] * lin_w_t                         # (Cout, E)
    w_ck_o = jnp.transpose(conv_w, (1, 2, 0))         # (Cin, K, Cout)
    w_comb = jnp.einsum("cko,oe->kce", w_ck_o, m)     # (K, Cin, E)
    bias_comb = (b1 @ lin_w_t + params["lin_b"])[None, :]   # (1, E)

    # BN2d folded scale/shift packed into one (C, 2) block.
    bn2 = jnp.stack([a2, b2], axis=1)                 # (C, 2)

    # Per-tap averaging matrix over the padded, flattened (H*W) axis.
    HW = H * W
    H_out = H - K + 1
    assert H_out >= 1, "H must be >= conv kernel height (5)"
    HW_pad = ((HW + t_hw - 1) // t_hw) * t_hw
    hw = jnp.arange(HW_pad, dtype=jnp.int32)
    h_of = hw // W
    valid = hw < HW                                   # zero rows mask the HW padding
    ks = jnp.arange(K, dtype=jnp.int32)
    in_win = (h_of[:, None] >= ks[None, :]) & (h_of[:, None] < ks[None, :] + H_out)
    sel = jnp.where(in_win & valid[:, None],
                    1.0 / float(H_out * W), 0.0).astype(jnp.float32)   # (HW_pad, K)

    return {"bn2": bn2, "sel": sel, "w_comb": w_comb, "bias": bias_comb}


# ---------------------------------------------------------------------------
# Single fused kernel:
#   BN2d + ReLU + per-tap pooling (accumulated over HW tiles)
#   + folded conv/BN1d/Linear contraction -> embedding
# ---------------------------------------------------------------------------
def _fused_forward_call(x_flat_pad, bn2, sel, w_comb, bias, t_hw):
    N, C, HWp = x_flat_pad.shape
    K = sel.shape[1]
    E = w_comb.shape[2]
    n_t = HWp // t_hw

    def kernel(x_ref, bn2_ref, sel_ref, w_ref, b_ref, o_ref, acc_ref):
        t = pl.program_id(1)

        @pl.when(t == 0)
        def _init():
            acc_ref[...] = jnp.zeros_like(acc_ref)

        # Fused BN2d (eval stats) + ReLU on one lane-dense HW tile.
        x = x_ref[0].astype(jnp.float32)                       # (C, t_hw)
        act = jnp.maximum(x * bn2_ref[:, 0:1] + bn2_ref[:, 1:2], 0.0)
        # Per-tap mean accumulation as one MXU matmul.
        acc_ref[...] += jnp.dot(act, sel_ref[...].astype(jnp.float32),
                                preferred_element_type=jnp.float32)   # (C, K)

        @pl.when(t == pl.num_programs(1) - 1)
        def _finalize():
            emb = b_ref[...].astype(jnp.float32)               # (1, E)
            for k in range(K):                                 # K = 5, static unroll
                emb = emb + jnp.sum(
                    acc_ref[:, k:k + 1] * w_ref[k].astype(jnp.float32),
                    axis=0, keepdims=True)                     # (1, E)
            o_ref[0] = emb.astype(o_ref.dtype)

    out = pl.pallas_call(
        kernel,
        out_shape=jax.ShapeDtypeStruct((N, 1, E), jnp.float32),
        grid_spec=pltpu.PrefetchScalarGridSpec(
            num_scalar_prefetch=0,
            grid=(N, n_t),
            in_specs=[
                pl.BlockSpec((1, C, t_hw), lambda n, t: (n, 0, t)),   # x tile
                pl.BlockSpec((C, 2), lambda n, t: (0, 0)),            # BN2d scale/shift
                pl.BlockSpec((t_hw, K), lambda n, t: (t, 0)),         # averaging matrix
                pl.BlockSpec((K, C, E), lambda n, t: (0, 0, 0)),      # folded weight (resident)
                pl.BlockSpec((1, E), lambda n, t: (0, 0)),            # folded bias
            ],
            out_specs=pl.BlockSpec((1, 1, E), lambda n, t: (n, 0, 0)),
            scratch_shapes=[pltpu.VMEM((C, K), jnp.float32)],         # per-tap accumulator
        ),
        compiler_params=pltpu.CompilerParams(
            dimension_semantics=("parallel", "arbitrary")),
    )(x_flat_pad, bn2, sel, w_comb, bias)
    return out.reshape(N, E)


@functools.partial(jax.jit, static_argnames=("t_hw",))
def main_model_forward(x_nchw, kp, t_hw):
    N, C, H, W = x_nchw.shape
    HW = H * W
    HW_pad = kp["sel"].shape[0]

    # Free reshape: consume x in its native NCHW order (no HBM transpose pass).
    x_flat = x_nchw.reshape(N, C, HW)
    if HW_pad != HW:
        # Pad the lane axis to a multiple of the tile; padded positions are masked
        # by the zero rows of `sel` inside the kernel.
        x_flat = jnp.pad(x_flat, ((0, 0), (0, 0), (0, HW_pad - HW)))

    return _fused_forward_call(x_flat, kp["bn2"], kp["sel"],
                               kp["w_comb"], kp["bias"], t_hw)


# ---------------------------------------------------------------------------
# Pure-JAX reference (uses XLA conv) for correctness checking
# ---------------------------------------------------------------------------
def reference_forward(x_nchw, params):
    a2, b2 = fold_bn(params["bn2_gamma"], params["bn2_beta"],
                     params["bn2_mean"], params["bn2_var"])
    act = jnp.maximum(x_nchw * a2[None, :, None, None] + b2[None, :, None, None], 0.0)
    conv = lax.conv_general_dilated(
        act, params["conv_w"], window_strides=(1, 1), padding="VALID",
        dimension_numbers=("NCHW", "OIHW", "NCHW"))
    pooled = conv.mean(axis=(2, 3))
    a1, b1 = fold_bn(params["bn1_gamma"], params["bn1_beta"],
                     params["bn1_mean"], params["bn1_var"])
    z = pooled * a1[None, :] + b1[None, :]
    return z @ params["lin_w"].T + params["lin_b"][None, :]


if __name__ == "__main__":
    # Shapes implied by the module: Cin = Cout = 512 (fixed), em_size chosen small.
    N, C, H, W = 2, 512, 8, 4          # (N, 512, H, W) = frontend output
    EM = 64

    key = jax.random.PRNGKey(0)
    ks = jax.random.split(key, 12)
    params = {
        # FrameFeatureModule: BatchNorm2d(512) running stats + affine, Conv2d weight
        "bn2_gamma": jax.random.normal(ks[0], (C,), jnp.float32) * 0.1 + 1.0,
        "bn2_beta":  jax.random.normal(ks[1], (C,), jnp.float32) * 0.1,
        "bn2_mean":  jax.random.normal(ks[2], (C,), jnp.float32) * 0.1,
        "bn2_var":   jax.random.uniform(ks[3], (C,), jnp.float32, 0.5, 1.5),
        "conv_w":    jax.random.normal(ks[4], (C, C, 5, 1), jnp.float32) * 0.02,
        # EmbeddingGenerator: BatchNorm1d(512) + Linear(512, EM)
        "bn1_gamma": jax.random.normal(ks[5], (C,), jnp.float32) * 0.1 + 1.0,
        "bn1_beta":  jax.random.normal(ks[6], (C,), jnp.float32) * 0.1,
        "bn1_mean":  jax.random.normal(ks[7], (C,), jnp.float32) * 0.1,
        "bn1_var":   jax.random.uniform(ks[8], (C,), jnp.float32, 0.5, 1.5),
        "lin_w":     jax.random.normal(ks[9], (EM, C), jnp.float32) * 0.05,
        "lin_b":     jax.random.normal(ks[10], (EM,), jnp.float32) * 0.05,
    }

    x = jax.random.normal(ks[11], (N, C, H, W), jnp.float32)

    T_HW = choose_hw_tile(H * W)                       # 128 here (lane-dense)
    kernel_params = prepare_kernel_params(params, H, W, T_HW)   # one-time weight fold

    emb = main_model_forward(x, kernel_params, T_HW)
    emb = jax.block_until_ready(emb)

    ref = reference_forward(x, params)
    assert emb.shape == (N, EM)
    assert jnp.allclose(emb, ref, atol=1e-3, rtol=1e-3), "mismatch vs reference"

    print("KERNEL_OK")
</pallas_src>

<mosaic_0001>
module attributes {stable_mosaic.version = 11 : i64} {
  func.func @kernel(%arg0: i32, %arg1: i32, %arg2: memref<1x512x128xf32, #tpu.memory_space<vmem>>, %arg3: memref<512x2xf32, #tpu.memory_space<vmem>>, %arg4: memref<128x5xf32, #tpu.memory_space<vmem>>, %arg5: memref<5x512x64xf32, #tpu.memory_space<vmem>>, %arg6: memref<1x64xf32, #tpu.memory_space<vmem>>, %arg7: memref<1x1x64xf32, #tpu.memory_space<vmem>>, %arg8: memref<512x5xf32, #tpu.memory_space<vmem>>) attributes {dimension_semantics = [#tpu.dimension_semantics<parallel>, #tpu.dimension_semantics<arbitrary>], iteration_bounds = array<i64: 2, 1>, scalar_prefetch = 0 : i64, scratch_operands = 1 : i64, tpu.core_type = #tpu.core_type<tc>, window_params = [{transform_indices = @transform_0, window_bounds = array<i64: 1, 512, 128>}, {pipeline_mode = #tpu.pipeline_mode<synchronous>, transform_indices = @transform_1, window_bounds = array<i64: 512, 2>}, {transform_indices = @transform_2, window_bounds = array<i64: 128, 5>}, {pipeline_mode = #tpu.pipeline_mode<synchronous>, transform_indices = @transform_3, window_bounds = array<i64: 5, 512, 64>}, {pipeline_mode = #tpu.pipeline_mode<synchronous>, transform_indices = @transform_4, window_bounds = array<i64: 1, 64>}, {transform_indices = @transform_5, window_bounds = array<i64: 1, 1, 64>}]} {
    %c0_i32 = arith.constant 0 : i32
    %0 = arith.cmpi eq, %arg1, %c0_i32 : i32
    %1 = arith.extui %0 : i1 to i32
    %c0_i32_0 = arith.constant 0 : i32
    %2 = arith.cmpi ne, %1, %c0_i32_0 : i32
    scf.if %2 {
      %cst_15 = arith.constant 0.000000e+00 : f32
      %21 = vector.broadcast %cst_15 : f32 to vector<512x5xf32>
      %c0_16 = arith.constant 0 : index
      %c0_17 = arith.constant 0 : index
      %22 = vector.load %arg8[%c0_16, %c0_17] : memref<512x5xf32, #tpu.memory_space<vmem>>, vector<512x5xf32>
      tpu.vector_store %arg8[%c0_16, %c0_17], %21 {strides = array<i32>} : memref<512x5xf32, #tpu.memory_space<vmem>>, vector<512x5xf32>,
    } else {
    }
    %c0 = arith.constant 0 : index
    %c0_1 = arith.constant 0 : index
    %c0_2 = arith.constant 0 : index
    %3 = vector.load %arg2[%c0, %c0_1, %c0_2] : memref<1x512x128xf32, #tpu.memory_space<vmem>>, vector<1x512x128xf32>
    %4 = vector.shape_cast %3 : vector<1x512x128xf32> to vector<512x128xf32>
    %c0_3 = arith.constant 0 : index
    %c0_4 = arith.constant 0 : index
    %5 = vector.load %arg3[%c0_3, %c0_4] : memref<512x2xf32, #tpu.memory_space<vmem>>, vector<512x1xf32>
    %6 = vector.broadcast %5 : vector<512x1xf32> to vector<512x128xf32>
    %7 = arith.mulf %4, %6 : vector<512x128xf32>
    %c0_5 = arith.constant 0 : index
    %c1 = arith.constant 1 : index
    %8 = vector.load %arg3[%c0_5, %c1] : memref<512x2xf32, #tpu.memory_space<vmem>>, vector<512x1xf32>
    %9 = vector.broadcast %8 : vector<512x1xf32> to vector<512x128xf32>
    %10 = arith.addf %7, %9 : vector<512x128xf32>
    %cst = arith.constant 0.000000e+00 : f32
    %11 = vector.broadcast %cst : f32 to vector<512x128xf32>
    %12 = arith.maximumf %10, %11 : vector<512x128xf32>
    %c0_6 = arith.constant 0 : index
    %c0_7 = arith.constant 0 : index
    %13 = vector.load %arg8[%c0_6, %c0_7] : memref<512x5xf32, #tpu.memory_space<vmem>>, vector<512x5xf32>
    %c0_8 = arith.constant 0 : index
    %c0_9 = arith.constant 0 : index
    %14 = vector.load %arg4[%c0_8, %c0_9] : memref<128x5xf32, #tpu.memory_space<vmem>>, vector<128x5xf32>
    %cst_10 = arith.constant dense<0.000000e+00> : vector<512x5xf32>
    %15 = tpu.matmul %12, %14, %cst_10 {dimension_numbers = #tpu.dot_dimension_numbers<[1], [0], [0], [1], [0, 0, 1, 1], [], []>} : vector<512x128xf32>, vector<128x5xf32>, vector<512x5xf32> -> vector<512x5xf32>
    %16 = arith.addf %13, %15 : vector<512x5xf32>
    %c0_11 = arith.constant 0 : index
    %c0_12 = arith.constant 0 : index
    %17 = vector.load %arg8[%c0_11, %c0_12] : memref<512x5xf32, #tpu.memory_space<vmem>>, vector<512x5xf32>
    tpu.vector_store %arg8[%c0_11, %c0_12], %16 {strides = array<i32>} : memref<512x5xf32, #tpu.memory_space<vmem>>, vector<512x5xf32>,
    %c0_i32_13 = arith.constant 0 : i32
    %18 = arith.cmpi eq, %arg1, %c0_i32_13 : i32
    %19 = arith.extui %18 : i1 to i32
    %c0_i32_14 = arith.constant 0 : i32
    %20 = arith.cmpi ne, %19, %c0_i32_14 : i32
    scf.if %20 {
      %c0_15 = arith.constant 0 : index
      %c0_16 = arith.constant 0 : index
      %21 = vector.load %arg6[%c0_15, %c0_16] : memref<1x64xf32, #tpu.memory_space<vmem>>, vector<1x64xf32>
      %c0_17 = arith.constant 0 : index
      %c0_18 = arith.constant 0 : index
      %22 = vector.load %arg8[%c0_17, %c0_18] : memref<512x5xf32, #tpu.memory_space<vmem>>, vector<512x1xf32>
      %c0_19 = arith.constant 0 : index
      %c0_20 = arith.constant 0 : index
      %c0_21 = arith.constant 0 : index
      %23 = vector.load %arg5[%c0_19, %c0_20, %c0_21] : memref<5x512x64xf32, #tpu.memory_space<vmem>>, vector<1x512x64xf32>
      %24 = vector.shape_cast %23 : vector<1x512x64xf32> to vector<512x64xf32>
      %25 = vector.broadcast %22 : vector<512x1xf32> to vector<512x64xf32>
      %26 = arith.mulf %25, %24 : vector<512x64xf32>
      %cst_22 = arith.constant dense<0.000000e+00> : vector<64xf32>
      %27 = vector.multi_reduction <add>, %26, %cst_22 [0] : vector<512x64xf32> to vector<64xf32>
      %28 = vector.shape_cast %27 : vector<64xf32> to vector<1x64xf32>
      %29 = arith.addf %21, %28 : vector<1x64xf32>
      %c0_23 = arith.constant 0 : index
      %c1_24 = arith.constant 1 : index
      %30 = vector.load %arg8[%c0_23, %c1_24] : memref<512x5xf32, #tpu.memory_space<vmem>>, vector<512x1xf32>
      %c1_25 = arith.constant 1 : index
      %c0_26 = arith.constant 0 : index
      %c0_27 = arith.constant 0 : index
      %31 = vector.load %arg5[%c1_25, %c0_26, %c0_27] : memref<5x512x64xf32, #tpu.memory_space<vmem>>, vector<1x512x64xf32>
      %32 = vector.shape_cast %31 : vector<1x512x64xf32> to vector<512x64xf32>
      %33 = vector.broadcast %30 : vector<512x1xf32> to vector<512x64xf32>
      %34 = arith.mulf %33, %32 : vector<512x64xf32>
      %cst_28 = arith.constant dense<0.000000e+00> : vector<64xf32>
      %35 = vector.multi_reduction <add>, %34, %cst_28 [0] : vector<512x64xf32> to vector<64xf32>
      %36 = vector.shape_cast %35 : vector<64xf32> to vector<1x64xf32>
      %37 = arith.addf %29, %36 : vector<1x64xf32>
      %c0_29 = arith.constant 0 : index
      %c2 = arith.constant 2 : index
      %38 = vector.load %arg8[%c0_29, %c2] : memref<512x5xf32, #tpu.memory_space<vmem>>, vector<512x1xf32>
      %c2_30 = arith.constant 2 : index
      %c0_31 = arith.constant 0 : index
      %c0_32 = arith.constant 0 : index
      %39 = vector.load %arg5[%c2_30, %c0_31, %c0_32] : memref<5x512x64xf32, #tpu.memory_space<vmem>>, vector<1x512x64xf32>
      %40 = vector.shape_cast %39 : vector<1x512x64xf32> to vector<512x64xf32>
      %41 = vector.broadcast %38 : vector<512x1xf32> to vector<512x64xf32>
      %42 = arith.mulf %41, %40 : vector<512x64xf32>
      %cst_33 = arith.constant dense<0.000000e+00> : vector<64xf32>
      %43 = vector.multi_reduction <add>, %42, %cst_33 [0] : vector<512x64xf32> to vector<64xf32>
      %44 = vector.shape_cast %43 : vector<64xf32> to vector<1x64xf32>
      %45 = arith.addf %37, %44 : vector<1x64xf32>
      %c0_34 = arith.constant 0 : index
      %c3 = arith.constant 3 : index
      %46 = vector.load %arg8[%c0_34, %c3] : memref<512x5xf32, #tpu.memory_space<vmem>>, vector<512x1xf32>
      %c3_35 = arith.constant 3 : index
      %c0_36 = arith.constant 0 : index
      %c0_37 = arith.constant 0 : index
      %47 = vector.load %arg5[%c3_35, %c0_36, %c0_37] : memref<5x512x64xf32, #tpu.memory_space<vmem>>, vector<1x512x64xf32>
      %48 = vector.shape_cast %47 : vector<1x512x64xf32> to vector<512x64xf32>
      %49 = vector.broadcast %46 : vector<512x1xf32> to vector<512x64xf32>
      %50 = arith.mulf %49, %48 : vector<512x64xf32>
      %cst_38 = arith.constant dense<0.000000e+00> : vector<64xf32>
      %51 = vector.multi_reduction <add>, %50, %cst_38 [0] : vector<512x64xf32> to vector<64xf32>
      %52 = vector.shape_cast %51 : vector<64xf32> to vector<1x64xf32>
      %53 = arith.addf %45, %52 : vector<1x64xf32>
      %c0_39 = arith.constant 0 : index
      %c4 = arith.constant 4 : index
      %54 = vector.load %arg8[%c0_39, %c4] : memref<512x5xf32, #tpu.memory_space<vmem>>, vector<512x1xf32>
      %c4_40 = arith.constant 4 : index
      %c0_41 = arith.constant 0 : index
      %c0_42 = arith.constant 0 : index
      %55 = vector.load %arg5[%c4_40, %c0_41, %c0_42] : memref<5x512x64xf32, #tpu.memory_space<vmem>>, vector<1x512x64xf32>
      %56 = vector.shape_cast %55 : vector<1x512x64xf32> to vector<512x64xf32>
      %57 = vector.broadcast %54 : vector<512x1xf32> to vector<512x64xf32>
      %58 = arith.mulf %57, %56 : vector<512x64xf32>
      %cst_43 = arith.constant dense<0.000000e+00> : vector<64xf32>
      %59 = vector.multi_reduction <add>, %58, %cst_43 [0] : vector<512x64xf32> to vector<64xf32>
      %60 = vector.shape_cast %59 : vector<64xf32> to vector<1x64xf32>
      %61 = arith.addf %53, %60 : vector<1x64xf32>
      %c0_44 = arith.constant 0 : index
      %c0_45 = arith.constant 0 : index
      %c0_46 = arith.constant 0 : index
      %62 = vector.load %arg7[%c0_44, %c0_45, %c0_46] : memref<1x1x64xf32, #tpu.memory_space<vmem>>, vector<1x1x64xf32>
      %63 = vector.shape_cast %62 : vector<1x1x64xf32> to vector<1x64xf32>
      %64 = vector.shape_cast %61 : vector<1x64xf32> to vector<1x1x64xf32>
      tpu.vector_store %arg7[%c0_44, %c0_45, %c0_46], %64 {strides = array<i32>} : memref<1x1x64xf32, #tpu.memory_space<vmem>>, vector<1x1x64xf32>,
    } else {
    }
    return
  }
  func.func @transform_0(%arg0: i32, %arg1: i32) -> (i32, i32, i32) {
    %c0_i32 = arith.constant 0 : i32
    %c0_i32_0 = arith.constant 0 : i32
    return %arg0, %c0_i32, %arg1 : i32, i32, i32
  }
  func.func @transform_1(%arg0: i32, %arg1: i32) -> (i32, i32) {
    %c0_i32 = arith.constant 0 : i32
    %c0_i32_0 = arith.constant 0 : i32
    %c0_i32_1 = arith.constant 0 : i32
    return %c0_i32, %c0_i32_0 : i32, i32
  }
  func.func @transform_2(%arg0: i32, %arg1: i32) -> (i32, i32) {
    %c0_i32 = arith.constant 0 : i32
    %c0_i32_0 = arith.constant 0 : i32
    return %arg1, %c0_i32 : i32, i32
  }
  func.func @transform_3(%arg0: i32, %arg1: i32) -> (i32, i32, i32) {
    %c0_i32 = arith.constant 0 : i32
    %c0_i32_0 = arith.constant 0 : i32
    %c0_i32_1 = arith.constant 0 : i32
    %c0_i32_2 = arith.constant 0 : i32
    return %c0_i32, %c0_i32_0, %c0_i32_1 : i32, i32, i32
  }
  func.func @transform_4(%arg0: i32, %arg1: i32) -> (i32, i32) {
    %c0_i32 = arith.constant 0 : i32
    %c0_i32_0 = arith.constant 0 : i32
    %c0_i32_1 = arith.constant 0 : i32
    return %c0_i32, %c0_i32_0 : i32, i32
  }
  func.func @transform_5(%arg0: i32, %arg1: i32) -> (i32, i32, i32) {
    %c0_i32 = arith.constant 0 : i32
    %c0_i32_0 = arith.constant 0 : i32
    %c0_i32_1 = arith.constant 0 : i32
    return %arg0, %c0_i32, %c0_i32_0 : i32, i32, i32
  }
}

</mosaic_0001>

<llo_original>
// kernel: main_model_forward.1
$region0: #{main_model_forward.1}
  #allocation0 [shape = 'u32[]', space=smem, size = 0x4, offset = 0x4, fixed_abs, tag = 'smem constant byte address 0x4 - core index']
  #allocation1 [shape = 'u32[144,128]{1,0:T(1,128)}', space=vmem, size = 0x12000, scoped, tag = 'internal scratch']
  #allocation2 [shape = 'f32[512,5]{1,0:T(8,128)}', space=vmem, size = 0x40000, scoped, tag = 'scratch operand']
  %s0 = inlined_call_operand.vmem [shape: f32[2,512,128], index: 0, kind: input, shape index: {}]
  %s1 = inlined_call_operand.vmem [shape: f32[512,2], index: 1, kind: input, shape index: {}]
  %s2 = inlined_call_operand.vmem [shape: f32[128,5], index: 2, kind: input, shape index: {}]
  %s3 = inlined_call_operand.vmem [shape: f32[5,512,64], index: 3, kind: input, shape index: {}]
  %s4 = inlined_call_operand.vmem [shape: f32[1,64], index: 4, kind: input, shape index: {}]
  %s5 = inlined_call_operand.hbm [shape: f32[2,1,64], index: 5, kind: output, shape index: {}]
  %s6 = sld [smem:[#allocation0]]
  $region61: #{main_model_forward.1} parent=0
    _
  %s8 = ssub.s32 1, %s6
  %s9 = scalar_select 0, %s8, %s6
  $region1: #{main_model_forward.1} parent=0
    #allocation3 [shape = 'u8[1024]{0}', space=vmem, size = 0x400, scoped, tag = 'output window, operand 0']
    #allocation4 [shape = 's32[2]{0}', space=sflag, size = 0x8, scoped, tag = 'scoped memory for main_model_forward.1']
    %10 = vsyncpa [#allocation4], 0
    %s11 = scalar_lea.sflag [#allocation4], 1
    %12 = vsyncpa %s11, 0
    loop: start=0, step=1, limit=4
    $region2: #{main_model_forward.1} parent=1 // loop_pre_header
      _
    $region3: #{main_model_forward.1} parent=1 // loop_header
      %s14 = sphi 0, %s18
      %p15 = scmp.ge.s32.totalorder %s14, 4
      %s21 = sphi 0, %s33
      %s22 = sphi 0, %s29
      %s23 = sphi 0, %s21
      %s24 = sphi 0, %s22
      %s25 = sphi 0, %s23
      %s26 = sphi 0, %s24
      %s38 = sphi 0, %s40
      %s41 = sphi 0, %s38
      %s42 = sphi 0, %s41
      %s58 = sphi 0, %s42
      %s62 = sphi 0, %s62
      %s64 = sphi 0, %s62
      %s65 = sphi 0, %s64
      %s79 = sphi 0, %s65
      %s85 = sphi 0, %s87
      %s88 = sphi 0, %s85
      %s89 = sphi 0, %s88
      %s105 = sphi 0, %s89
      %s109 = sphi 0, %s109
      %s111 = sphi 0, %s109
      %s112 = sphi 0, %s111
      %s126 = sphi 0, %s112
      %s130 = sphi 0, %s130
      %s132 = sphi 0, %s130
      %s133 = sphi 0, %s132
      %s147 = sphi 0, %s133
      %s153 = sphi 0, %s155
      %s156 = sphi 0, %s153
      %s157 = sphi 0, %s156
      %s173 = sphi 0, %s157
    $region4: #{main_model_forward.1} parent=1 // loop_header_branch
      %17 = sbr.rel (%p15) target = $region8
    $region5: #{main_model_forward.1} parent=1 // loop_body
      %s19 = ssub.s32 %s14, 1
      %s20 = ssub.s32 %s14, 2
      %s27 = sadd.s32 1, %s22
      %p28 = scmp.ge.s32.totalorder %s27, 1
      %s29 = scalar_select %p28, 0, %s27
      %s30 = sadd.s32 1, %s21
      %s31 = scalar_select %p28, %s30, %s21
      %p32 = scmp.ge.s32.totalorder %s31, 2
      %s33 = scalar_select %p32, 0, %s31
      %s34 = ssub.s32 %s21, %s33
      %s35 = ssub.s32 %s22, %s29
      %s36 = sor.u32 %s34, %s35
      %p37 = scmp.eq.s32.totalorder %s36, 0
      %s39 = sadd.s32 %s38, 1
      %s40 = scalar_select %p37, %s38, %s39
      %p43 = pneg %p37
      %p44 = scmp.eq.s32.totalorder %s14, 1
      %p45 = por %p43, %p44
      %p46 = scmp.ne.s32.totalorder %s38, %s41
      %p47 = scmp.eq.s32.totalorder %s14, 0
      %p48 = por %p46, %p47
      %p49 = scmp.ne.s32.totalorder %s38, %s41
      %p50 = scmp.eq.s32.totalorder %s19, 1
      %p51 = por %p49, %p50
      %p52 = scmp.ne.s32.totalorder %s41, %s42
      %p53 = scmp.eq.s32.totalorder %s19, 0
      %p54 = por %p52, %p53
      %p55 = scmp.ne.s32.totalorder %s41, %s42
      %p56 = scmp.eq.s32.totalorder %s20, 1
      %p57 = por %p55, %p56
      %p59 = scmp.ne.s32.totalorder %s42, %s58
      %p60 = scmp.eq.s32.totalorder %s20, 0
      %p61 = por %p59, %p60
      %s63 = sadd.s32 %s62, 1
      %p66 = scmp.eq.s32.totalorder %s14, 1
      %p67 = scmp.ne.s32.totalorder %s62, %s64
      %p68 = scmp.eq.s32.totalorder %s14, 0
      %p69 = por %p67, %p68
      %p70 = scmp.ne.s32.totalorder %s62, %s64
      %p71 = scmp.eq.s32.totalorder %s19, 1
      %p72 = por %p70, %p71
      %p73 = scmp.ne.s32.totalorder %s64, %s65
      %p74 = scmp.eq.s32.totalorder %s19, 0
      %p75 = por %p73, %p74
      %p76 = scmp.ne.s32.totalorder %s64, %s65
      %p77 = scmp.eq.s32.totalorder %s20, 1
      %p78 = por %p76, %p77
      %p80 = scmp.ne.s32.totalorder %s65, %s79
      %p81 = scmp.eq.s32.totalorder %s20, 0
      %p82 = por %p80, %p81
      %s83 = ssub.s32 %s22, %s29
      %p84 = scmp.eq.s32.totalorder %s83, 0
      %s86 = sadd.s32 %s85, 1
      %s87 = scalar_select %p84, %s85, %s86
      %p90 = pneg %p84
      %p91 = scmp.eq.s32.totalorder %s14, 1
      %p92 = por %p90, %p91
      %p93 = scmp.ne.s32.totalorder %s85, %s88
      %p94 = scmp.eq.s32.totalorder %s14, 0
      %p95 = por %p93, %p94
      %p96 = scmp.ne.s32.totalorder %s85, %s88
      %p97 = scmp.eq.s32.totalorder %s19, 1
      %p98 = por %p96, %p97
      %p99 = scmp.ne.s32.totalorder %s88, %s89
      %p100 = scmp.eq.s32.totalorder %s19, 0
      %p101 = por %p99, %p100
      %p102 = scmp.ne.s32.totalorder %s88, %s89
      %p103 = scmp.eq.s32.totalorder %s20, 1
      %p104 = por %p102, %p103
      %p106 = scmp.ne.s32.totalorder %s89, %s105
      %p107 = scmp.eq.s32.totalorder %s20, 0
      %p108 = por %p106, %p107
      %s110 = sadd.s32 %s109, 1
      %p113 = scmp.eq.s32.totalorder %s14, 1
      %p114 = scmp.ne.s32.totalorder %s109, %s111
      %p115 = scmp.eq.s32.totalorder %s14, 0
      %p116 = por %p114, %p115
      %p117 = scmp.ne.s32.totalorder %s109, %s111
      %p118 = scmp.eq.s32.totalorder %s19, 1
      %p119 = por %p117, %p118
      %p120 = scmp.ne.s32.totalorder %s111, %s112
      %p121 = scmp.eq.s32.totalorder %s19, 0
      %p122 = por %p120, %p121
      %p123 = scmp.ne.s32.totalorder %s111, %s112
      %p124 = scmp.eq.s32.totalorder %s20, 1
      %p125 = por %p123, %p124
      %p127 = scmp.ne.s32.totalorder %s112, %s126
      %p128 = scmp.eq.s32.totalorder %s20, 0
      %p129 = por %p127, %p128
      %s131 = sadd.s32 %s130, 1
      %p134 = scmp.eq.s32.totalorder %s14, 1
      %p135 = scmp.ne.s32.totalorder %s130, %s132
      %p136 = scmp.eq.s32.totalorder %s14, 0
      %p137 = por %p135, %p136
      %p138 = scmp.ne.s32.totalorder %s130, %s132
      %p139 = scmp.eq.s32.totalorder %s19, 1
      %p140 = por %p138, %p139
      %p141 = scmp.ne.s32.totalorder %s132, %s133
      %p142 = scmp.eq.s32.totalorder %s19, 0
      %p143 = por %p141, %p142
      %p144 = scmp.ne.s32.totalorder %s132, %s133
      %p145 = scmp.eq.s32.totalorder %s20, 1
      %p146 = por %p144, %p145
      %p148 = scmp.ne.s32.totalorder %s133, %s147
      %p149 = scmp.eq.s32.totalorder %s20, 0
      %p150 = por %p148, %p149
      %s151 = ssub.s32 %s21, %s33
      %p152 = scmp.eq.s32.totalorder %s151, 0
      %s154 = sadd.s32 %s153, 1
      %s155 = scalar_select %p152, %s153, %s154
      %p158 = pneg %p152
      %p159 = scmp.eq.s32.totalorder %s14, 1
      %p160 = por %p158, %p159
      %p161 = scmp.ne.s32.totalorder %s153, %s156
      %p162 = scmp.eq.s32.totalorder %s14, 0
      %p163 = por %p161, %p162
      %p164 = scmp.ne.s32.totalorder %s153, %s156
      %p165 = scmp.eq.s32.totalorder %s19, 1
      %p166 = por %p164, %p165
      %p167 = scmp.ne.s32.totalorder %s156, %s157
      %p168 = scmp.eq.s32.totalorder %s19, 0
      %p169 = por %p167, %p168
      %p170 = scmp.ne.s32.totalorder %s156, %s157
      %p171 = scmp.eq.s32.totalorder %s20, 1
      %p172 = por %p170, %p171
      %p174 = scmp.ne.s32.totalorder %s157, %s173
      %p175 = scmp.eq.s32.totalorder %s20, 0
      %p176 = por %p174, %p175
      %p177 = scmp.le.s32.totalorder 1, %s14
      %p178 = scmp.lt.s32.totalorder %s14, 3
      %p179 = pnand %p177, %p178
      %p180 = pneg %p179
      // Predicated region
      $region9: #{main_model_forward.1} parent=5 // pred_check
        _
      $region10: #{main_model_forward.1} parent=5 // pred_check_branch
        %182 = sbr.rel (%p179) target = $region12
      $region11: #{main_model_forward.1} parent=5 // pred_region
        %s183 = ssub.s32 %s14, 1
        // Predicated region
        $region13: #{main_model_forward.1} parent=11 // pred_check
          %p184 = pneg %p75
        $region14: #{main_model_forward.1} parent=11 // pred_check_branch
          %186 = sbr.rel (%p184) target = $region16
        $region15: #{main_model_forward.1} parent=11 // pred_region
          _
        $region16: #{main_model_forward.1} parent=11 // pred_fallthru
          _
        // Predicated region
        $region17: #{main_model_forward.1} parent=11 // pred_check
          %p187 = pneg %p101
        $region18: #{main_model_forward.1} parent=11 // pred_check_branch
          %189 = sbr.rel (%p187) target = $region20
        $region19: #{main_model_forward.1} parent=11 // pred_region
          %s190 = smul.u32 16, %s24
          %p191 = scmp.lt.s32.totalorder %s190, 15
          %s192 = scalar_select %p191, %s190, 15
          %s193 = smul.addr %s192, 8
          %s194 = scalar_lea.vmem %s2, %s193
          %s195 = smul.u32 16, %s24
        $region20: #{main_model_forward.1} parent=11 // pred_fallthru
          _
        // Predicated region
        $region21: #{main_model_forward.1} parent=11 // pred_check
          %p196 = pneg %p122
        $region22: #{main_model_forward.1} parent=11 // pred_check_branch
          %198 = sbr.rel (%p196) target = $region24
        $region23: #{main_model_forward.1} parent=11 // pred_region
          _
        $region24: #{main_model_forward.1} parent=11 // pred_fallthru
          _
        // Predicated region
        $region25: #{main_model_forward.1} parent=11 // pred_check
          %p199 = pneg %p143
        $region26: #{main_model_forward.1} parent=11 // pred_check_branch
          %201 = sbr.rel (%p199) target = $region28
        $region27: #{main_model_forward.1} parent=11 // pred_region
          _
        $region28: #{main_model_forward.1} parent=11 // pred_fallthru
          _
      $region12: #{main_model_forward.1} parent=5 // pred_fallthru
        _
      %p202 = scmp.lt.s32.totalorder %s14, 2
      // Predicated region
      $region29: #{main_model_forward.1} parent=5 // pred_check
        %p203 = pneg %p202
      $region30: #{main_model_forward.1} parent=5 // pred_check_branch
        %205 = sbr.rel (%p203) target = $region32
      $region31: #{main_model_forward.1} parent=5 // pred_region
        // Predicated region
        $region33: #{main_model_forward.1} parent=31 // pred_check
          %p206 = pneg %p48
        $region34: #{main_model_forward.1} parent=31 // pred_check_branch
          %208 = sbr.rel (%p206) target = $region36
        $region35: #{main_model_forward.1} parent=31 // pred_region
          %p209 = scmp.lt.s32.totalorder %s21, 1
          %s210 = scalar_select %p209, %s21, 1
          %p211 = scmp.lt.s32.totalorder %s22, 0
          %s212 = scalar_select %p211, %s22, 0
          %s213 = smul.addr %s210, 64
          %s214 = sadd.s32 %s212, %s213
          %s215 = smul.addr %s214, 8
          %s216 = scalar_lea.vmem %s0, %s215
        $region36: #{main_model_forward.1} parent=31 // pred_fallthru
          _
      $region32: #{main_model_forward.1} parent=5 // pred_fallthru
        _
      %p217 = scmp.le.s32.totalorder 1, %s14
      %p218 = scmp.lt.s32.totalorder %s14, 3
      %p219 = pnand %p217, %p218
      %p220 = pneg %p219
      // Predicated region
      $region37: #{main_model_forward.1} parent=5 // pred_check
        _
      $region38: #{main_model_forward.1} parent=5 // pred_check_branch
        %222 = sbr.rel (%p219) target = $region40
      $region39: #{main_model_forward.1} parent=5 // pred_region
        %s223 = ssub.s32 %s14, 1
        %p224 = scmp.lt.s32.totalorder %s23, 1
        %s225 = scalar_select %p224, %s23, 1
        %p226 = scmp.lt.s32.totalorder %s24, 0
        %s227 = scalar_select %p226, %s24, 0
        %s228 = smul.addr %s225, 64
        %s229 = sadd.s32 %s227, %s228
        %s230 = smul.addr %s229, 8
        %s231 = scalar_lea.vmem %s0, %s230
        %p232 = pneg %p54
        %p233 = pneg %p51
        %p234 = pneg %p75
        %p235 = pneg %p72
        %s236 = smul.u32 16, %s24
        %p237 = scmp.lt.s32.totalorder %s236, 15
        %s238 = scalar_select %p237, %s236, 15
        %s239 = smul.addr %s238, 8
        %s240 = scalar_lea.vmem %s2, %s239
        %p241 = pneg %p101
        %p242 = pneg %p98
        %p243 = pneg %p122
        %p244 = pneg %p119
        %p245 = pneg %p143
        %p246 = pneg %p140
        %p247 = pneg %p169
        %p248 = pneg %p166
        %s249 = sand.u32 %s156, 1
        %s250 = scalar_lea.sflag [#allocation4], %s249
        %s251 = sand.u32 %s156, 1
        %s252 = scalar_lea.vmem [#allocation3], %s251
        %p253 = scmp.lt.s32.totalorder %s23, 1
        %s254 = scalar_select %p253, %s23, 1
        %p255 = scmp.lt.s32.totalorder %s24, 0
        %s256 = scalar_select %p255, %s24, 0
        %s257 = smul.addr %s254, 64
        %s258 = sadd.s32 %s256, %s257
        %s259 = smul.addr %s258, 8
        %s260 = scalar_lea.vmem %s0, %s259
        %s261 = smul.u32 16, %s24
        %p262 = scmp.lt.s32.totalorder %s261, 15
        %s263 = scalar_select %p262, %s261, 15
        %s264 = smul.addr %s263, 8
        %s265 = scalar_lea.vmem %s2, %s264
        %s266 = smul.u32 16, %s24
        %p267 = scmp.eq.s32.totalorder %s24, 0
        // Predicated region
        $region41: #{main_model_forward.1} parent=39 // pred_check
          %p268 = pneg %p267
        $region42: #{main_model_forward.1} parent=39 // pred_check_branch
          %270 = sbr.rel (%p268) target = $region44
        $region43: #{main_model_forward.1} parent=39 // pred_region
          %vm271 = vcmask 39936
          %272 = vst.msk [vmem:[#allocation2] sm:$0xff] %vm271, 0.0
          %273 = vst.msk [vmem:[#allocation2 + $0x8] sm:$0xff] %vm271, 0.0
          %274 = vst.msk [vmem:[#allocation2 + $0x10] sm:$0xff] %vm271, 0.0
          %275 = vst.msk [vmem:[#allocation2 + $0x18] sm:$0xff] %vm271, 0.0
          %276 = vst.msk [vmem:[#allocation2 + $0x20] sm:$0xff] %vm271, 0.0
          %277 = vst.msk [vmem:[#allocation2 + $0x28] sm:$0xff] %vm271, 0.0
          %278 = vst.msk [vmem:[#allocation2 + $0x30] sm:$0xff] %vm271, 0.0
          %279 = vst.msk [vmem:[#allocation2 + $0x38] sm:$0xff] %vm271, 0.0
          %280 = vst.msk [vmem:[#allocation2 + $0x40] sm:$0xff] %vm271, 0.0
          %281 = vst.msk [vmem:[#allocation2 + $0x48] sm:$0xff] %vm271, 0.0
          %282 = vst.msk [vmem:[#allocation2 + $0x50] sm:$0xff] %vm271, 0.0
          %283 = vst.msk [vmem:[#allocation2 + $0x58] sm:$0xff] %vm271, 0.0
          %284 = vst.msk [vmem:[#allocation2 + $0x60] sm:$0xff] %vm271, 0.0
          %285 = vst.msk [vmem:[#allocation2 + $0x68] sm:$0xff] %vm271, 0.0
          %286 = vst.msk [vmem:[#allocation2 + $0x70] sm:$0xff] %vm271, 0.0
          %287 = vst.msk [vmem:[#allocation2 + $0x78] sm:$0xff] %vm271, 0.0
          %288 = vst.msk [vmem:[#allocation2 + $0x80] sm:$0xff] %vm271, 0.0
          %289 = vst.msk [vmem:[#allocation2 + $0x88] sm:$0xff] %vm271, 0.0
          %290 = vst.msk [vmem:[#allocation2 + $0x90] sm:$0xff] %vm271, 0.0
          %291 = vst.msk [vmem:[#allocation2 + $0x98] sm:$0xff] %vm271, 0.0
          %292 = vst.msk [vmem:[#allocation2 + $0xa0] sm:$0xff] %vm271, 0.0
          %293 = vst.msk [vmem:[#allocation2 + $0xa8] sm:$0xff] %vm271, 0.0
          %294 = vst.msk [vmem:[#allocation2 + $0xb0] sm:$0xff] %vm271, 0.0
          %295 = vst.msk [vmem:[#allocation2 + $0xb8] sm:$0xff] %vm271, 0.0
          %296 = vst.msk [vmem:[#allocation2 + $0xc0] sm:$0xff] %vm271, 0.0
          %297 = vst.msk [vmem:[#allocation2 + $0xc8] sm:$0xff] %vm271, 0.0
          %298 = vst.msk [vmem:[#allocation2 + $0xd0] sm:$0xff] %vm271, 0.0
          %299 = vst.msk [vmem:[#allocation2 + $0xd8] sm:$0xff] %vm271, 0.0
          %300 = vst.msk [vmem:[#allocation2 + $0xe0] sm:$0xff] %vm271, 0.0
          %301 = vst.msk [vmem:[#allocation2 + $0xe8] sm:$0xff] %vm271, 0.0
          %302 = vst.msk [vmem:[#allocation2 + $0xf0] sm:$0xff] %vm271, 0.0
          %303 = vst.msk [vmem:[#allocation2 + $0xf8] sm:$0xff] %vm271, 0.0
          %304 = vst.msk [vmem:[#allocation2 + $0x100] sm:$0xff] %vm271, 0.0
          %305 = vst.msk [vmem:[#allocation2 + $0x108] sm:$0xff] %vm271, 0.0
          %306 = vst.msk [vmem:[#allocation2 + $0x110] sm:$0xff] %vm271, 0.0
          %307 = vst.msk [vmem:[#allocation2 + $0x118] sm:$0xff] %vm271, 0.0
          %308 = vst.msk [vmem:[#allocation2 + $0x120] sm:$0xff] %vm271, 0.0
          %309 = vst.msk [vmem:[#allocation2 + $0x128] sm:$0xff] %vm271, 0.0
          %310 = vst.msk [vmem:[#allocation2 + $0x130] sm:$0xff] %vm271, 0.0
          %311 = vst.msk [vmem:[#allocation2 + $0x138] sm:$0xff] %vm271, 0.0
          %312 = vst.msk [vmem:[#allocation2 + $0x140] sm:$0xff] %vm271, 0.0
          %313 = vst.msk [vmem:[#allocation2 + $0x148] sm:$0xff] %vm271, 0.0
          %314 = vst.msk [vmem:[#allocation2 + $0x150] sm:$0xff] %vm271, 0.0
          %315 = vst.msk [vmem:[#allocation2 + $0x158] sm:$0xff] %vm271, 0.0
          %316 = vst.msk [vmem:[#allocation2 + $0x160] sm:$0xff] %vm271, 0.0
          %317 = vst.msk [vmem:[#allocation2 + $0x168] sm:$0xff] %vm271, 0.0
          %318 = vst.msk [vmem:[#allocation2 + $0x170] sm:$0xff] %vm271, 0.0
          %319 = vst.msk [vmem:[#allocation2 + $0x178] sm:$0xff] %vm271, 0.0
          %320 = vst.msk [vmem:[#allocation2 + $0x180] sm:$0xff] %vm271, 0.0
          %321 = vst.msk [vmem:[#allocation2 + $0x188] sm:$0xff] %vm271, 0.0
          %322 = vst.msk [vmem:[#allocation2 + $0x190] sm:$0xff] %vm271, 0.0
          %323 = vst.msk [vmem:[#allocation2 + $0x198] sm:$0xff] %vm271, 0.0
          %324 = vst.msk [vmem:[#allocation2 + $0x1a0] sm:$0xff] %vm271, 0.0
          %325 = vst.msk [vmem:[#allocation2 + $0x1a8] sm:$0xff] %vm271, 0.0
          %326 = vst.msk [vmem:[#allocation2 + $0x1b0] sm:$0xff] %vm271, 0.0
          %327 = vst.msk [vmem:[#allocation2 + $0x1b8] sm:$0xff] %vm271, 0.0
          %328 = vst.msk [vmem:[#allocation2 + $0x1c0] sm:$0xff] %vm271, 0.0
          %329 = vst.msk [vmem:[#allocation2 + $0x1c8] sm:$0xff] %vm271, 0.0
          %330 = vst.msk [vmem:[#allocation2 + $0x1d0] sm:$0xff] %vm271, 0.0
          %331 = vst.msk [vmem:[#allocation2 + $0x1d8] sm:$0xff] %vm271, 0.0
          %332 = vst.msk [vmem:[#allocation2 + $0x1e0] sm:$0xff] %vm271, 0.0
          %333 = vst.msk [vmem:[#allocation2 + $0x1e8] sm:$0xff] %vm271, 0.0
          %334 = vst.msk [vmem:[#allocation2 + $0x1f0] sm:$0xff] %vm271, 0.0
          %335 = vst.msk [vmem:[#allocation2 + $0x1f8] sm:$0xff] %vm271, 0.0
        $region44: #{main_model_forward.1} parent=39 // pred_fallthru
          _
        %v336 = vld [vmem:[%s260] sm:$0xff]
        %v337 = vld [vmem:[%s260 + $0x8] sm:$0xff]
        %v338 = vld [vmem:[%s260 + $0x10] sm:$0xff]
        %v339 = vld [vmem:[%s260 + $0x18] sm:$0xff]
        %v340 = vld [vmem:[%s260 + $0x20] sm:$0xff]
        %v341 = vld [vmem:[%s260 + $0x28] sm:$0xff]
        %v342 = vld [vmem:[%s260 + $0x30] sm:$0xff]
        %v343 = vld [vmem:[%s260 + $0x38] sm:$0xff]
        %v344 = vld [vmem:[%s260 + $0x40] sm:$0xff]
        %v345 = vld [vmem:[%s260 + $0x48] sm:$0xff]
        %v346 = vld [vmem:[%s260 + $0x50] sm:$0xff]
        %v347 = vld [vmem:[%s260 + $0x58] sm:$0xff]
        %v348 = vld [vmem:[%s260 + $0x60] sm:$0xff]
        %v349 = vld [vmem:[%s260 + $0x68] sm:$0xff]
        %v350 = vld [vmem:[%s260 + $0x70] sm:$0xff]
        %v351 = vld [vmem:[%s260 + $0x78] sm:$0xff]
        %v352 = vld [vmem:[%s260 + $0x80] sm:$0xff]
        %v353 = vld [vmem:[%s260 + $0x88] sm:$0xff]
        %v354 = vld [vmem:[%s260 + $0x90] sm:$0xff]
        %v355 = vld [vmem:[%s260 + $0x98] sm:$0xff]
        %v356 = vld [vmem:[%s260 + $0xa0] sm:$0xff]
        %v357 = vld [vmem:[%s260 + $0xa8] sm:$0xff]
        %v358 = vld [vmem:[%s260 + $0xb0] sm:$0xff]
        %v359 = vld [vmem:[%s260 + $0xb8] sm:$0xff]
        %v360 = vld [vmem:[%s260 + $0xc0] sm:$0xff]
        %v361 = vld [vmem:[%s260 + $0xc8] sm:$0xff]
        %v362 = vld [vmem:[%s260 + $0xd0] sm:$0xff]
        %v363 = vld [vmem:[%s260 + $0xd8] sm:$0xff]
        %v364 = vld [vmem:[%s260 + $0xe0] sm:$0xff]
        %v365 = vld [vmem:[%s260 + $0xe8] sm:$0xff]
        %v366 = vld [vmem:[%s260 + $0xf0] sm:$0xff]
        %v367 = vld [vmem:[%s260 + $0xf8] sm:$0xff]
        %v368 = vld [vmem:[%s260 + $0x100] sm:$0xff]
        %v369 = vld [vmem:[%s260 + $0x108] sm:$0xff]
        %v370 = vld [vmem:[%s260 + $0x110] sm:$0xff]
        %v371 = vld [vmem:[%s260 + $0x118] sm:$0xff]
        %v372 = vld [vmem:[%s260 + $0x120] sm:$0xff]
        %v373 = vld [vmem:[%s260 + $0x128] sm:$0xff]
        %v374 = vld [vmem:[%s260 + $0x130] sm:$0xff]
        %v375 = vld [vmem:[%s260 + $0x138] sm:$0xff]
        %v376 = vld [vmem:[%s260 + $0x140] sm:$0xff]
        %v377 = vld [vmem:[%s260 + $0x148] sm:$0xff]
        %v378 = vld [vmem:[%s260 + $0x150] sm:$0xff]
        %v379 = vld [vmem:[%s260 + $0x158] sm:$0xff]
        %v380 = vld [vmem:[%s260 + $0x160] sm:$0xff]
        %v381 = vld [vmem:[%s260 + $0x168] sm:$0xff]
        %v382 = vld [vmem:[%s260 + $0x170] sm:$0xff]
        %v383 = vld [vmem:[%s260 + $0x178] sm:$0xff]
        %v384 = vld [vmem:[%s260 + $0x180] sm:$0xff]
        %v385 = vld [vmem:[%s260 + $0x188] sm:$0xff]
        %v386 = vld [vmem:[%s260 + $0x190] sm:$0xff]
        %v387 = vld [vmem:[%s260 + $0x198] sm:$0xff]
        %v388 = vld [vmem:[%s260 + $0x1a0] sm:$0xff]
        %v389 = vld [vmem:[%s260 + $0x1a8] sm:$0xff]
        %v390 = vld [vmem:[%s260 + $0x1b0] sm:$0xff]
        %v391 = vld [vmem:[%s260 + $0x1b8] sm:$0xff]
        %v392 = vld [vmem:[%s260 + $0x1c0] sm:$0xff]
        %v393 = vld [vmem:[%s260 + $0x1c8] sm:$0xff]
        %v394 = vld [vmem:[%s260 + $0x1d0] sm:$0xff]
        %v395 = vld [vmem:[%s260 + $0x1d8] sm:$0xff]
        %v396 = vld [vmem:[%s260 + $0x1e0] sm:$0xff]
        %v397 = vld [vmem:[%s260 + $0x1e8] sm:$0xff]
        %v398 = vld [vmem:[%s260 + $0x1f0] sm:$0xff]
        %v399 = vld [vmem:[%s260 + $0x1f8] sm:$0xff]
        %v400 = vld [vmem:[%s1] sm:$0xff]
        %v401 = vld [vmem:[%s1 + $0x8] sm:$0xff]
        %v402 = vld [vmem:[%s1 + $0x10] sm:$0xff]
        %v403 = vld [vmem:[%s1 + $0x18] sm:$0xff]
        %v404 = vld [vmem:[%s1 + $0x20] sm:$0xff]
        %v405 = vld [vmem:[%s1 + $0x28] sm:$0xff]
        %v406 = vld [vmem:[%s1 + $0x30] sm:$0xff]
        %v407 = vld [vmem:[%s1 + $0x38] sm:$0xff]
        %v408 = vld [vmem:[%s1 + $0x40] sm:$0xff]
        %v409 = vld [vmem:[%s1 + $0x48] sm:$0xff]
        %v410 = vld [vmem:[%s1 + $0x50] sm:$0xff]
        %v411 = vld [vmem:[%s1 + $0x58] sm:$0xff]
        %v412 = vld [vmem:[%s1 + $0x60] sm:$0xff]
        %v413 = vld [vmem:[%s1 + $0x68] sm:$0xff]
        %v414 = vld [vmem:[%s1 + $0x70] sm:$0xff]
        %v415 = vld [vmem:[%s1 + $0x78] sm:$0xff]
        %v416 = vld [vmem:[%s1 + $0x80] sm:$0xff]
        %v417 = vld [vmem:[%s1 + $0x88] sm:$0xff]
        %v418 = vld [vmem:[%s1 + $0x90] sm:$0xff]
        %v419 = vld [vmem:[%s1 + $0x98] sm:$0xff]
        %v420 = vld [vmem:[%s1 + $0xa0] sm:$0xff]
        %v421 = vld [vmem:[%s1 + $0xa8] sm:$0xff]
        %v422 = vld [vmem:[%s1 + $0xb0] sm:$0xff]
        %v423 = vld [vmem:[%s1 + $0xb8] sm:$0xff]
        %v424 = vld [vmem:[%s1 + $0xc0] sm:$0xff]
        %v425 = vld [vmem:[%s1 + $0xc8] sm:$0xff]
        %v426 = vld [vmem:[%s1 + $0xd0] sm:$0xff]
        %v427 = vld [vmem:[%s1 + $0xd8] sm:$0xff]
        %v428 = vld [vmem:[%s1 + $0xe0] sm:$0xff]
        %v429 = vld [vmem:[%s1 + $0xe8] sm:$0xff]
        %v430 = vld [vmem:[%s1 + $0xf0] sm:$0xff]
        %v431 = vld [vmem:[%s1 + $0xf8] sm:$0xff]
        %v432 = vld [vmem:[%s1 + $0x100] sm:$0xff]
        %v433 = vld [vmem:[%s1 + $0x108] sm:$0xff]
        %v434 = vld [vmem:[%s1 + $0x110] sm:$0xff]
        %v435 = vld [vmem:[%s1 + $0x118] sm:$0xff]
        %v436 = vld [vmem:[%s1 + $0x120] sm:$0xff]
        %v437 = vld [vmem:[%s1 + $0x128] sm:$0xff]
        %v438 = vld [vmem:[%s1 + $0x130] sm:$0xff]
        %v439 = vld [vmem:[%s1 + $0x138] sm:$0xff]
        %v440 = vld [vmem:[%s1 + $0x140] sm:$0xff]
        %v441 = vld [vmem:[%s1 + $0x148] sm:$0xff]
        %v442 = vld [vmem:[%s1 + $0x150] sm:$0xff]
        %v443 = vld [vmem:[%s1 + $0x158] sm:$0xff]
        %v444 = vld [vmem:[%s1 + $0x160] sm:$0xff]
        %v445 = vld [vmem:[%s1 + $0x168] sm:$0xff]
        %v446 = vld [vmem:[%s1 + $0x170] sm:$0xff]
        %v447 = vld [vmem:[%s1 + $0x178] sm:$0xff]
        %v448 = vld [vmem:[%s1 + $0x180] sm:$0xff]
        %v449 = vld [vmem:[%s1 + $0x188] sm:$0xff]
        %v450 = vld [vmem:[%s1 + $0x190] sm:$0xff]
        %v451 = vld [vmem:[%s1 + $0x198] sm:$0xff]
        %v452 = vld [vmem:[%s1 + $0x1a0] sm:$0xff]
        %v453 = vld [vmem:[%s1 + $0x1a8] sm:$0xff]
        %v454 = vld [vmem:[%s1 + $0x1b0] sm:$0xff]
        %v455 = vld [vmem:[%s1 + $0x1b8] sm:$0xff]
        %v456 = vld [vmem:[%s1 + $0x1c0] sm:$0xff]
        %v457 = vld [vmem:[%s1 + $0x1c8] sm:$0xff]
        %v458 = vld [vmem:[%s1 + $0x1d0] sm:$0xff]
        %v459 = vld [vmem:[%s1 + $0x1d8] sm:$0xff]
        %v460 = vld [vmem:[%s1 + $0x1e0] sm:$0xff]
        %v461 = vld [vmem:[%s1 + $0x1e8] sm:$0xff]
        %v462 = vld [vmem:[%s1 + $0x1f0] sm:$0xff]
        %v463 = vld [vmem:[%s1 + $0x1f8] sm:$0xff]
        %465 = vset.pattern.permute.xlu0 0
        %466 = vperm.xlu0 %465, %v400
        %v467 = vpop.permute.xlu0 %466
        %470 = vset.pattern.permute.xlu0 0
        %471 = vperm.xlu0 %470, %v401
        %v472 = vpop.permute.xlu0 %471
        %475 = vset.pattern.permute.xlu0 0
        %476 = vperm.xlu0 %475, %v402
        %v477 = vpop.permute.xlu0 %476
        %480 = vset.pattern.permute.xlu0 0
        %481 = vperm.xlu0 %480, %v403
        %v482 = vpop.permute.xlu0 %481
        %485 = vset.pattern.permute.xlu0 0
        %486 = vperm.xlu0 %485, %v404
        %v487 = vpop.permute.xlu0 %486
        %490 = vset.pattern.permute.xlu0 0
        %491 = vperm.xlu0 %490, %v405
        %v492 = vpop.permute.xlu0 %491
        %495 = vset.pattern.permute.xlu0 0
        %496 = vperm.xlu0 %495, %v406
        %v497 = vpop.permute.xlu0 %496
        %500 = vset.pattern.permute.xlu0 0
        %501 = vperm.xlu0 %500, %v407
        %v502 = vpop.permute.xlu0 %501
        %505 = vset.pattern.permute.xlu0 0
        %506 = vperm.xlu0 %505, %v408
        %v507 = vpop.permute.xlu0 %506
        %510 = vset.pattern.permute.xlu0 0
        %511 = vperm.xlu0 %510, %v409
        %v512 = vpop.permute.xlu0 %511
        %515 = vset.pattern.permute.xlu0 0
        %516 = vperm.xlu0 %515, %v410
        %v517 = vpop.permute.xlu0 %516
        %520 = vset.pattern.permute.xlu0 0
        %521 = vperm.xlu0 %520, %v411
        %v522 = vpop.permute.xlu0 %521
        %525 = vset.pattern.permute.xlu0 0
        %526 = vperm.xlu0 %525, %v412
        %v527 = vpop.permute.xlu0 %526
        %530 = vset.pattern.permute.xlu0 0
        %531 = vperm.xlu0 %530, %v413
        %v532 = vpop.permute.xlu0 %531
        %535 = vset.pattern.permute.xlu0 0
        %536 = vperm.xlu0 %535, %v414
        %v537 = vpop.permute.xlu0 %536
        %540 = vset.pattern.permute.xlu0 0
        %541 = vperm.xlu0 %540, %v415
        %v542 = vpop.permute.xlu0 %541
        %545 = vset.pattern.permute.xlu0 0
        %546 = vperm.xlu0 %545, %v416
        %v547 = vpop.permute.xlu0 %546
        %550 = vset.pattern.permute.xlu0 0
        %551 = vperm.xlu0 %550, %v417
        %v552 = vpop.permute.xlu0 %551
        %555 = vset.pattern.permute.xlu0 0
        %556 = vperm.xlu0 %555, %v418
        %v557 = vpop.permute.xlu0 %556
        %560 = vset.pattern.permute.xlu0 0
        %561 = vperm.xlu0 %560, %v419
        %v562 = vpop.permute.xlu0 %561
        %565 = vset.pattern.permute.xlu0 0
        %566 = vperm.xlu0 %565, %v420
        %v567 = vpop.permute.xlu0 %566
        %570 = vset.pattern.permute.xlu0 0
        %571 = vperm.xlu0 %570, %v421
        %v572 = vpop.permute.xlu0 %571
        %575 = vset.pattern.permute.xlu0 0
        %576 = vperm.xlu0 %575, %v422
        %v577 = vpop.permute.xlu0 %576
        %580 = vset.pattern.permute.xlu0 0
        %581 = vperm.xlu0 %580, %v423
        %v582 = vpop.permute.xlu0 %581
        %585 = vset.pattern.permute.xlu0 0
        %586 = vperm.xlu0 %585, %v424
        %v587 = vpop.permute.xlu0 %586
        %590 = vset.pattern.permute.xlu0 0
        %591 = vperm.xlu0 %590, %v425
        %v592 = vpop.permute.xlu0 %591
        %595 = vset.pattern.permute.xlu0 0
        %596 = vperm.xlu0 %595, %v426
        %v597 = vpop.permute.xlu0 %596
        %600 = vset.pattern.permute.xlu0 0
        %601 = vperm.xlu0 %600, %v427
        %v602 = vpop.permute.xlu0 %601
        %605 = vset.pattern.permute.xlu0 0
        %606 = vperm.xlu0 %605, %v428
        %v607 = vpop.permute.xlu0 %606
        %610 = vset.pattern.permute.xlu0 0
        %611 = vperm.xlu0 %610, %v429
        %v612 = vpop.permute.xlu0 %611
        %615 = vset.pattern.permute.xlu0 0
        %616 = vperm.xlu0 %615, %v430
        %v617 = vpop.permute.xlu0 %616
        %620 = vset.pattern.permute.xlu0 0
        %621 = vperm.xlu0 %620, %v431
        %v622 = vpop.permute.xlu0 %621
        %625 = vset.pattern.permute.xlu0 0
        %626 = vperm.xlu0 %625, %v432
        %v627 = vpop.permute.xlu0 %626
        %630 = vset.pattern.permute.xlu0 0
        %631 = vperm.xlu0 %630, %v433
        %v632 = vpop.permute.xlu0 %631
        %635 = vset.pattern.permute.xlu0 0
        %636 = vperm.xlu0 %635, %v434
        %v637 = vpop.permute.xlu0 %636
        %640 = vset.pattern.permute.xlu0 0
        %641 = vperm.xlu0 %640, %v435
        %v642 = vpop.permute.xlu0 %641
        %645 = vset.pattern.permute.xlu0 0
        %646 = vperm.xlu0 %645, %v436
        %v647 = vpop.permute.xlu0 %646
        %650 = vset.pattern.permute.xlu0 0
        %651 = vperm.xlu0 %650, %v437
        %v652 = vpop.permute.xlu0 %651
        %655 = vset.pattern.permute.xlu0 0
        %656 = vperm.xlu0 %655, %v438
        %v657 = vpop.permute.xlu0 %656
        %660 = vset.pattern.permute.xlu0 0
        %661 = vperm.xlu0 %660, %v439
        %v662 = vpop.permute.xlu0 %661
        %665 = vset.pattern.permute.xlu0 0
        %666 = vperm.xlu0 %665, %v440
        %v667 = vpop.permute.xlu0 %666
        %670 = vset.pattern.permute.xlu0 0
        %671 = vperm.xlu0 %670, %v441
        %v672 = vpop.permute.xlu0 %671
        %675 = vset.pattern.permute.xlu0 0
        %676 = vperm.xlu0 %675, %v442
        %v677 = vpop.permute.xlu0 %676
        %680 = vset.pattern.permute.xlu0 0
        %681 = vperm.xlu0 %680, %v443
        %v682 = vpop.permute.xlu0 %681
        %685 = vset.pattern.permute.xlu0 0
        %686 = vperm.xlu0 %685, %v444
        %v687 = vpop.permute.xlu0 %686
        %690 = vset.pattern.permute.xlu0 0
        %691 = vperm.xlu0 %690, %v445
        %v692 = vpop.permute.xlu0 %691
        %695 = vset.pattern.permute.xlu0 0
        %696 = vperm.xlu0 %695, %v446
        %v697 = vpop.permute.xlu0 %696
        %700 = vset.pattern.permute.xlu0 0
        %701 = vperm.xlu0 %700, %v447
        %v702 = vpop.permute.xlu0 %701
        %705 = vset.pattern.permute.xlu0 0
        %706 = vperm.xlu0 %705, %v448
        %v707 = vpop.permute.xlu0 %706
        %710 = vset.pattern.permute.xlu0 0
        %711 = vperm.xlu0 %710, %v449
        %v712 = vpop.permute.xlu0 %711
        %715 = vset.pattern.permute.xlu0 0
        %716 = vperm.xlu0 %715, %v450
        %v717 = vpop.permute.xlu0 %716
        %720 = vset.pattern.permute.xlu0 0
        %721 = vperm.xlu0 %720, %v451
        %v722 = vpop.permute.xlu0 %721
        %725 = vset.pattern.permute.xlu0 0
        %726 = vperm.xlu0 %725, %v452
        %v727 = vpop.permute.xlu0 %726
        %730 = vset.pattern.permute.xlu0 0
        %731 = vperm.xlu0 %730, %v453
        %v732 = vpop.permute.xlu0 %731
        %735 = vset.pattern.permute.xlu0 0
        %736 = vperm.xlu0 %735, %v454
        %v737 = vpop.permute.xlu0 %736
        %740 = vset.pattern.permute.xlu0 0
        %741 = vperm.xlu0 %740, %v455
        %v742 = vpop.permute.xlu0 %741
        %745 = vset.pattern.permute.xlu0 0
        %746 = vperm.xlu0 %745, %v456
        %v747 = vpop.permute.xlu0 %746
        %750 = vset.pattern.permute.xlu0 0
        %751 = vperm.xlu0 %750, %v457
        %v752 = vpop.permute.xlu0 %751
        %755 = vset.pattern.permute.xlu0 0
        %756 = vperm.xlu0 %755, %v458
        %v757 = vpop.permute.xlu0 %756
        %760 = vset.pattern.permute.xlu0 0
        %761 = vperm.xlu0 %760, %v459
        %v762 = vpop.permute.xlu0 %761
        %765 = vset.pattern.permute.xlu0 0
        %766 = vperm.xlu0 %765, %v460
        %v767 = vpop.permute.xlu0 %766
        %770 = vset.pattern.permute.xlu0 0
        %771 = vperm.xlu0 %770, %v461
        %v772 = vpop.permute.xlu0 %771
        %775 = vset.pattern.permute.xlu0 0
        %776 = vperm.xlu0 %775, %v462
        %v777 = vpop.permute.xlu0 %776
        %780 = vset.pattern.permute.xlu0 0
        %781 = vperm.xlu0 %780, %v463
        %v782 = vpop.permute.xlu0 %781
        %v784 = vmul.f32 %v336, %v467
        %v785 = vmul.f32 %v337, %v472
        %v786 = vmul.f32 %v338, %v477
        %v787 = vmul.f32 %v339, %v482
        %v788 = vmul.f32 %v340, %v487
        %v789 = vmul.f32 %v341, %v492
        %v790 = vmul.f32 %v342, %v497
        %v791 = vmul.f32 %v343, %v502
        %v792 = vmul.f32 %v344, %v507
        %v793 = vmul.f32 %v345, %v512
        %v794 = vmul.f32 %v346, %v517
        %v795 = vmul.f32 %v347, %v522
        %v796 = vmul.f32 %v348, %v527
        %v797 = vmul.f32 %v349, %v532
        %v798 = vmul.f32 %v350, %v537
        %v799 = vmul.f32 %v351, %v542
        %v800 = vmul.f32 %v352, %v547
        %v801 = vmul.f32 %v353, %v552
        %v802 = vmul.f32 %v354, %v557
        %v803 = vmul.f32 %v355, %v562
        %v804 = vmul.f32 %v356, %v567
        %v805 = vmul.f32 %v357, %v572
        %v806 = vmul.f32 %v358, %v577
        %v807 = vmul.f32 %v359, %v582
        %v808 = vmul.f32 %v360, %v587
        %v809 = vmul.f32 %v361, %v592
        %v810 = vmul.f32 %v362, %v597
        %v811 = vmul.f32 %v363, %v602
        %v812 = vmul.f32 %v364, %v607
        %v813 = vmul.f32 %v365, %v612
        %v814 = vmul.f32 %v366, %v617
        %v815 = vmul.f32 %v367, %v622
        %v816 = vmul.f32 %v368, %v627
        %v817 = vmul.f32 %v369, %v632
        %v818 = vmul.f32 %v370, %v637
        %v819 = vmul.f32 %v371, %v642
        %v820 = vmul.f32 %v372, %v647
        %v821 = vmul.f32 %v373, %v652
        %v822 = vmul.f32 %v374, %v657
        %v823 = vmul.f32 %v375, %v662
        %v824 = vmul.f32 %v376, %v667
        %v825 = vmul.f32 %v377, %v672
        %v826 = vmul.f32 %v378, %v677
        %v827 = vmul.f32 %v379, %v682
        %v828 = vmul.f32 %v380, %v687
        %v829 = vmul.f32 %v381, %v692
        %v830 = vmul.f32 %v382, %v697
        %v831 = vmul.f32 %v383, %v702
        %v832 = vmul.f32 %v384, %v707
        %v833 = vmul.f32 %v385, %v712
        %v834 = vmul.f32 %v386, %v717
        %v835 = vmul.f32 %v387, %v722
        %v836 = vmul.f32 %v388, %v727
        %v837 = vmul.f32 %v389, %v732
        %v838 = vmul.f32 %v390, %v737
        %v839 = vmul.f32 %v391, %v742
        %v840 = vmul.f32 %v392, %v747
        %v841 = vmul.f32 %v393, %v752
        %v842 = vmul.f32 %v394, %v757
        %v843 = vmul.f32 %v395, %v762
        %v844 = vmul.f32 %v396, %v767
        %v845 = vmul.f32 %v397, %v772
        %v846 = vmul.f32 %v398, %v777
        %v847 = vmul.f32 %v399, %v782
        %848 = vset.pattern.permute.xlu0 1
        %849 = vperm.xlu0 %848, %v400
        %v850 = vpop.permute.xlu0 %849
        %852 = vset.pattern.permute.xlu0 1
        %853 = vperm.xlu0 %852, %v401
        %v854 = vpop.permute.xlu0 %853
        %856 = vset.pattern.permute.xlu0 1
        %857 = vperm.xlu0 %856, %v402
        %v858 = vpop.permute.xlu0 %857
        %860 = vset.pattern.permute.xlu0 1
        %861 = vperm.xlu0 %860, %v403
        %v862 = vpop.permute.xlu0 %861
        %864 = vset.pattern.permute.xlu0 1
        %865 = vperm.xlu0 %864, %v404
        %v866 = vpop.permute.xlu0 %865
        %868 = vset.pattern.permute.xlu0 1
        %869 = vperm.xlu0 %868, %v405
        %v870 = vpop.permute.xlu0 %869
        %872 = vset.pattern.permute.xlu0 1
        %873 = vperm.xlu0 %872, %v406
        %v874 = vpop.permute.xlu0 %873
        %876 = vset.pattern.permute.xlu0 1
        %877 = vperm.xlu0 %876, %v407
        %v878 = vpop.permute.xlu0 %877
        %880 = vset.pattern.permute.xlu0 1
        %881 = vperm.xlu0 %880, %v408
        %v882 = vpop.permute.xlu0 %881
        %884 = vset.pattern.permute.xlu0 1
        %885 = vperm.xlu0 %884, %v409
        %v886 = vpop.permute.xlu0 %885
        %888 = vset.pattern.permute.xlu0 1
        %889 = vperm.xlu0 %888, %v410
        %v890 = vpop.permute.xlu0 %889
        %892 = vset.pattern.permute.xlu0 1
        %893 = vperm.xlu0 %892, %v411
        %v894 = vpop.permute.xlu0 %893
        %896 = vset.pattern.permute.xlu0 1
        %897 = vperm.xlu0 %896, %v412
        %v898 = vpop.permute.xlu0 %897
        %900 = vset.pattern.permute.xlu0 1
        %901 = vperm.xlu0 %900, %v413
        %v902 = vpop.permute.xlu0 %901
        %904 = vset.pattern.permute.xlu0 1
        %905 = vperm.xlu0 %904, %v414
        %v906 = vpop.permute.xlu0 %905
        %908 = vset.pattern.permute.xlu0 1
        %909 = vperm.xlu0 %908, %v415
        %v910 = vpop.permute.xlu0 %909
        %912 = vset.pattern.permute.xlu0 1
        %913 = vperm.xlu0 %912, %v416
        %v914 = vpop.permute.xlu0 %913
        %916 = vset.pattern.permute.xlu0 1
        %917 = vperm.xlu0 %916, %v417
        %v918 = vpop.permute.xlu0 %917
        %920 = vset.pattern.permute.xlu0 1
        %921 = vperm.xlu0 %920, %v418
        %v922 = vpop.permute.xlu0 %921
        %924 = vset.pattern.permute.xlu0 1
        %925 = vperm.xlu0 %924, %v419
        %v926 = vpop.permute.xlu0 %925
        %928 = vset.pattern.permute.xlu0 1
        %929 = vperm.xlu0 %928, %v420
        %v930 = vpop.permute.xlu0 %929
        %932 = vset.pattern.permute.xlu0 1
        %933 = vperm.xlu0 %932, %v421
        %v934 = vpop.permute.xlu0 %933
        %936 = vset.pattern.permute.xlu0 1
        %937 = vperm.xlu0 %936, %v422
        %v938 = vpop.permute.xlu0 %937
        %940 = vset.pattern.permute.xlu0 1
        %941 = vperm.xlu0 %940, %v423
        %v942 = vpop.permute.xlu0 %941
        %944 = vset.pattern.permute.xlu0 1
        %945 = vperm.xlu0 %944, %v424
        %v946 = vpop.permute.xlu0 %945
        %948 = vset.pattern.permute.xlu0 1
        %949 = vperm.xlu0 %948, %v425
        %v950 = vpop.permute.xlu0 %949
        %952 = vset.pattern.permute.xlu0 1
        %953 = vperm.xlu0 %952, %v426
        %v954 = vpop.permute.xlu0 %953
        %956 = vset.pattern.permute.xlu0 1
        %957 = vperm.xlu0 %956, %v427
        %v958 = vpop.permute.xlu0 %957
        %960 = vset.pattern.permute.xlu0 1
        %961 = vperm.xlu0 %960, %v428
        %v962 = vpop.permute.xlu0 %961
        %964 = vset.pattern.permute.xlu0 1
        %965 = vperm.xlu0 %964, %v429
        %v966 = vpop.permute.xlu0 %965
        %968 = vset.pattern.permute.xlu0 1
        %969 = vperm.xlu0 %968, %v430
        %v970 = vpop.permute.xlu0 %969
        %972 = vset.pattern.permute.xlu0 1
        %973 = vperm.xlu0 %972, %v431
        %v974 = vpop.permute.xlu0 %973
        %976 = vset.pattern.permute.xlu0 1
        %977 = vperm.xlu0 %976, %v432
        %v978 = vpop.permute.xlu0 %977
        %980 = vset.pattern.permute.xlu0 1
        %981 = vperm.xlu0 %980, %v433
        %v982 = vpop.permute.xlu0 %981
        %984 = vset.pattern.permute.xlu0 1
        %985 = vperm.xlu0 %984, %v434
        %v986 = vpop.permute.xlu0 %985
        %988 = vset.pattern.permute.xlu0 1
        %989 = vperm.xlu0 %988, %v435
        %v990 = vpop.permute.xlu0 %989
        %992 = vset.pattern.permute.xlu0 1
        %993 = vperm.xlu0 %992, %v436
        %v994 = vpop.permute.xlu0 %993
        %996 = vset.pattern.permute.xlu0 1
        %997 = vperm.xlu0 %996, %v437
        %v998 = vpop.permute.xlu0 %997
        %1000 = vset.pattern.permute.xlu0 1
        %1001 = vperm.xlu0 %1000, %v438
        %v1002 = vpop.permute.xlu0 %1001
        %1004 = vset.pattern.permute.xlu0 1
        %1005 = vperm.xlu0 %1004, %v439
        %v1006 = vpop.permute.xlu0 %1005
        %1008 = vset.pattern.permute.xlu0 1
        %1009 = vperm.xlu0 %1008, %v440
        %v1010 = vpop.permute.xlu0 %1009
        %1012 = vset.pattern.permute.xlu0 1
        %1013 = vperm.xlu0 %1012, %v441
        %v1014 = vpop.permute.xlu0 %1013
        %1016 = vset.pattern.permute.xlu0 1
        %1017 = vperm.xlu0 %1016, %v442
        %v1018 = vpop.permute.xlu0 %1017
        %1020 = vset.pattern.permute.xlu0 1
        %1021 = vperm.xlu0 %1020, %v443
        %v1022 = vpop.permute.xlu0 %1021
        %1024 = vset.pattern.permute.xlu0 1
        %1025 = vperm.xlu0 %1024, %v444
        %v1026 = vpop.permute.xlu0 %1025
        %1028 = vset.pattern.permute.xlu0 1
        %1029 = vperm.xlu0 %1028, %v445
        %v1030 = vpop.permute.xlu0 %1029
        %1032 = vset.pattern.permute.xlu0 1
        %1033 = vperm.xlu0 %1032, %v446
        %v1034 = vpop.permute.xlu0 %1033
        %1036 = vset.pattern.permute.xlu0 1
        %1037 = vperm.xlu0 %1036, %v447
        %v1038 = vpop.permute.xlu0 %1037
        %1040 = vset.pattern.permute.xlu0 1
        %1041 = vperm.xlu0 %1040, %v448
        %v1042 = vpop.permute.xlu0 %1041
        %1044 = vset.pattern.permute.xlu0 1
        %1045 = vperm.xlu0 %1044, %v449
        %v1046 = vpop.permute.xlu0 %1045
        %1048 = vset.pattern.permute.xlu0 1
        %1049 = vperm.xlu0 %1048, %v450
        %v1050 = vpop.permute.xlu0 %1049
        %1052 = vset.pattern.permute.xlu0 1
        %1053 = vperm.xlu0 %1052, %v451
        %v1054 = vpop.permute.xlu0 %1053
        %1056 = vset.pattern.permute.xlu0 1
        %1057 = vperm.xlu0 %1056, %v452
        %v1058 = vpop.permute.xlu0 %1057
        %1060 = vset.pattern.permute.xlu0 1
        %1061 = vperm.xlu0 %1060, %v453
        %v1062 = vpop.permute.xlu0 %1061
        %1064 = vset.pattern.permute.xlu0 1
        %1065 = vperm.xlu0 %1064, %v454
        %v1066 = vpop.permute.xlu0 %1065
        %1068 = vset.pattern.permute.xlu0 1
        %1069 = vperm.xlu0 %1068, %v455
        %v1070 = vpop.permute.xlu0 %1069
        %1072 = vset.pattern.permute.xlu0 1
        %1073 = vperm.xlu0 %1072, %v456
        %v1074 = vpop.permute.xlu0 %1073
        %1076 = vset.pattern.permute.xlu0 1
        %1077 = vperm.xlu0 %1076, %v457
        %v1078 = vpop.permute.xlu0 %1077
        %1080 = vset.pattern.permute.xlu0 1
        %1081 = vperm.xlu0 %1080, %v458
        %v1082 = vpop.permute.xlu0 %1081
        %1084 = vset.pattern.permute.xlu0 1
        %1085 = vperm.xlu0 %1084, %v459
        %v1086 = vpop.permute.xlu0 %1085
        %1088 = vset.pattern.permute.xlu0 1
        %1089 = vperm.xlu0 %1088, %v460
        %v1090 = vpop.permute.xlu0 %1089
        %1092 = vset.pattern.permute.xlu0 1
        %1093 = vperm.xlu0 %1092, %v461
        %v1094 = vpop.permute.xlu0 %1093
        %1096 = vset.pattern.permute.xlu0 1
        %1097 = vperm.xlu0 %1096, %v462
        %v1098 = vpop.permute.xlu0 %1097
        %1100 = vset.pattern.permute.xlu0 1
        %1101 = vperm.xlu0 %1100, %v463
        %v1102 = vpop.permute.xlu0 %1101
        %v1104 = vadd.f32 %v784, %v850
        %v1105 = vadd.f32 %v785, %v854
        %v1106 = vadd.f32 %v786, %v858
        %v1107 = vadd.f32 %v787, %v862
        %v1108 = vadd.f32 %v788, %v866
        %v1109 = vadd.f32 %v789, %v870
        %v1110 = vadd.f32 %v790, %v874
        %v1111 = vadd.f32 %v791, %v878
        %v1112 = vadd.f32 %v792, %v882
        %v1113 = vadd.f32 %v793, %v886
        %v1114 = vadd.f32 %v794, %v890
        %v1115 = vadd.f32 %v795, %v894
        %v1116 = vadd.f32 %v796, %v898
        %v1117 = vadd.f32 %v797, %v902
        %v1118 = vadd.f32 %v798, %v906
        %v1119 = vadd.f32 %v799, %v910
        %v1120 = vadd.f32 %v800, %v914
        %v1121 = vadd.f32 %v801, %v918
        %v1122 = vadd.f32 %v802, %v922
        %v1123 = vadd.f32 %v803, %v926
        %v1124 = vadd.f32 %v804, %v930
        %v1125 = vadd.f32 %v805, %v934
        %v1126 = vadd.f32 %v806, %v938
        %v1127 = vadd.f32 %v807, %v942
        %v1128 = vadd.f32 %v808, %v946
        %v1129 = vadd.f32 %v809, %v950
        %v1130 = vadd.f32 %v810, %v954
        %v1131 = vadd.f32 %v811, %v958
        %v1132 = vadd.f32 %v812, %v962
        %v1133 = vadd.f32 %v813, %v966
        %v1134 = vadd.f32 %v814, %v970
        %v1135 = vadd.f32 %v815, %v974
        %v1136 = vadd.f32 %v816, %v978
        %v1137 = vadd.f32 %v817, %v982
        %v1138 = vadd.f32 %v818, %v986
        %v1139 = vadd.f32 %v819, %v990
        %v1140 = vadd.f32 %v820, %v994
        %v1141 = vadd.f32 %v821, %v998
        %v1142 = vadd.f32 %v822, %v1002
        %v1143 = vadd.f32 %v823, %v1006
        %v1144 = vadd.f32 %v824, %v1010
        %v1145 = vadd.f32 %v825, %v1014
        %v1146 = vadd.f32 %v826, %v1018
        %v1147 = vadd.f32 %v827, %v1022
        %v1148 = vadd.f32 %v828, %v1026
        %v1149 = vadd.f32 %v829, %v1030
        %v1150 = vadd.f32 %v830, %v1034
        %v1151 = vadd.f32 %v831, %v1038
        %v1152 = vadd.f32 %v832, %v1042
        %v1153 = vadd.f32 %v833, %v1046
        %v1154 = vadd.f32 %v834, %v1050
        %v1155 = vadd.f32 %v835, %v1054
        %v1156 = vadd.f32 %v836, %v1058
        %v1157 = vadd.f32 %v837, %v1062
        %v1158 = vadd.f32 %v838, %v1066
        %v1159 = vadd.f32 %v839, %v1070
        %v1160 = vadd.f32 %v840, %v1074
        %v1161 = vadd.f32 %v841, %v1078
        %v1162 = vadd.f32 %v842, %v1082
        %v1163 = vadd.f32 %v843, %v1086
        %v1164 = vadd.f32 %v844, %v1090
        %v1165 = vadd.f32 %v845, %v1094
        %v1166 = vadd.f32 %v846, %v1098
        %v1167 = vadd.f32 %v847, %v1102
        %v1168 = vmax.f32 %v1104, 0.0
        %v1169 = vmax.f32 %v1105, 0.0
        %v1170 = vmax.f32 %v1106, 0.0
        %v1171 = vmax.f32 %v1107, 0.0
        %v1172 = vmax.f32 %v1108, 0.0
        %v1173 = vmax.f32 %v1109, 0.0
        %v1174 = vmax.f32 %v1110, 0.0
        %v1175 = vmax.f32 %v1111, 0.0
        %v1176 = vmax.f32 %v1112, 0.0
        %v1177 = vmax.f32 %v1113, 0.0
        %v1178 = vmax.f32 %v1114, 0.0
        %v1179 = vmax.f32 %v1115, 0.0
        %v1180 = vmax.f32 %v1116, 0.0
        %v1181 = vmax.f32 %v1117, 0.0
        %v1182 = vmax.f32 %v1118, 0.0
        %v1183 = vmax.f32 %v1119, 0.0
        %v1184 = vmax.f32 %v1120, 0.0
        %v1185 = vmax.f32 %v1121, 0.0
        %v1186 = vmax.f32 %v1122, 0.0
        %v1187 = vmax.f32 %v1123, 0.0
        %v1188 = vmax.f32 %v1124, 0.0
        %v1189 = vmax.f32 %v1125, 0.0
        %v1190 = vmax.f32 %v1126, 0.0
        %v1191 = vmax.f32 %v1127, 0.0
        %v1192 = vmax.f32 %v1128, 0.0
        %v1193 = vmax.f32 %v1129, 0.0
        %v1194 = vmax.f32 %v1130, 0.0
        %v1195 = vmax.f32 %v1131, 0.0
        %v1196 = vmax.f32 %v1132, 0.0
        %v1197 = vmax.f32 %v1133, 0.0
        %v1198 = vmax.f32 %v1134, 0.0
        %v1199 = vmax.f32 %v1135, 0.0
        %v1200 = vmax.f32 %v1136, 0.0
        %v1201 = vmax.f32 %v1137, 0.0
        %v1202 = vmax.f32 %v1138, 0.0
        %v1203 = vmax.f32 %v1139, 0.0
        %v1204 = vmax.f32 %v1140, 0.0
        %v1205 = vmax.f32 %v1141, 0.0
        %v1206 = vmax.f32 %v1142, 0.0
        %v1207 = vmax.f32 %v1143, 0.0
        %v1208 = vmax.f32 %v1144, 0.0
        %v1209 = vmax.f32 %v1145, 0.0
        %v1210 = vmax.f32 %v1146, 0.0
        %v1211 = vmax.f32 %v1147, 0.0
        %v1212 = vmax.f32 %v1148, 0.0
        %v1213 = vmax.f32 %v1149, 0.0
        %v1214 = vmax.f32 %v1150, 0.0
        %v1215 = vmax.f32 %v1151, 0.0
        %v1216 = vmax.f32 %v1152, 0.0
        %v1217 = vmax.f32 %v1153, 0.0
        %v1218 = vmax.f32 %v1154, 0.0
        %v1219 = vmax.f32 %v1155, 0.0
        %v1220 = vmax.f32 %v1156, 0.0
        %v1221 = vmax.f32 %v1157, 0.0
        %v1222 = vmax.f32 %v1158, 0.0
        %v1223 = vmax.f32 %v1159, 0.0
        %v1224 = vmax.f32 %v1160, 0.0
        %v1225 = vmax.f32 %v1161, 0.0
        %v1226 = vmax.f32 %v1162, 0.0
        %v1227 = vmax.f32 %v1163, 0.0
        %v1228 = vmax.f32 %v1164, 0.0
        %v1229 = vmax.f32 %v1165, 0.0
        %v1230 = vmax.f32 %v1166, 0.0
        %v1231 = vmax.f32 %v1167, 0.0
        %v1232 = vld [vmem:[#allocation2] sm:$0xff]
        %v1233 = vld [vmem:[#allocation2 + $0x8] sm:$0xff]
        %v1234 = vld [vmem:[#allocation2 + $0x10] sm:$0xff]
        %v1235 = vld [vmem:[#allocation2 + $0x18] sm:$0xff]
        %v1236 = vld [vmem:[#allocation2 + $0x20] sm:$0xff]
        %v1237 = vld [vmem:[#allocation2 + $0x28] sm:$0xff]
        %v1238 = vld [vmem:[#allocation2 + $0x30] sm:$0xff]
        %v1239 = vld [vmem:[#allocation2 + $0x38] sm:$0xff]
        %v1240 = vld [vmem:[#allocation2 + $0x40] sm:$0xff]
        %v1241 = vld [vmem:[#allocation2 + $0x48] sm:$0xff]
        %v1242 = vld [vmem:[#allocation2 + $0x50] sm:$0xff]
        %v1243 = vld [vmem:[#allocation2 + $0x58] sm:$0xff]
        %v1244 = vld [vmem:[#allocation2 + $0x60] sm:$0xff]
        %v1245 = vld [vmem:[#allocation2 + $0x68] sm:$0xff]
        %v1246 = vld [vmem:[#allocation2 + $0x70] sm:$0xff]
        %v1247 = vld [vmem:[#allocation2 + $0x78] sm:$0xff]
        %v1248 = vld [vmem:[#allocation2 + $0x80] sm:$0xff]
        %v1249 = vld [vmem:[#allocation2 + $0x88] sm:$0xff]
        %v1250 = vld [vmem:[#allocation2 + $0x90] sm:$0xff]
        %v1251 = vld [vmem:[#allocation2 + $0x98] sm:$0xff]
        %v1252 = vld [vmem:[#allocation2 + $0xa0] sm:$0xff]
        %v1253 = vld [vmem:[#allocation2 + $0xa8] sm:$0xff]
        %v1254 = vld [vmem:[#allocation2 + $0xb0] sm:$0xff]
        %v1255 = vld [vmem:[#allocation2 + $0xb8] sm:$0xff]
        %v1256 = vld [vmem:[#allocation2 + $0xc0] sm:$0xff]
        %v1257 = vld [vmem:[#allocation2 + $0xc8] sm:$0xff]
        %v1258 = vld [vmem:[#allocation2 + $0xd0] sm:$0xff]
        %v1259 = vld [vmem:[#allocation2 + $0xd8] sm:$0xff]
        %v1260 = vld [vmem:[#allocation2 + $0xe0] sm:$0xff]
        %v1261 = vld [vmem:[#allocation2 + $0xe8] sm:$0xff]
        %v1262 = vld [vmem:[#allocation2 + $0xf0] sm:$0xff]
        %v1263 = vld [vmem:[#allocation2 + $0xf8] sm:$0xff]
        %v1264 = vld [vmem:[#allocation2 + $0x100] sm:$0xff]
        %v1265 = vld [vmem:[#allocation2 + $0x108] sm:$0xff]
        %v1266 = vld [vmem:[#allocation2 + $0x110] sm:$0xff]
        %v1267 = vld [vmem:[#allocation2 + $0x118] sm:$0xff]
        %v1268 = vld [vmem:[#allocation2 + $0x120] sm:$0xff]
        %v1269 = vld [vmem:[#allocation2 + $0x128] sm:$0xff]
        %v1270 = vld [vmem:[#allocation2 + $0x130] sm:$0xff]
        %v1271 = vld [vmem:[#allocation2 + $0x138] sm:$0xff]
        %v1272 = vld [vmem:[#allocation2 + $0x140] sm:$0xff]
        %v1273 = vld [vmem:[#allocation2 + $0x148] sm:$0xff]
        %v1274 = vld [vmem:[#allocation2 + $0x150] sm:$0xff]
        %v1275 = vld [vmem:[#allocation2 + $0x158] sm:$0xff]
        %v1276 = vld [vmem:[#allocation2 + $0x160] sm:$0xff]
        %v1277 = vld [vmem:[#allocation2 + $0x168] sm:$0xff]
        %v1278 = vld [vmem:[#allocation2 + $0x170] sm:$0xff]
        %v1279 = vld [vmem:[#allocation2 + $0x178] sm:$0xff]
        %v1280 = vld [vmem:[#allocation2 + $0x180] sm:$0xff]
        %v1281 = vld [vmem:[#allocation2 + $0x188] sm:$0xff]
        %v1282 = vld [vmem:[#allocation2 + $0x190] sm:$0xff]
        %v1283 = vld [vmem:[#allocation2 + $0x198] sm:$0xff]
        %v1284 = vld [vmem:[#allocation2 + $0x1a0] sm:$0xff]
        %v1285 = vld [vmem:[#allocation2 + $0x1a8] sm:$0xff]
        %v1286 = vld [vmem:[#allocation2 + $0x1b0] sm:$0xff]
        %v1287 = vld [vmem:[#allocation2 + $0x1b8] sm:$0xff]
        %v1288 = vld [vmem:[#allocation2 + $0x1c0] sm:$0xff]
        %v1289 = vld [vmem:[#allocation2 + $0x1c8] sm:$0xff]
        %v1290 = vld [vmem:[#allocation2 + $0x1d0] sm:$0xff]
        %v1291 = vld [vmem:[#allocation2 + $0x1d8] sm:$0xff]
        %v1292 = vld [vmem:[#allocation2 + $0x1e0] sm:$0xff]
        %v1293 = vld [vmem:[#allocation2 + $0x1e8] sm:$0xff]
        %v1294 = vld [vmem:[#allocation2 + $0x1f0] sm:$0xff]
        %v1295 = vld [vmem:[#allocation2 + $0x1f8] sm:$0xff]
        %v1296 = vld [vmem:[%s265] sm:$0xff]
        %v1297 = vld [vmem:[%s265 + $0x8] sm:$0xff]
        %v1298 = vld [vmem:[%s265 + $0x10] sm:$0xff]
        %v1299 = vld [vmem:[%s265 + $0x18] sm:$0xff]
        %v1300 = vld [vmem:[%s265 + $0x20] sm:$0xff]
        %v1301 = vld [vmem:[%s265 + $0x28] sm:$0xff]
        %v1302 = vld [vmem:[%s265 + $0x30] sm:$0xff]
        %v1303 = vld [vmem:[%s265 + $0x38] sm:$0xff]
        %v1304 = vld [vmem:[%s265 + $0x40] sm:$0xff]
        %v1305 = vld [vmem:[%s265 + $0x48] sm:$0xff]
        %v1306 = vld [vmem:[%s265 + $0x50] sm:$0xff]
        %v1307 = vld [vmem:[%s265 + $0x58] sm:$0xff]
        %v1308 = vld [vmem:[%s265 + $0x60] sm:$0xff]
        %v1309 = vld [vmem:[%s265 + $0x68] sm:$0xff]
        %v1310 = vld [vmem:[%s265 + $0x70] sm:$0xff]
        %v1311 = vld [vmem:[%s265 + $0x78] sm:$0xff]
        %1312 = vmatprep.subr.mxu0 0.0
        %1313 = vmatpush1.msra.mxu0 %v1311
        %1314 = vmatprep.subr.mxu0 0.0
        %1315 = vmatpush1.msra.mxu0 %v1310
        %1316 = vmatprep.subr.mxu0 0.0
        %1317 = vmatpush1.msra.mxu0 %v1309
        %1318 = vmatprep.subr.mxu0 0.0
        %1319 = vmatpush1.msra.mxu0 %v1308
        %1320 = vmatprep.subr.mxu0 0.0
        %1321 = vmatpush1.msra.mxu0 %v1307
        %1322 = vmatprep.subr.mxu0 0.0
        %1323 = vmatpush1.msra.mxu0 %v1306
        %1324 = vmatprep.subr.mxu0 0.0
        %1325 = vmatpush1.msra.mxu0 %v1305
        %1326 = vmatprep.subr.mxu0 0.0
        %1327 = vmatpush1.msra.mxu0 %v1304
        %1328 = vmatprep.subr.mxu0 0.0
        %1329 = vmatpush1.msra.mxu0 %v1303
        %1330 = vmatprep.subr.mxu0 0.0
        %1331 = vmatpush1.msra.mxu0 %v1302
        %1332 = vmatprep.subr.mxu0 0.0
        %1333 = vmatpush1.msra.mxu0 %v1301
        %1334 = vmatprep.subr.mxu0 0.0
        %1335 = vmatpush1.msra.mxu0 %v1300
        %1336 = vmatprep.subr.mxu0 0.0
        %1337 = vmatpush1.msra.mxu0 %v1299
        %1338 = vmatprep.subr.mxu0 0.0
        %1339 = vmatpush1.msra.mxu0 %v1298
        %1340 = vmatprep.subr.mxu0 0.0
        %1341 = vmatpush1.msra.mxu0 %v1297
        %1342 = vmatprep.subr.mxu0 0.0
        %1343 = vmatpush1.msra.mxu0 %v1296
        %1344 = vmatprep.subr.mxu0 0.0
        %1345 = vmatpush2.msra.mxu0 0.0
        %1346 = vmatprep.subr.mxu0 0.0
        %1347 = vmatpush2.msra.mxu0 0.0
        %1348 = vmatprep.subr.mxu0 0.0
        %1349 = vmatpush2.msra.mxu0 0.0
        %1350 = vmatprep.subr.mxu0 0.0
        %1351 = vmatpush2.msra.mxu0 0.0
        %1352 = vmatprep.subr.mxu0 0.0
        %1353 = vmatpush2.msra.mxu0 0.0
        %1354 = vmatprep.subr.mxu0 0.0
        %1355 = vmatpush2.msra.mxu0 0.0
        %1356 = vmatprep.subr.mxu0 0.0
        %1357 = vmatpush2.msra.mxu0 0.0
        %1358 = vmatprep.subr.mxu0 0.0
        %1359 = vmatpush2.msra.mxu0 0.0
        %1360 = vmatprep.subr.mxu0 0.0
        %1361 = vmatpush2.msra.mxu0 0.0
        %1362 = vmatprep.subr.mxu0 0.0
        %1363 = vmatpush2.msra.mxu0 0.0
        %1364 = vmatprep.subr.mxu0 0.0
        %1365 = vmatpush2.msra.mxu0 0.0
        %1366 = vmatprep.subr.mxu0 0.0
        %1367 = vmatpush2.msra.mxu0 0.0
        %1368 = vmatprep.subr.mxu0 0.0
        %1369 = vmatpush2.msra.mxu0 0.0
        %1370 = vmatprep.subr.mxu0 0.0
        %1371 = vmatpush2.msra.mxu0 0.0
        %1372 = vmatprep.subr.mxu0 0.0
        %1373 = vmatpush2.msra.mxu0 0.0
        %1374 = vmatprep.subr.mxu0 0.0
        %1375 = vmatpush2.msra.mxu0 0.0
        %1376 = vmatprep.mubr.f32.mxu0 0.0
        %1377 = vmatmul.mubr.f32.gmra.mxu0 %v1168
        %v1378 = vpop.f32.mrf.mxu0
        %v1379 = vadd.f32 0.0, %v1378
        %v1380 = vpop.f32.mrf.mxu0
        %1381 = vmatprep.mubr.f32.mxu0 0.0
        %1382 = vmatmul.mubr.f32.gmra.mxu0 %v1169
        %v1383 = vpop.f32.mrf.mxu0
        %v1384 = vadd.f32 0.0, %v1383
        %v1385 = vpop.f32.mrf.mxu0
        %1386 = vmatprep.mubr.f32.mxu0 0.0
        %1387 = vmatmul.mubr.f32.gmra.mxu0 %v1170
        %v1388 = vpop.f32.mrf.mxu0
        %v1389 = vadd.f32 0.0, %v1388
        %v1390 = vpop.f32.mrf.mxu0
        %1391 = vmatprep.mubr.f32.mxu0 0.0
        %1392 = vmatmul.mubr.f32.gmra.mxu0 %v1171
        %v1393 = vpop.f32.mrf.mxu0
        %v1394 = vadd.f32 0.0, %v1393
        %v1395 = vpop.f32.mrf.mxu0
        %1396 = vmatprep.mubr.f32.mxu0 0.0
        %1397 = vmatmul.mubr.f32.gmra.mxu0 %v1172
        %v1398 = vpop.f32.mrf.mxu0
        %v1399 = vadd.f32 0.0, %v1398
        %v1400 = vpop.f32.mrf.mxu0
        %1401 = vmatprep.mubr.f32.mxu0 0.0
        %1402 = vmatmul.mubr.f32.gmra.mxu0 %v1173
        %v1403 = vpop.f32.mrf.mxu0
        %v1404 = vadd.f32 0.0, %v1403
        %v1405 = vpop.f32.mrf.mxu0
        %1406 = vmatprep.mubr.f32.mxu0 0.0
        %1407 = vmatmul.mubr.f32.gmra.mxu0 %v1174
        %v1408 = vpop.f32.mrf.mxu0
        %v1409 = vadd.f32 0.0, %v1408
        %v1410 = vpop.f32.mrf.mxu0
        %1411 = vmatprep.mubr.f32.mxu0 0.0
        %1412 = vmatmul.mubr.f32.gmra.mxu0 %v1175
        %v1413 = vpop.f32.mrf.mxu0
        %v1414 = vadd.f32 0.0, %v1413
        %v1415 = vpop.f32.mrf.mxu0
        %1416 = vmatprep.mubr.f32.mxu0 0.0
        %1417 = vmatmul.mubr.f32.gmra.mxu0 %v1176
        %v1418 = vpop.f32.mrf.mxu0
        %v1419 = vadd.f32 0.0, %v1418
        %v1420 = vpop.f32.mrf.mxu0
        %1421 = vmatprep.mubr.f32.mxu0 0.0
        %1422 = vmatmul.mubr.f32.gmra.mxu0 %v1177
        %v1423 = vpop.f32.mrf.mxu0
        %v1424 = vadd.f32 0.0, %v1423
        %v1425 = vpop.f32.mrf.mxu0
        %1426 = vmatprep.mubr.f32.mxu0 0.0
        %1427 = vmatmul.mubr.f32.gmra.mxu0 %v1178
        %v1428 = vpop.f32.mrf.mxu0
        %v1429 = vadd.f32 0.0, %v1428
        %v1430 = vpop.f32.mrf.mxu0
        %1431 = vmatprep.mubr.f32.mxu0 0.0
        %1432 = vmatmul.mubr.f32.gmra.mxu0 %v1179
        %v1433 = vpop.f32.mrf.mxu0
        %v1434 = vadd.f32 0.0, %v1433
        %v1435 = vpop.f32.mrf.mxu0
        %1436 = vmatprep.mubr.f32.mxu0 0.0
        %1437 = vmatmul.mubr.f32.gmra.mxu0 %v1180
        %v1438 = vpop.f32.mrf.mxu0
        %v1439 = vadd.f32 0.0, %v1438
        %v1440 = vpop.f32.mrf.mxu0
        %1441 = vmatprep.mubr.f32.mxu0 0.0
        %1442 = vmatmul.mubr.f32.gmra.mxu0 %v1181
        %v1443 = vpop.f32.mrf.mxu0
        %v1444 = vadd.f32 0.0, %v1443
        %v1445 = vpop.f32.mrf.mxu0
        %1446 = vmatprep.mubr.f32.mxu0 0.0
        %1447 = vmatmul.mubr.f32.gmra.mxu0 %v1182
        %v1448 = vpop.f32.mrf.mxu0
        %v1449 = vadd.f32 0.0, %v1448
        %v1450 = vpop.f32.mrf.mxu0
        %1451 = vmatprep.mubr.f32.mxu0 0.0
        %1452 = vmatmul.mubr.f32.gmra.mxu0 %v1183
        %v1453 = vpop.f32.mrf.mxu0
        %v1454 = vadd.f32 0.0, %v1453
        %v1455 = vpop.f32.mrf.mxu0
        %1456 = vmatprep.mubr.f32.mxu0 0.0
        %1457 = vmatmul.mubr.f32.gmra.mxu0 %v1184
        %v1458 = vpop.f32.mrf.mxu0
        %v1459 = vadd.f32 0.0, %v1458
        %v1460 = vpop.f32.mrf.mxu0
        %1461 = vmatprep.mubr.f32.mxu0 0.0
        %1462 = vmatmul.mubr.f32.gmra.mxu0 %v1185
        %v1463 = vpop.f32.mrf.mxu0
        %v1464 = vadd.f32 0.0, %v1463
        %v1465 = vpop.f32.mrf.mxu0
        %1466 = vmatprep.mubr.f32.mxu0 0.0
        %1467 = vmatmul.mubr.f32.gmra.mxu0 %v1186
        %v1468 = vpop.f32.mrf.mxu0
        %v1469 = vadd.f32 0.0, %v1468
        %v1470 = vpop.f32.mrf.mxu0
        %1471 = vmatprep.mubr.f32.mxu0 0.0
        %1472 = vmatmul.mubr.f32.gmra.mxu0 %v1187
        %v1473 = vpop.f32.mrf.mxu0
        %v1474 = vadd.f32 0.0, %v1473
        %v1475 = vpop.f32.mrf.mxu0
        %1476 = vmatprep.mubr.f32.mxu0 0.0
        %1477 = vmatmul.mubr.f32.gmra.mxu0 %v1188
        %v1478 = vpop.f32.mrf.mxu0
        %v1479 = vadd.f32 0.0, %v1478
        %v1480 = vpop.f32.mrf.mxu0
        %1481 = vmatprep.mubr.f32.mxu0 0.0
        %1482 = vmatmul.mubr.f32.gmra.mxu0 %v1189
        %v1483 = vpop.f32.mrf.mxu0
        %v1484 = vadd.f32 0.0, %v1483
        %v1485 = vpop.f32.mrf.mxu0
        %1486 = vmatprep.mubr.f32.mxu0 0.0
        %1487 = vmatmul.mubr.f32.gmra.mxu0 %v1190
        %v1488 = vpop.f32.mrf.mxu0
        %v1489 = vadd.f32 0.0, %v1488
        %v1490 = vpop.f32.mrf.mxu0
        %1491 = vmatprep.mubr.f32.mxu0 0.0
        %1492 = vmatmul.mubr.f32.gmra.mxu0 %v1191
        %v1493 = vpop.f32.mrf.mxu0
        %v1494 = vadd.f32 0.0, %v1493
        %v1495 = vpop.f32.mrf.mxu0
        %1496 = vmatprep.mubr.f32.mxu0 0.0
        %1497 = vmatmul.mubr.f32.gmra.mxu0 %v1192
        %v1498 = vpop.f32.mrf.mxu0
        %v1499 = vadd.f32 0.0, %v1498
        %v1500 = vpop.f32.mrf.mxu0
        %1501 = vmatprep.mubr.f32.mxu0 0.0
        %1502 = vmatmul.mubr.f32.gmra.mxu0 %v1193
        %v1503 = vpop.f32.mrf.mxu0
        %v1504 = vadd.f32 0.0, %v1503
        %v1505 = vpop.f32.mrf.mxu0
        %1506 = vmatprep.mubr.f32.mxu0 0.0
        %1507 = vmatmul.mubr.f32.gmra.mxu0 %v1194
        %v1508 = vpop.f32.mrf.mxu0
        %v1509 = vadd.f32 0.0, %v1508
        %v1510 = vpop.f32.mrf.mxu0
        %1511 = vmatprep.mubr.f32.mxu0 0.0
        %1512 = vmatmul.mubr.f32.gmra.mxu0 %v1195
        %v1513 = vpop.f32.mrf.mxu0
        %v1514 = vadd.f32 0.0, %v1513
        %v1515 = vpop.f32.mrf.mxu0
        %1516 = vmatprep.mubr.f32.mxu0 0.0
        %1517 = vmatmul.mubr.f32.gmra.mxu0 %v1196
        %v1518 = vpop.f32.mrf.mxu0
        %v1519 = vadd.f32 0.0, %v1518
        %v1520 = vpop.f32.mrf.mxu0
        %1521 = vmatprep.mubr.f32.mxu0 0.0
        %1522 = vmatmul.mubr.f32.gmra.mxu0 %v1197
        %v1523 = vpop.f32.mrf.mxu0
        %v1524 = vadd.f32 0.0, %v1523
        %v1525 = vpop.f32.mrf.mxu0
        %1526 = vmatprep.mubr.f32.mxu0 0.0
        %1527 = vmatmul.mubr.f32.gmra.mxu0 %v1198
        %v1528 = vpop.f32.mrf.mxu0
        %v1529 = vadd.f32 0.0, %v1528
        %v1530 = vpop.f32.mrf.mxu0
        %1531 = vmatprep.mubr.f32.mxu0 0.0
        %1532 = vmatmul.mubr.f32.gmra.mxu0 %v1199
        %v1533 = vpop.f32.mrf.mxu0
        %v1534 = vadd.f32 0.0, %v1533
        %v1535 = vpop.f32.mrf.mxu0
        %1536 = vmatprep.mubr.f32.mxu0 0.0
        %1537 = vmatmul.mubr.f32.gmra.mxu0 %v1200
        %v1538 = vpop.f32.mrf.mxu0
        %v1539 = vadd.f32 0.0, %v1538
        %v1540 = vpop.f32.mrf.mxu0
        %1541 = vmatprep.mubr.f32.mxu0 0.0
        %1542 = vmatmul.mubr.f32.gmra.mxu0 %v1201
        %v1543 = vpop.f32.mrf.mxu0
        %v1544 = vadd.f32 0.0, %v1543
        %v1545 = vpop.f32.mrf.mxu0
        %1546 = vmatprep.mubr.f32.mxu0 0.0
        %1547 = vmatmul.mubr.f32.gmra.mxu0 %v1202
        %v1548 = vpop.f32.mrf.mxu0
        %v1549 = vadd.f32 0.0, %v1548
        %v1550 = vpop.f32.mrf.mxu0
        %1551 = vmatprep.mubr.f32.mxu0 0.0
        %1552 = vmatmul.mubr.f32.gmra.mxu0 %v1203
        %v1553 = vpop.f32.mrf.mxu0
        %v1554 = vadd.f32 0.0, %v1553
        %v1555 = vpop.f32.mrf.mxu0
        %1556 = vmatprep.mubr.f32.mxu0 0.0
        %1557 = vmatmul.mubr.f32.gmra.mxu0 %v1204
        %v1558 = vpop.f32.mrf.mxu0
        %v1559 = vadd.f32 0.0, %v1558
        %v1560 = vpop.f32.mrf.mxu0
        %1561 = vmatprep.mubr.f32.mxu0 0.0
        %1562 = vmatmul.mubr.f32.gmra.mxu0 %v1205
        %v1563 = vpop.f32.mrf.mxu0
        %v1564 = vadd.f32 0.0, %v1563
        %v1565 = vpop.f32.mrf.mxu0
        %1566 = vmatprep.mubr.f32.mxu0 0.0
        %1567 = vmatmul.mubr.f32.gmra.mxu0 %v1206
        %v1568 = vpop.f32.mrf.mxu0
        %v1569 = vadd.f32 0.0, %v1568
        %v1570 = vpop.f32.mrf.mxu0
        %1571 = vmatprep.mubr.f32.mxu0 0.0
        %1572 = vmatmul.mubr.f32.gmra.mxu0 %v1207
        %v1573 = vpop.f32.mrf.mxu0
        %v1574 = vadd.f32 0.0, %v1573
        %v1575 = vpop.f32.mrf.mxu0
        %1576 = vmatprep.mubr.f32.mxu0 0.0
        %1577 = vmatmul.mubr.f32.gmra.mxu0 %v1208
        %v1578 = vpop.f32.mrf.mxu0
        %v1579 = vadd.f32 0.0, %v1578
        %v1580 = vpop.f32.mrf.mxu0
        %1581 = vmatprep.mubr.f32.mxu0 0.0
        %1582 = vmatmul.mubr.f32.gmra.mxu0 %v1209
        %v1583 = vpop.f32.mrf.mxu0
        %v1584 = vadd.f32 0.0, %v1583
        %v1585 = vpop.f32.mrf.mxu0
        %1586 = vmatprep.mubr.f32.mxu0 0.0
        %1587 = vmatmul.mubr.f32.gmra.mxu0 %v1210
        %v1588 = vpop.f32.mrf.mxu0
        %v1589 = vadd.f32 0.0, %v1588
        %v1590 = vpop.f32.mrf.mxu0
        %1591 = vmatprep.mubr.f32.mxu0 0.0
        %1592 = vmatmul.mubr.f32.gmra.mxu0 %v1211
        %v1593 = vpop.f32.mrf.mxu0
        %v1594 = vadd.f32 0.0, %v1593
        %v1595 = vpop.f32.mrf.mxu0
        %1596 = vmatprep.mubr.f32.mxu0 0.0
        %1597 = vmatmul.mubr.f32.gmra.mxu0 %v1212
        %v1598 = vpop.f32.mrf.mxu0
        %v1599 = vadd.f32 0.0, %v1598
        %v1600 = vpop.f32.mrf.mxu0
        %1601 = vmatprep.mubr.f32.mxu0 0.0
        %1602 = vmatmul.mubr.f32.gmra.mxu0 %v1213
        %v1603 = vpop.f32.mrf.mxu0
        %v1604 = vadd.f32 0.0, %v1603
        %v1605 = vpop.f32.mrf.mxu0
        %1606 = vmatprep.mubr.f32.mxu0 0.0
        %1607 = vmatmul.mubr.f32.gmra.mxu0 %v1214
        %v1608 = vpop.f32.mrf.mxu0
        %v1609 = vadd.f32 0.0, %v1608
        %v1610 = vpop.f32.mrf.mxu0
        %1611 = vmatprep.mubr.f32.mxu0 0.0
        %1612 = vmatmul.mubr.f32.gmra.mxu0 %v1215
        %v1613 = vpop.f32.mrf.mxu0
        %v1614 = vadd.f32 0.0, %v1613
        %v1615 = vpop.f32.mrf.mxu0
        %1616 = vmatprep.mubr.f32.mxu0 0.0
        %1617 = vmatmul.mubr.f32.gmra.mxu0 %v1216
        %v1618 = vpop.f32.mrf.mxu0
        %v1619 = vadd.f32 0.0, %v1618
        %v1620 = vpop.f32.mrf.mxu0
        %1621 = vmatprep.mubr.f32.mxu0 0.0
        %1622 = vmatmul.mubr.f32.gmra.mxu0 %v1217
        %v1623 = vpop.f32.mrf.mxu0
        %v1624 = vadd.f32 0.0, %v1623
        %v1625 = vpop.f32.mrf.mxu0
        %1626 = vmatprep.mubr.f32.mxu0 0.0
        %1627 = vmatmul.mubr.f32.gmra.mxu0 %v1218
        %v1628 = vpop.f32.mrf.mxu0
        %v1629 = vadd.f32 0.0, %v1628
        %v1630 = vpop.f32.mrf.mxu0
        %1631 = vmatprep.mubr.f32.mxu0 0.0
        %1632 = vmatmul.mubr.f32.gmra.mxu0 %v1219
        %v1633 = vpop.f32.mrf.mxu0
        %v1634 = vadd.f32 0.0, %v1633
        %v1635 = vpop.f32.mrf.mxu0
        %1636 = vmatprep.mubr.f32.mxu0 0.0
        %1637 = vmatmul.mubr.f32.gmra.mxu0 %v1220
        %v1638 = vpop.f32.mrf.mxu0
        %v1639 = vadd.f32 0.0, %v1638
        %v1640 = vpop.f32.mrf.mxu0
        %1641 = vmatprep.mubr.f32.mxu0 0.0
        %1642 = vmatmul.mubr.f32.gmra.mxu0 %v1221
        %v1643 = vpop.f32.mrf.mxu0
        %v1644 = vadd.f32 0.0, %v1643
        %v1645 = vpop.f32.mrf.mxu0
        %1646 = vmatprep.mubr.f32.mxu0 0.0
        %1647 = vmatmul.mubr.f32.gmra.mxu0 %v1222
        %v1648 = vpop.f32.mrf.mxu0
        %v1649 = vadd.f32 0.0, %v1648
        %v1650 = vpop.f32.mrf.mxu0
        %1651 = vmatprep.mubr.f32.mxu0 0.0
        %1652 = vmatmul.mubr.f32.gmra.mxu0 %v1223
        %v1653 = vpop.f32.mrf.mxu0
        %v1654 = vadd.f32 0.0, %v1653
        %v1655 = vpop.f32.mrf.mxu0
        %1656 = vmatprep.mubr.f32.mxu0 0.0
        %1657 = vmatmul.mubr.f32.gmra.mxu0 %v1224
        %v1658 = vpop.f32.mrf.mxu0
        %v1659 = vadd.f32 0.0, %v1658
        %v1660 = vpop.f32.mrf.mxu0
        %1661 = vmatprep.mubr.f32.mxu0 0.0
        %1662 = vmatmul.mubr.f32.gmra.mxu0 %v1225
        %v1663 = vpop.f32.mrf.mxu0
        %v1664 = vadd.f32 0.0, %v1663
        %v1665 = vpop.f32.mrf.mxu0
        %1666 = vmatprep.mubr.f32.mxu0 0.0
        %1667 = vmatmul.mubr.f32.gmra.mxu0 %v1226
        %v1668 = vpop.f32.mrf.mxu0
        %v1669 = vadd.f32 0.0, %v1668
        %v1670 = vpop.f32.mrf.mxu0
        %1671 = vmatprep.mubr.f32.mxu0 0.0
        %1672 = vmatmul.mubr.f32.gmra.mxu0 %v1227
        %v1673 = vpop.f32.mrf.mxu0
        %v1674 = vadd.f32 0.0, %v1673
        %v1675 = vpop.f32.mrf.mxu0
        %1676 = vmatprep.mubr.f32.mxu0 0.0
        %1677 = vmatmul.mubr.f32.gmra.mxu0 %v1228
        %v1678 = vpop.f32.mrf.mxu0
        %v1679 = vadd.f32 0.0, %v1678
        %v1680 = vpop.f32.mrf.mxu0
        %1681 = vmatprep.mubr.f32.mxu0 0.0
        %1682 = vmatmul.mubr.f32.gmra.mxu0 %v1229
        %v1683 = vpop.f32.mrf.mxu0
        %v1684 = vadd.f32 0.0, %v1683
        %v1685 = vpop.f32.mrf.mxu0
        %1686 = vmatprep.mubr.f32.mxu0 0.0
        %1687 = vmatmul.mubr.f32.gmra.mxu0 %v1230
        %v1688 = vpop.f32.mrf.mxu0
        %v1689 = vadd.f32 0.0, %v1688
        %v1690 = vpop.f32.mrf.mxu0
        %1691 = vmatprep.mubr.f32.mxu0 0.0
        %1692 = vmatmul.mubr.f32.gmra.mxu0 %v1231
        %v1693 = vpop.f32.mrf.mxu0
        %v1694 = vadd.f32 0.0, %v1693
        %v1695 = vpop.f32.mrf.mxu0
        %1696 = vdwg.mxu0
        %v1697 = vadd.f32 %v1232, %v1379
        %v1698 = vadd.f32 %v1233, %v1384
        %v1699 = vadd.f32 %v1234, %v1389
        %v1700 = vadd.f32 %v1235, %v1394
        %v1701 = vadd.f32 %v1236, %v1399
        %v1702 = vadd.f32 %v1237, %v1404
        %v1703 = vadd.f32 %v1238, %v1409
        %v1704 = vadd.f32 %v1239, %v1414
        %v1705 = vadd.f32 %v1240, %v1419
        %v1706 = vadd.f32 %v1241, %v1424
        %v1707 = vadd.f32 %v1242, %v1429
        %v1708 = vadd.f32 %v1243, %v1434
        %v1709 = vadd.f32 %v1244, %v1439
        %v1710 = vadd.f32 %v1245, %v1444
        %v1711 = vadd.f32 %v1246, %v1449
        %v1712 = vadd.f32 %v1247, %v1454
        %v1713 = vadd.f32 %v1248, %v1459
        %v1714 = vadd.f32 %v1249, %v1464
        %v1715 = vadd.f32 %v1250, %v1469
        %v1716 = vadd.f32 %v1251, %v1474
        %v1717 = vadd.f32 %v1252, %v1479
        %v1718 = vadd.f32 %v1253, %v1484
        %v1719 = vadd.f32 %v1254, %v1489
        %v1720 = vadd.f32 %v1255, %v1494
        %v1721 = vadd.f32 %v1256, %v1499
        %v1722 = vadd.f32 %v1257, %v1504
        %v1723 = vadd.f32 %v1258, %v1509
        %v1724 = vadd.f32 %v1259, %v1514
        %v1725 = vadd.f32 %v1260, %v1519
        %v1726 = vadd.f32 %v1261, %v1524
        %v1727 = vadd.f32 %v1262, %v1529
        %v1728 = vadd.f32 %v1263, %v1534
        %v1729 = vadd.f32 %v1264, %v1539
        %v1730 = vadd.f32 %v1265, %v1544
        %v1731 = vadd.f32 %v1266, %v1549
        %v1732 = vadd.f32 %v1267, %v1554
        %v1733 = vadd.f32 %v1268, %v1559
        %v1734 = vadd.f32 %v1269, %v1564
        %v1735 = vadd.f32 %v1270, %v1569
        %v1736 = vadd.f32 %v1271, %v1574
        %v1737 = vadd.f32 %v1272, %v1579
        %v1738 = vadd.f32 %v1273, %v1584
        %v1739 = vadd.f32 %v1274, %v1589
        %v1740 = vadd.f32 %v1275, %v1594
        %v1741 = vadd.f32 %v1276, %v1599
        %v1742 = vadd.f32 %v1277, %v1604
        %v1743 = vadd.f32 %v1278, %v1609
        %v1744 = vadd.f32 %v1279, %v1614
        %v1745 = vadd.f32 %v1280, %v1619
        %v1746 = vadd.f32 %v1281, %v1624
        %v1747 = vadd.f32 %v1282, %v1629
        %v1748 = vadd.f32 %v1283, %v1634
        %v1749 = vadd.f32 %v1284, %v1639
        %v1750 = vadd.f32 %v1285, %v1644
        %v1751 = vadd.f32 %v1286, %v1649
        %v1752 = vadd.f32 %v1287, %v1654
        %v1753 = vadd.f32 %v1288, %v1659
        %v1754 = vadd.f32 %v1289, %v1664
        %v1755 = vadd.f32 %v1290, %v1669
        %v1756 = vadd.f32 %v1291, %v1674
        %v1757 = vadd.f32 %v1292, %v1679
        %v1758 = vadd.f32 %v1293, %v1684
        %v1759 = vadd.f32 %v1294, %v1689
        %v1760 = vadd.f32 %v1295, %v1694
        %vm1761 = vcmask 39936
        %1762 = vst.msk [vmem:[#allocation2] sm:$0xff] %vm1761, %v1697
        %1763 = vst.msk [vmem:[#allocation2 + $0x8] sm:$0xff] %vm1761, %v1698
        %1764 = vst.msk [vmem:[#allocation2 + $0x10] sm:$0xff] %vm1761, %v1699
        %1765 = vst.msk [vmem:[#allocation2 + $0x18] sm:$0xff] %vm1761, %v1700
        %1766 = vst.msk [vmem:[#allocation2 + $0x20] sm:$0xff] %vm1761, %v1701
        %1767 = vst.msk [vmem:[#allocation2 + $0x28] sm:$0xff] %vm1761, %v1702
        %1768 = vst.msk [vmem:[#allocation2 + $0x30] sm:$0xff] %vm1761, %v1703
        %1769 = vst.msk [vmem:[#allocation2 + $0x38] sm:$0xff] %vm1761, %v1704
        %1770 = vst.msk [vmem:[#allocation2 + $0x40] sm:$0xff] %vm1761, %v1705
        %1771 = vst.msk [vmem:[#allocation2 + $0x48] sm:$0xff] %vm1761, %v1706
        %1772 = vst.msk [vmem:[#allocation2 + $0x50] sm:$0xff] %vm1761, %v1707
        %1773 = vst.msk [vmem:[#allocation2 + $0x58] sm:$0xff] %vm1761, %v1708
        %1774 = vst.msk [vmem:[#allocation2 + $0x60] sm:$0xff] %vm1761, %v1709
        %1775 = vst.msk [vmem:[#allocation2 + $0x68] sm:$0xff] %vm1761, %v1710
        %1776 = vst.msk [vmem:[#allocation2 + $0x70] sm:$0xff] %vm1761, %v1711
        %1777 = vst.msk [vmem:[#allocation2 + $0x78] sm:$0xff] %vm1761, %v1712
        %1778 = vst.msk [vmem:[#allocation2 + $0x80] sm:$0xff] %vm1761, %v1713
        %1779 = vst.msk [vmem:[#allocation2 + $0x88] sm:$0xff] %vm1761, %v1714
        %1780 = vst.msk [vmem:[#allocation2 + $0x90] sm:$0xff] %vm1761, %v1715
        %1781 = vst.msk [vmem:[#allocation2 + $0x98] sm:$0xff] %vm1761, %v1716
        %1782 = vst.msk [vmem:[#allocation2 + $0xa0] sm:$0xff] %vm1761, %v1717
        %1783 = vst.msk [vmem:[#allocation2 + $0xa8] sm:$0xff] %vm1761, %v1718
        %1784 = vst.msk [vmem:[#allocation2 + $0xb0] sm:$0xff] %vm1761, %v1719
        %1785 = vst.msk [vmem:[#allocation2 + $0xb8] sm:$0xff] %vm1761, %v1720
        %1786 = vst.msk [vmem:[#allocation2 + $0xc0] sm:$0xff] %vm1761, %v1721
        %1787 = vst.msk [vmem:[#allocation2 + $0xc8] sm:$0xff] %vm1761, %v1722
        %1788 = vst.msk [vmem:[#allocation2 + $0xd0] sm:$0xff] %vm1761, %v1723
        %1789 = vst.msk [vmem:[#allocation2 + $0xd8] sm:$0xff] %vm1761, %v1724
        %1790 = vst.msk [vmem:[#allocation2 + $0xe0] sm:$0xff] %vm1761, %v1725
        %1791 = vst.msk [vmem:[#allocation2 + $0xe8] sm:$0xff] %vm1761, %v1726
        %1792 = vst.msk [vmem:[#allocation2 + $0xf0] sm:$0xff] %vm1761, %v1727
        %1793 = vst.msk [vmem:[#allocation2 + $0xf8] sm:$0xff] %vm1761, %v1728
        %1794 = vst.msk [vmem:[#allocation2 + $0x100] sm:$0xff] %vm1761, %v1729
        %1795 = vst.msk [vmem:[#allocation2 + $0x108] sm:$0xff] %vm1761, %v1730
        %1796 = vst.msk [vmem:[#allocation2 + $0x110] sm:$0xff] %vm1761, %v1731
        %1797 = vst.msk [vmem:[#allocation2 + $0x118] sm:$0xff] %vm1761, %v1732
        %1798 = vst.msk [vmem:[#allocation2 + $0x120] sm:$0xff] %vm1761, %v1733
        %1799 = vst.msk [vmem:[#allocation2 + $0x128] sm:$0xff] %vm1761, %v1734
        %1800 = vst.msk [vmem:[#allocation2 + $0x130] sm:$0xff] %vm1761, %v1735
        %1801 = vst.msk [vmem:[#allocation2 + $0x138] sm:$0xff] %vm1761, %v1736
        %1802 = vst.msk [vmem:[#allocation2 + $0x140] sm:$0xff] %vm1761, %v1737
        %1803 = vst.msk [vmem:[#allocation2 + $0x148] sm:$0xff] %vm1761, %v1738
        %1804 = vst.msk [vmem:[#allocation2 + $0x150] sm:$0xff] %vm1761, %v1739
        %1805 = vst.msk [vmem:[#allocation2 + $0x158] sm:$0xff] %vm1761, %v1740
        %1806 = vst.msk [vmem:[#allocation2 + $0x160] sm:$0xff] %vm1761, %v1741
        %1807 = vst.msk [vmem:[#allocation2 + $0x168] sm:$0xff] %vm1761, %v1742
        %1808 = vst.msk [vmem:[#allocation2 + $0x170] sm:$0xff] %vm1761, %v1743
        %1809 = vst.msk [vmem:[#allocation2 + $0x178] sm:$0xff] %vm1761, %v1744
        %1810 = vst.msk [vmem:[#allocation2 + $0x180] sm:$0xff] %vm1761, %v1745
        %1811 = vst.msk [vmem:[#allocation2 + $0x188] sm:$0xff] %vm1761, %v1746
        %1812 = vst.msk [vmem:[#allocation2 + $0x190] sm:$0xff] %vm1761, %v1747
        %1813 = vst.msk [vmem:[#allocation2 + $0x198] sm:$0xff] %vm1761, %v1748
        %1814 = vst.msk [vmem:[#allocation2 + $0x1a0] sm:$0xff] %vm1761, %v1749
        %1815 = vst.msk [vmem:[#allocation2 + $0x1a8] sm:$0xff] %vm1761, %v1750
        %1816 = vst.msk [vmem:[#allocation2 + $0x1b0] sm:$0xff] %vm1761, %v1751
        %1817 = vst.msk [vmem:[#allocation2 + $0x1b8] sm:$0xff] %vm1761, %v1752
        %1818 = vst.msk [vmem:[#allocation2 + $0x1c0] sm:$0xff] %vm1761, %v1753
        %1819 = vst.msk [vmem:[#allocation2 + $0x1c8] sm:$0xff] %vm1761, %v1754
        %1820 = vst.msk [vmem:[#allocation2 + $0x1d0] sm:$0xff] %vm1761, %v1755
        %1821 = vst.msk [vmem:[#allocation2 + $0x1d8] sm:$0xff] %vm1761, %v1756
        %1822 = vst.msk [vmem:[#allocation2 + $0x1e0] sm:$0xff] %vm1761, %v1757
        %1823 = vst.msk [vmem:[#allocation2 + $0x1e8] sm:$0xff] %vm1761, %v1758
        %1824 = vst.msk [vmem:[#allocation2 + $0x1f0] sm:$0xff] %vm1761, %v1759
        %1825 = vst.msk [vmem:[#allocation2 + $0x1f8] sm:$0xff] %vm1761, %v1760
        // Predicated region
        $region45: #{main_model_forward.1} parent=39 // pred_check
          %p1826 = pneg %p267
        $region46: #{main_model_forward.1} parent=39 // pred_check_branch
          %1828 = sbr.rel (%p1826) target = $region48
        $region47: #{main_model_forward.1} parent=39 // pred_region
          %v1829 = vld [vmem:[%s4] sm:$0x1]
          %v1830 = vld [vmem:[#allocation2] sm:$0xff]
          %v1831 = vld [vmem:[#allocation2 + $0x8] sm:$0xff]
          %v1832 = vld [vmem:[#allocation2 + $0x10] sm:$0xff]
          %v1833 = vld [vmem:[#allocation2 + $0x18] sm:$0xff]
          %v1834 = vld [vmem:[#allocation2 + $0x20] sm:$0xff]
          %v1835 = vld [vmem:[#allocation2 + $0x28] sm:$0xff]
          %v1836 = vld [vmem:[#allocation2 + $0x30] sm:$0xff]
          %v1837 = vld [vmem:[#allocation2 + $0x38] sm:$0xff]
          %v1838 = vld [vmem:[#allocation2 + $0x40] sm:$0xff]
          %v1839 = vld [vmem:[#allocation2 + $0x48] sm:$0xff]
          %v1840 = vld [vmem:[#allocation2 + $0x50] sm:$0xff]
          %v1841 = vld [vmem:[#allocation2 + $0x58] sm:$0xff]
          %v1842 = vld [vmem:[#allocation2 + $0x60] sm:$0xff]
          %v1843 = vld [vmem:[#allocation2 + $0x68] sm:$0xff]
          %v1844 = vld [vmem:[#allocation2 + $0x70] sm:$0xff]
          %v1845 = vld [vmem:[#allocation2 + $0x78] sm:$0xff]
          %v1846 = vld [vmem:[#allocation2 + $0x80] sm:$0xff]
          %v1847 = vld [vmem:[#allocation2 + $0x88] sm:$0xff]
          %v1848 = vld [vmem:[#allocation2 + $0x90] sm:$0xff]
          %v1849 = vld [vmem:[#allocation2 + $0x98] sm:$0xff]
          %v1850 = vld [vmem:[#allocation2 + $0xa0] sm:$0xff]
          %v1851 = vld [vmem:[#allocation2 + $0xa8] sm:$0xff]
          %v1852 = vld [vmem:[#allocation2 + $0xb0] sm:$0xff]
          %v1853 = vld [vmem:[#allocation2 + $0xb8] sm:$0xff]
          %v1854 = vld [vmem:[#allocation2 + $0xc0] sm:$0xff]
          %v1855 = vld [vmem:[#allocation2 + $0xc8] sm:$0xff]
          %v1856 = vld [vmem:[#allocation2 + $0xd0] sm:$0xff]
          %v1857 = vld [vmem:[#allocation2 + $0xd8] sm:$0xff]
          %v1858 = vld [vmem:[#allocation2 + $0xe0] sm:$0xff]
          %v1859 = vld [vmem:[#allocation2 + $0xe8] sm:$0xff]
          %v1860 = vld [vmem:[#allocation2 + $0xf0] sm:$0xff]
          %v1861 = vld [vmem:[#allocation2 + $0xf8] sm:$0xff]
          %v1862 = vld [vmem:[#allocation2 + $0x100] sm:$0xff]
          %v1863 = vld [vmem:[#allocation2 + $0x108] sm:$0xff]
          %v1864 = vld [vmem:[#allocation2 + $0x110] sm:$0xff]
          %v1865 = vld [vmem:[#allocation2 + $0x118] sm:$0xff]
          %v1866 = vld [vmem:[#allocation2 + $0x120] sm:$0xff]
          %v1867 = vld [vmem:[#allocation2 + $0x128] sm:$0xff]
          %v1868 = vld [vmem:[#allocation2 + $0x130] sm:$0xff]
          %v1869 = vld [vmem:[#allocation2 + $0x138] sm:$0xff]
          %v1870 = vld [vmem:[#allocation2 + $0x140] sm:$0xff]
          %v1871 = vld [vmem:[#allocation2 + $0x148] sm:$0xff]
          %v1872 = vld [vmem:[#allocation2 + $0x150] sm:$0xff]
          %v1873 = vld [vmem:[#allocation2 + $0x158] sm:$0xff]
          %v1874 = vld [vmem:[#allocation2 + $0x160] sm:$0xff]
          %v1875 = vld [vmem:[#allocation2 + $0x168] sm:$0xff]
          %v1876 = vld [vmem:[#allocation2 + $0x170] sm:$0xff]
          %v1877 = vld [vmem:[#allocation2 + $0x178] sm:$0xff]
          %v1878 = vld [vmem:[#allocation2 + $0x180] sm:$0xff]
          %v1879 = vld [vmem:[#allocation2 + $0x188] sm:$0xff]
          %v1880 = vld [vmem:[#allocation2 + $0x190] sm:$0xff]
          %v1881 = vld [vmem:[#allocation2 + $0x198] sm:$0xff]
          %v1882 = vld [vmem:[#allocation2 + $0x1a0] sm:$0xff]
          %v1883 = vld [vmem:[#allocation2 + $0x1a8] sm:$0xff]
          %v1884 = vld [vmem:[#allocation2 + $0x1b0] sm:$0xff]
          %v1885 = vld [vmem:[#allocation2 + $0x1b8] sm:$0xff]
          %v1886 = vld [vmem:[#allocation2 + $0x1c0] sm:$0xff]
          %v1887 = vld [vmem:[#allocation2 + $0x1c8] sm:$0xff]
          %v1888 = vld [vmem:[#allocation2 + $0x1d0] sm:$0xff]
          %v1889 = vld [vmem:[#allocation2 + $0x1d8] sm:$0xff]
          %v1890 = vld [vmem:[#allocation2 + $0x1e0] sm:$0xff]
          %v1891 = vld [vmem:[#allocation2 + $0x1e8] sm:$0xff]
          %v1892 = vld [vmem:[#allocation2 + $0x1f0] sm:$0xff]
          %v1893 = vld [vmem:[#allocation2 + $0x1f8] sm:$0xff]
          %v1894 = vld [vmem:[%s3] sm:$0xff]
          %v1895 = vld [vmem:[%s3 + $0x8] sm:$0xff]
          %v1896 = vld [vmem:[%s3 + $0x10] sm:$0xff]
          %v1897 = vld [vmem:[%s3 + $0x18] sm:$0xff]
          %v1898 = vld [vmem:[%s3 + $0x20] sm:$0xff]
          %v1899 = vld [vmem:[%s3 + $0x28] sm:$0xff]
          %v1900 = vld [vmem:[%s3 + $0x30] sm:$0xff]
          %v1901 = vld [vmem:[%s3 + $0x38] sm:$0xff]
          %v1902 = vld [vmem:[%s3 + $0x40] sm:$0xff]
          %v1903 = vld [vmem:[%s3 + $0x48] sm:$0xff]
          %v1904 = vld [vmem:[%s3 + $0x50] sm:$0xff]
          %v1905 = vld [vmem:[%s3 + $0x58] sm:$0xff]
          %v1906 = vld [vmem:[%s3 + $0x60] sm:$0xff]
          %v1907 = vld [vmem:[%s3 + $0x68] sm:$0xff]
          %v1908 = vld [vmem:[%s3 + $0x70] sm:$0xff]
          %v1909 = vld [vmem:[%s3 + $0x78] sm:$0xff]
          %v1910 = vld [vmem:[%s3 + $0x80] sm:$0xff]
          %v1911 = vld [vmem:[%s3 + $0x88] sm:$0xff]
          %v1912 = vld [vmem:[%s3 + $0x90] sm:$0xff]
          %v1913 = vld [vmem:[%s3 + $0x98] sm:$0xff]
          %v1914 = vld [vmem:[%s3 + $0xa0] sm:$0xff]
          %v1915 = vld [vmem:[%s3 + $0xa8] sm:$0xff]
          %v1916 = vld [vmem:[%s3 + $0xb0] sm:$0xff]
          %v1917 = vld [vmem:[%s3 + $0xb8] sm:$0xff]
          %v1918 = vld [vmem:[%s3 + $0xc0] sm:$0xff]
          %v1919 = vld [vmem:[%s3 + $0xc8] sm:$0xff]
          %v1920 = vld [vmem:[%s3 + $0xd0] sm:$0xff]
          %v1921 = vld [vmem:[%s3 + $0xd8] sm:$0xff]
          %v1922 = vld [vmem:[%s3 + $0xe0] sm:$0xff]
          %v1923 = vld [vmem:[%s3 + $0xe8] sm:$0xff]
          %v1924 = vld [vmem:[%s3 + $0xf0] sm:$0xff]
          %v1925 = vld [vmem:[%s3 + $0xf8] sm:$0xff]
          %v1926 = vld [vmem:[%s3 + $0x100] sm:$0xff]
          %v1927 = vld [vmem:[%s3 + $0x108] sm:$0xff]
          %v1928 = vld [vmem:[%s3 + $0x110] sm:$0xff]
          %v1929 = vld [vmem:[%s3 + $0x118] sm:$0xff]
          %v1930 = vld [vmem:[%s3 + $0x120] sm:$0xff]
          %v1931 = vld [vmem:[%s3 + $0x128] sm:$0xff]
          %v1932 = vld [vmem:[%s3 + $0x130] sm:$0xff]
          %v1933 = vld [vmem:[%s3 + $0x138] sm:$0xff]
          %v1934 = vld [vmem:[%s3 + $0x140] sm:$0xff]
          %v1935 = vld [vmem:[%s3 + $0x148] sm:$0xff]
          %v1936 = vld [vmem:[%s3 + $0x150] sm:$0xff]
          %v1937 = vld [vmem:[%s3 + $0x158] sm:$0xff]
          %v1938 = vld [vmem:[%s3 + $0x160] sm:$0xff]
          %v1939 = vld [vmem:[%s3 + $0x168] sm:$0xff]
          %v1940 = vld [vmem:[%s3 + $0x170] sm:$0xff]
          %v1941 = vld [vmem:[%s3 + $0x178] sm:$0xff]
          %v1942 = vld [vmem:[%s3 + $0x180] sm:$0xff]
          %v1943 = vld [vmem:[%s3 + $0x188] sm:$0xff]
          %v1944 = vld [vmem:[%s3 + $0x190] sm:$0xff]
          %v1945 = vld [vmem:[%s3 + $0x198] sm:$0xff]
          %v1946 = vld [vmem:[%s3 + $0x1a0] sm:$0xff]
          %v1947 = vld [vmem:[%s3 + $0x1a8] sm:$0xff]
          %v1948 = vld [vmem:[%s3 + $0x1b0] sm:$0xff]
          %v1949 = vld [vmem:[%s3 + $0x1b8] sm:$0xff]
          %v1950 = vld [vmem:[%s3 + $0x1c0] sm:$0xff]
          %v1951 = vld [vmem:[%s3 + $0x1c8] sm:$0xff]
          %v1952 = vld [vmem:[%s3 + $0x1d0] sm:$0xff]
          %v1953 = vld [vmem:[%s3 + $0x1d8] sm:$0xff]
          %v1954 = vld [vmem:[%s3 + $0x1e0] sm:$0xff]
          %v1955 = vld [vmem:[%s3 + $0x1e8] sm:$0xff]
          %v1956 = vld [vmem:[%s3 + $0x1f0] sm:$0xff]
          %v1957 = vld [vmem:[%s3 + $0x1f8] sm:$0xff]
          %1959 = vset.pattern.permute.xlu0 0
          %1960 = vperm.xlu0 %1959, %v1830
          %v1961 = vpop.permute.xlu0 %1960
          %1964 = vset.pattern.permute.xlu0 0
          %1965 = vperm.xlu0 %1964, %v1831
          %v1966 = vpop.permute.xlu0 %1965
          %1969 = vset.pattern.permute.xlu0 0
          %1970 = vperm.xlu0 %1969, %v1832
          %v1971 = vpop.permute.xlu0 %1970
          %1974 = vset.pattern.permute.xlu0 0
          %1975 = vperm.xlu0 %1974, %v1833
          %v1976 = vpop.permute.xlu0 %1975
          %1979 = vset.pattern.permute.xlu0 0
          %1980 = vperm.xlu0 %1979, %v1834
          %v1981 = vpop.permute.xlu0 %1980
          %1984 = vset.pattern.permute.xlu0 0
          %1985 = vperm.xlu0 %1984, %v1835
          %v1986 = vpop.permute.xlu0 %1985
          %1989 = vset.pattern.permute.xlu0 0
          %1990 = vperm.xlu0 %1989, %v1836
          %v1991 = vpop.permute.xlu0 %1990
          %1994 = vset.pattern.permute.xlu0 0
          %1995 = vperm.xlu0 %1994, %v1837
          %v1996 = vpop.permute.xlu0 %1995
          %1999 = vset.pattern.permute.xlu0 0
          %2000 = vperm.xlu0 %1999, %v1838
          %v2001 = vpop.permute.xlu0 %2000
          %2004 = vset.pattern.permute.xlu0 0
          %2005 = vperm.xlu0 %2004, %v1839
          %v2006 = vpop.permute.xlu0 %2005
          %2009 = vset.pattern.permute.xlu0 0
          %2010 = vperm.xlu0 %2009, %v1840
          %v2011 = vpop.permute.xlu0 %2010
          %2014 = vset.pattern.permute.xlu0 0
          %2015 = vperm.xlu0 %2014, %v1841
          %v2016 = vpop.permute.xlu0 %2015
          %2019 = vset.pattern.permute.xlu0 0
          %2020 = vperm.xlu0 %2019, %v1842
          %v2021 = vpop.permute.xlu0 %2020
          %2024 = vset.pattern.permute.xlu0 0
          %2025 = vperm.xlu0 %2024, %v1843
          %v2026 = vpop.permute.xlu0 %2025
          %2029 = vset.pattern.permute.xlu0 0
          %2030 = vperm.xlu0 %2029, %v1844
          %v2031 = vpop.permute.xlu0 %2030
          %2034 = vset.pattern.permute.xlu0 0
          %2035 = vperm.xlu0 %2034, %v1845
          %v2036 = vpop.permute.xlu0 %2035
          %2039 = vset.pattern.permute.xlu0 0
          %2040 = vperm.xlu0 %2039, %v1846
          %v2041 = vpop.permute.xlu0 %2040
          %2044 = vset.pattern.permute.xlu0 0
          %2045 = vperm.xlu0 %2044, %v1847
          %v2046 = vpop.permute.xlu0 %2045
          %2049 = vset.pattern.permute.xlu0 0
          %2050 = vperm.xlu0 %2049, %v1848
          %v2051 = vpop.permute.xlu0 %2050
          %2054 = vset.pattern.permute.xlu0 0
          %2055 = vperm.xlu0 %2054, %v1849
          %v2056 = vpop.permute.xlu0 %2055
          %2059 = vset.pattern.permute.xlu0 0
          %2060 = vperm.xlu0 %2059, %v1850
          %v2061 = vpop.permute.xlu0 %2060
          %2064 = vset.pattern.permute.xlu0 0
          %2065 = vperm.xlu0 %2064, %v1851
          %v2066 = vpop.permute.xlu0 %2065
          %2069 = vset.pattern.permute.xlu0 0
          %2070 = vperm.xlu0 %2069, %v1852
          %v2071 = vpop.permute.xlu0 %2070
          %2074 = vset.pattern.permute.xlu0 0
          %2075 = vperm.xlu0 %2074, %v1853
          %v2076 = vpop.permute.xlu0 %2075
          %2079 = vset.pattern.permute.xlu0 0
          %2080 = vperm.xlu0 %2079, %v1854
          %v2081 = vpop.permute.xlu0 %2080
          %2084 = vset.pattern.permute.xlu0 0
          %2085 = vperm.xlu0 %2084, %v1855
          %v2086 = vpop.permute.xlu0 %2085
          %2089 = vset.pattern.permute.xlu0 0
          %2090 = vperm.xlu0 %2089, %v1856
          %v2091 = vpop.permute.xlu0 %2090
          %2094 = vset.pattern.permute.xlu0 0
          %2095 = vperm.xlu0 %2094, %v1857
          %v2096 = vpop.permute.xlu0 %2095
          %2099 = vset.pattern.permute.xlu0 0
          %2100 = vperm.xlu0 %2099, %v1858
          %v2101 = vpop.permute.xlu0 %2100
          %2104 = vset.pattern.permute.xlu0 0
          %2105 = vperm.xlu0 %2104, %v1859
          %v2106 = vpop.permute.xlu0 %2105
          %2109 = vset.pattern.permute.xlu0 0
          %2110 = vperm.xlu0 %2109, %v1860
          %v2111 = vpop.permute.xlu0 %2110
          %2114 = vset.pattern.permute.xlu0 0
          %2115 = vperm.xlu0 %2114, %v1861
          %v2116 = vpop.permute.xlu0 %2115
          %2119 = vset.pattern.permute.xlu0 0
          %2120 = vperm.xlu0 %2119, %v1862
          %v2121 = vpop.permute.xlu0 %2120
          %2124 = vset.pattern.permute.xlu0 0
          %2125 = vperm.xlu0 %2124, %v1863
          %v2126 = vpop.permute.xlu0 %2125
          %2129 = vset.pattern.permute.xlu0 0
          %2130 = vperm.xlu0 %2129, %v1864
          %v2131 = vpop.permute.xlu0 %2130
          %2134 = vset.pattern.permute.xlu0 0
          %2135 = vperm.xlu0 %2134, %v1865
          %v2136 = vpop.permute.xlu0 %2135
          %2139 = vset.pattern.permute.xlu0 0
          %2140 = vperm.xlu0 %2139, %v1866
          %v2141 = vpop.permute.xlu0 %2140
          %2144 = vset.pattern.permute.xlu0 0
          %2145 = vperm.xlu0 %2144, %v1867
          %v2146 = vpop.permute.xlu0 %2145
          %2149 = vset.pattern.permute.xlu0 0
          %2150 = vperm.xlu0 %2149, %v1868
          %v2151 = vpop.permute.xlu0 %2150
          %2154 = vset.pattern.permute.xlu0 0
          %2155 = vperm.xlu0 %2154, %v1869
          %v2156 = vpop.permute.xlu0 %2155
          %2159 = vset.pattern.permute.xlu0 0
          %2160 = vperm.xlu0 %2159, %v1870
          %v2161 = vpop.permute.xlu0 %2160
          %2164 = vset.pattern.permute.xlu0 0
          %2165 = vperm.xlu0 %2164, %v1871
          %v2166 = vpop.permute.xlu0 %2165
          %2169 = vset.pattern.permute.xlu0 0
          %2170 = vperm.xlu0 %2169, %v1872
          %v2171 = vpop.permute.xlu0 %2170
          %2174 = vset.pattern.permute.xlu0 0
          %2175 = vperm.xlu0 %2174, %v1873
          %v2176 = vpop.permute.xlu0 %2175
          %2179 = vset.pattern.permute.xlu0 0
          %2180 = vperm.xlu0 %2179, %v1874
          %v2181 = vpop.permute.xlu0 %2180
          %2184 = vset.pattern.permute.xlu0 0
          %2185 = vperm.xlu0 %2184, %v1875
          %v2186 = vpop.permute.xlu0 %2185
          %2189 = vset.pattern.permute.xlu0 0
          %2190 = vperm.xlu0 %2189, %v1876
          %v2191 = vpop.permute.xlu0 %2190
          %2194 = vset.pattern.permute.xlu0 0
          %2195 = vperm.xlu0 %2194, %v1877
          %v2196 = vpop.permute.xlu0 %2195
          %2199 = vset.pattern.permute.xlu0 0
          %2200 = vperm.xlu0 %2199, %v1878
          %v2201 = vpop.permute.xlu0 %2200
          %2204 = vset.pattern.permute.xlu0 0
          %2205 = vperm.xlu0 %2204, %v1879
          %v2206 = vpop.permute.xlu0 %2205
          %2209 = vset.pattern.permute.xlu0 0
          %2210 = vperm.xlu0 %2209, %v1880
          %v2211 = vpop.permute.xlu0 %2210
          %2214 = vset.pattern.permute.xlu0 0
          %2215 = vperm.xlu0 %2214, %v1881
          %v2216 = vpop.permute.xlu0 %2215
          %2219 = vset.pattern.permute.xlu0 0
          %2220 = vperm.xlu0 %2219, %v1882
          %v2221 = vpop.permute.xlu0 %2220
          %2224 = vset.pattern.permute.xlu0 0
          %2225 = vperm.xlu0 %2224, %v1883
          %v2226 = vpop.permute.xlu0 %2225
          %2229 = vset.pattern.permute.xlu0 0
          %2230 = vperm.xlu0 %2229, %v1884
          %v2231 = vpop.permute.xlu0 %2230
          %2234 = vset.pattern.permute.xlu0 0
          %2235 = vperm.xlu0 %2234, %v1885
          %v2236 = vpop.permute.xlu0 %2235
          %2239 = vset.pattern.permute.xlu0 0
          %2240 = vperm.xlu0 %2239, %v1886
          %v2241 = vpop.permute.xlu0 %2240
          %2244 = vset.pattern.permute.xlu0 0
          %2245 = vperm.xlu0 %2244, %v1887
          %v2246 = vpop.permute.xlu0 %2245
          %2249 = vset.pattern.permute.xlu0 0
          %2250 = vperm.xlu0 %2249, %v1888
          %v2251 = vpop.permute.xlu0 %2250
          %2254 = vset.pattern.permute.xlu0 0
          %2255 = vperm.xlu0 %2254, %v1889
          %v2256 = vpop.permute.xlu0 %2255
          %2259 = vset.pattern.permute.xlu0 0
          %2260 = vperm.xlu0 %2259, %v1890
          %v2261 = vpop.permute.xlu0 %2260
          %2264 = vset.pattern.permute.xlu0 0
          %2265 = vperm.xlu0 %2264, %v1891
          %v2266 = vpop.permute.xlu0 %2265
          %2269 = vset.pattern.permute.xlu0 0
          %2270 = vperm.xlu0 %2269, %v1892
          %v2271 = vpop.permute.xlu0 %2270
          %2274 = vset.pattern.permute.xlu0 0
          %2275 = vperm.xlu0 %2274, %v1893
          %v2276 = vpop.permute.xlu0 %2275
          %v2278 = vmul.f32 %v1961, %v1894
          %v2279 = vmul.f32 %v1966, %v1895
          %v2280 = vmul.f32 %v1971, %v1896
          %v2281 = vmul.f32 %v1976, %v1897
          %v2282 = vmul.f32 %v1981, %v1898
          %v2283 = vmul.f32 %v1986, %v1899
          %v2284 = vmul.f32 %v1991, %v1900
          %v2285 = vmul.f32 %v1996, %v1901
          %v2286 = vmul.f32 %v2001, %v1902
          %v2287 = vmul.f32 %v2006, %v1903
          %v2288 = vmul.f32 %v2011, %v1904
          %v2289 = vmul.f32 %v2016, %v1905
          %v2290 = vmul.f32 %v2021, %v1906
          %v2291 = vmul.f32 %v2026, %v1907
          %v2292 = vmul.f32 %v2031, %v1908
          %v2293 = vmul.f32 %v2036, %v1909
          %v2294 = vmul.f32 %v2041, %v1910
          %v2295 = vmul.f32 %v2046, %v1911
          %v2296 = vmul.f32 %v2051, %v1912
          %v2297 = vmul.f32 %v2056, %v1913
          %v2298 = vmul.f32 %v2061, %v1914
          %v2299 = vmul.f32 %v2066, %v1915
          %v2300 = vmul.f32 %v2071, %v1916
          %v2301 = vmul.f32 %v2076, %v1917
          %v2302 = vmul.f32 %v2081, %v1918
          %v2303 = vmul.f32 %v2086, %v1919
          %v2304 = vmul.f32 %v2091, %v1920
          %v2305 = vmul.f32 %v2096, %v1921
          %v2306 = vmul.f32 %v2101, %v1922
          %v2307 = vmul.f32 %v2106, %v1923
          %v2308 = vmul.f32 %v2111, %v1924
          %v2309 = vmul.f32 %v2116, %v1925
          %v2310 = vmul.f32 %v2121, %v1926
          %v2311 = vmul.f32 %v2126, %v1927
          %v2312 = vmul.f32 %v2131, %v1928
          %v2313 = vmul.f32 %v2136, %v1929
          %v2314 = vmul.f32 %v2141, %v1930
          %v2315 = vmul.f32 %v2146, %v1931
          %v2316 = vmul.f32 %v2151, %v1932
          %v2317 = vmul.f32 %v2156, %v1933
          %v2318 = vmul.f32 %v2161, %v1934
          %v2319 = vmul.f32 %v2166, %v1935
          %v2320 = vmul.f32 %v2171, %v1936
          %v2321 = vmul.f32 %v2176, %v1937
          %v2322 = vmul.f32 %v2181, %v1938
          %v2323 = vmul.f32 %v2186, %v1939
          %v2324 = vmul.f32 %v2191, %v1940
          %v2325 = vmul.f32 %v2196, %v1941
          %v2326 = vmul.f32 %v2201, %v1942
          %v2327 = vmul.f32 %v2206, %v1943
          %v2328 = vmul.f32 %v2211, %v1944
          %v2329 = vmul.f32 %v2216, %v1945
          %v2330 = vmul.f32 %v2221, %v1946
          %v2331 = vmul.f32 %v2226, %v1947
          %v2332 = vmul.f32 %v2231, %v1948
          %v2333 = vmul.f32 %v2236, %v1949
          %v2334 = vmul.f32 %v2241, %v1950
          %v2335 = vmul.f32 %v2246, %v1951
          %v2336 = vmul.f32 %v2251, %v1952
          %v2337 = vmul.f32 %v2256, %v1953
          %v2338 = vmul.f32 %v2261, %v1954
          %v2339 = vmul.f32 %v2266, %v1955
          %v2340 = vmul.f32 %v2271, %v1956
          %v2341 = vmul.f32 %v2276, %v1957
          %vm2342 = vcmask 523264
          %v2343 = vsel %vm2342, %v2278, 0.0
          %v2344 = vsel %vm2342, %v2279, 0.0
          %v2345 = vadd.f32 %v2343, %v2344
          %v2346 = vsel %vm2342, %v2280, 0.0
          %v2347 = vadd.f32 %v2345, %v2346
          %v2348 = vsel %vm2342, %v2281, 0.0
          %v2349 = vadd.f32 %v2347, %v2348
          %v2350 = vsel %vm2342, %v2282, 0.0
          %v2351 = vadd.f32 %v2349, %v2350
          %v2352 = vsel %vm2342, %v2283, 0.0
          %v2353 = vadd.f32 %v2351, %v2352
          %v2354 = vsel %vm2342, %v2284, 0.0
          %v2355 = vadd.f32 %v2353, %v2354
          %v2356 = vsel %vm2342, %v2285, 0.0
          %v2357 = vadd.f32 %v2355, %v2356
          %v2358 = vsel %vm2342, %v2286, 0.0
          %v2359 = vadd.f32 %v2357, %v2358
          %v2360 = vsel %vm2342, %v2287, 0.0
          %v2361 = vadd.f32 %v2359, %v2360
          %v2362 = vsel %vm2342, %v2288, 0.0
          %v2363 = vadd.f32 %v2361, %v2362
          %v2364 = vsel %vm2342, %v2289, 0.0
          %v2365 = vadd.f32 %v2363, %v2364
          %v2366 = vsel %vm2342, %v2290, 0.0
          %v2367 = vadd.f32 %v2365, %v2366
          %v2368 = vsel %vm2342, %v2291, 0.0
          %v2369 = vadd.f32 %v2367, %v2368
          %v2370 = vsel %vm2342, %v2292, 0.0
          %v2371 = vadd.f32 %v2369, %v2370
          %v2372 = vsel %vm2342, %v2293, 0.0
          %v2373 = vadd.f32 %v2371, %v2372
          %v2374 = vsel %vm2342, %v2294, 0.0
          %v2375 = vadd.f32 %v2373, %v2374
          %v2376 = vsel %vm2342, %v2295, 0.0
          %v2377 = vadd.f32 %v2375, %v2376
          %v2378 = vsel %vm2342, %v2296, 0.0
          %v2379 = vadd.f32 %v2377, %v2378
          %v2380 = vsel %vm2342, %v2297, 0.0
          %v2381 = vadd.f32 %v2379, %v2380
          %v2382 = vsel %vm2342, %v2298, 0.0
          %v2383 = vadd.f32 %v2381, %v2382
          %v2384 = vsel %vm2342, %v2299, 0.0
          %v2385 = vadd.f32 %v2383, %v2384
          %v2386 = vsel %vm2342, %v2300, 0.0
          %v2387 = vadd.f32 %v2385, %v2386
          %v2388 = vsel %vm2342, %v2301, 0.0
          %v2389 = vadd.f32 %v2387, %v2388
          %v2390 = vsel %vm2342, %v2302, 0.0
          %v2391 = vadd.f32 %v2389, %v2390
          %v2392 = vsel %vm2342, %v2303, 0.0
          %v2393 = vadd.f32 %v2391, %v2392
          %v2394 = vsel %vm2342, %v2304, 0.0
          %v2395 = vadd.f32 %v2393, %v2394
          %v2396 = vsel %vm2342, %v2305, 0.0
          %v2397 = vadd.f32 %v2395, %v2396
          %v2398 = vsel %vm2342, %v2306, 0.0
          %v2399 = vadd.f32 %v2397, %v2398
          %v2400 = vsel %vm2342, %v2307, 0.0
          %v2401 = vadd.f32 %v2399, %v2400
          %v2402 = vsel %vm2342, %v2308, 0.0
          %v2403 = vadd.f32 %v2401, %v2402
          %v2404 = vsel %vm2342, %v2309, 0.0
          %v2405 = vadd.f32 %v2403, %v2404
          %v2406 = vsel %vm2342, %v2310, 0.0
          %v2407 = vadd.f32 %v2405, %v2406
          %v2408 = vsel %vm2342, %v2311, 0.0
          %v2409 = vadd.f32 %v2407, %v2408
          %v2410 = vsel %vm2342, %v2312, 0.0
          %v2411 = vadd.f32 %v2409, %v2410
          %v2412 = vsel %vm2342, %v2313, 0.0
          %v2413 = vadd.f32 %v2411, %v2412
          %v2414 = vsel %vm2342, %v2314, 0.0
          %v2415 = vadd.f32 %v2413, %v2414
          %v2416 = vsel %vm2342, %v2315, 0.0
          %v2417 = vadd.f32 %v2415, %v2416
          %v2418 = vsel %vm2342, %v2316, 0.0
          %v2419 = vadd.f32 %v2417, %v2418
          %v2420 = vsel %vm2342, %v2317, 0.0
          %v2421 = vadd.f32 %v2419, %v2420
          %v2422 = vsel %vm2342, %v2318, 0.0
          %v2423 = vadd.f32 %v2421, %v2422
          %v2424 = vsel %vm2342, %v2319, 0.0
          %v2425 = vadd.f32 %v2423, %v2424
          %v2426 = vsel %vm2342, %v2320, 0.0
          %v2427 = vadd.f32 %v2425, %v2426
          %v2428 = vsel %vm2342, %v2321, 0.0
          %v2429 = vadd.f32 %v2427, %v2428
          %v2430 = vsel %vm2342, %v2322, 0.0
          %v2431 = vadd.f32 %v2429, %v2430
          %v2432 = vsel %vm2342, %v2323, 0.0
          %v2433 = vadd.f32 %v2431, %v2432
          %v2434 = vsel %vm2342, %v2324, 0.0
          %v2435 = vadd.f32 %v2433, %v2434
          %v2436 = vsel %vm2342, %v2325, 0.0
          %v2437 = vadd.f32 %v2435, %v2436
          %v2438 = vsel %vm2342, %v2326, 0.0
          %v2439 = vadd.f32 %v2437, %v2438
          %v2440 = vsel %vm2342, %v2327, 0.0
          %v2441 = vadd.f32 %v2439, %v2440
          %v2442 = vsel %vm2342, %v2328, 0.0
          %v2443 = vadd.f32 %v2441, %v2442
          %v2444 = vsel %vm2342, %v2329, 0.0
          %v2445 = vadd.f32 %v2443, %v2444
          %v2446 = vsel %vm2342, %v2330, 0.0
          %v2447 = vadd.f32 %v2445, %v2446
          %v2448 = vsel %vm2342, %v2331, 0.0
          %v2449 = vadd.f32 %v2447, %v2448
          %v2450 = vsel %vm2342, %v2332, 0.0
          %v2451 = vadd.f32 %v2449, %v2450
          %v2452 = vsel %vm2342, %v2333, 0.0
          %v2453 = vadd.f32 %v2451, %v2452
          %v2454 = vsel %vm2342, %v2334, 0.0
          %v2455 = vadd.f32 %v2453, %v2454
          %v2456 = vsel %vm2342, %v2335, 0.0
          %v2457 = vadd.f32 %v2455, %v2456
          %v2458 = vsel %vm2342, %v2336, 0.0
          %v2459 = vadd.f32 %v2457, %v2458
          %v2460 = vsel %vm2342, %v2337, 0.0
          %v2461 = vadd.f32 %v2459, %v2460
          %v2462 = vsel %vm2342, %v2338, 0.0
          %v2463 = vadd.f32 %v2461, %v2462
          %v2464 = vsel %vm2342, %v2339, 0.0
          %v2465 = vadd.f32 %v2463, %v2464
          %v2466 = vsel %vm2342, %v2340, 0.0
          %v2467 = vadd.f32 %v2465, %v2466
          %v2468 = vsel %vm2342, %v2341, 0.0
          %v2469 = vadd.f32 %v2467, %v2468
          %v2470 = vrot.slane %v2469, 4
          %v2471 = vadd.f32 %v2469, %v2470
          %v2472 = vrot.slane %v2471, 2
          %v2473 = vadd.f32 %v2471, %v2472
          %v2474 = vrot.slane %v2473, 1
          %v2475 = vadd.f32 %v2473, %v2474
          %v2476 = vadd.f32 %v1829, %v2475
          %s2477 = scalar_lea.vmem %s3, 512
          %v2478 = vld [vmem:[%s2477] sm:$0xff]
          %v2479 = vld [vmem:[%s2477 + $0x8] sm:$0xff]
          %v2480 = vld [vmem:[%s2477 + $0x10] sm:$0xff]
          %v2481 = vld [vmem:[%s2477 + $0x18] sm:$0xff]
          %v2482 = vld [vmem:[%s2477 + $0x20] sm:$0xff]
          %v2483 = vld [vmem:[%s2477 + $0x28] sm:$0xff]
          %v2484 = vld [vmem:[%s2477 + $0x30] sm:$0xff]
          %v2485 = vld [vmem:[%s2477 + $0x38] sm:$0xff]
          %v2486 = vld [vmem:[%s2477 + $0x40] sm:$0xff]
          %v2487 = vld [vmem:[%s2477 + $0x48] sm:$0xff]
          %v2488 = vld [vmem:[%s2477 + $0x50] sm:$0xff]
          %v2489 = vld [vmem:[%s2477 + $0x58] sm:$0xff]
          %v2490 = vld [vmem:[%s2477 + $0x60] sm:$0xff]
          %v2491 = vld [vmem:[%s2477 + $0x68] sm:$0xff]
          %v2492 = vld [vmem:[%s2477 + $0x70] sm:$0xff]
          %v2493 = vld [vmem:[%s2477 + $0x78] sm:$0xff]
          %v2494 = vld [vmem:[%s2477 + $0x80] sm:$0xff]
          %v2495 = vld [vmem:[%s2477 + $0x88] sm:$0xff]
          %v2496 = vld [vmem:[%s2477 + $0x90] sm:$0xff]
          %v2497 = vld [vmem:[%s2477 + $0x98] sm:$0xff]
          %v2498 = vld [vmem:[%s2477 + $0xa0] sm:$0xff]
          %v2499 = vld [vmem:[%s2477 + $0xa8] sm:$0xff]
          %v2500 = vld [vmem:[%s2477 + $0xb0] sm:$0xff]
          %v2501 = vld [vmem:[%s2477 + $0xb8] sm:$0xff]
          %v2502 = vld [vmem:[%s2477 + $0xc0] sm:$0xff]
          %v2503 = vld [vmem:[%s2477 + $0xc8] sm:$0xff]
          %v2504 = vld [vmem:[%s2477 + $0xd0] sm:$0xff]
          %v2505 = vld [vmem:[%s2477 + $0xd8] sm:$0xff]
          %v2506 = vld [vmem:[%s2477 + $0xe0] sm:$0xff]
          %v2507 = vld [vmem:[%s2477 + $0xe8] sm:$0xff]
          %v2508 = vld [vmem:[%s2477 + $0xf0] sm:$0xff]
          %v2509 = vld [vmem:[%s2477 + $0xf8] sm:$0xff]
          %v2510 = vld [vmem:[%s2477 + $0x100] sm:$0xff]
          %v2511 = vld [vmem:[%s2477 + $0x108] sm:$0xff]
          %v2512 = vld [vmem:[%s2477 + $0x110] sm:$0xff]
          %v2513 = vld [vmem:[%s2477 + $0x118] sm:$0xff]
          %v2514 = vld [vmem:[%s2477 + $0x120] sm:$0xff]
          %v2515 = vld [vmem:[%s2477 + $0x128] sm:$0xff]
          %v2516 = vld [vmem:[%s2477 + $0x130] sm:$0xff]
          %v2517 = vld [vmem:[%s2477 + $0x138] sm:$0xff]
          %v2518 = vld [vmem:[%s2477 + $0x140] sm:$0xff]
          %v2519 = vld [vmem:[%s2477 + $0x148] sm:$0xff]
          %v2520 = vld [vmem:[%s2477 + $0x150] sm:$0xff]
          %v2521 = vld [vmem:[%s2477 + $0x158] sm:$0xff]
          %v2522 = vld [vmem:[%s2477 + $0x160] sm:$0xff]
          %v2523 = vld [vmem:[%s2477 + $0x168] sm:$0xff]
          %v2524 = vld [vmem:[%s2477 + $0x170] sm:$0xff]
          %v2525 = vld [vmem:[%s2477 + $0x178] sm:$0xff]
          %v2526 = vld [vmem:[%s2477 + $0x180] sm:$0xff]
          %v2527 = vld [vmem:[%s2477 + $0x188] sm:$0xff]
          %v2528 = vld [vmem:[%s2477 + $0x190] sm:$0xff]
          %v2529 = vld [vmem:[%s2477 + $0x198] sm:$0xff]
          %v2530 = vld [vmem:[%s2477 + $0x1a0] sm:$0xff]
          %v2531 = vld [vmem:[%s2477 + $0x1a8] sm:$0xff]
          %v2532 = vld [vmem:[%s2477 + $0x1b0] sm:$0xff]
          %v2533 = vld [vmem:[%s2477 + $0x1b8] sm:$0xff]
          %v2534 = vld [vmem:[%s2477 + $0x1c0] sm:$0xff]
          %v2535 = vld [vmem:[%s2477 + $0x1c8] sm:$0xff]
          %v2536 = vld [vmem:[%s2477 + $0x1d0] sm:$0xff]
          %v2537 = vld [vmem:[%s2477 + $0x1d8] sm:$0xff]
          %v2538 = vld [vmem:[%s2477 + $0x1e0] sm:$0xff]
          %v2539 = vld [vmem:[%s2477 + $0x1e8] sm:$0xff]
          %v2540 = vld [vmem:[%s2477 + $0x1f0] sm:$0xff]
          %v2541 = vld [vmem:[%s2477 + $0x1f8] sm:$0xff]
          %2542 = vset.pattern.permute.xlu0 1
          %2543 = vperm.xlu0 %2542, %v1830
          %v2544 = vpop.permute.xlu0 %2543
          %2546 = vset.pattern.permute.xlu0 1
          %2547 = vperm.xlu0 %2546, %v1831
          %v2548 = vpop.permute.xlu0 %2547
          %2550 = vset.pattern.permute.xlu0 1
          %2551 = vperm.xlu0 %2550, %v1832
          %v2552 = vpop.permute.xlu0 %2551
          %2554 = vset.pattern.permute.xlu0 1
          %2555 = vperm.xlu0 %2554, %v1833
          %v2556 = vpop.permute.xlu0 %2555
          %2558 = vset.pattern.permute.xlu0 1
          %2559 = vperm.xlu0 %2558, %v1834
          %v2560 = vpop.permute.xlu0 %2559
          %2562 = vset.pattern.permute.xlu0 1
          %2563 = vperm.xlu0 %2562, %v1835
          %v2564 = vpop.permute.xlu0 %2563
          %2566 = vset.pattern.permute.xlu0 1
          %2567 = vperm.xlu0 %2566, %v1836
          %v2568 = vpop.permute.xlu0 %2567
          %2570 = vset.pattern.permute.xlu0 1
          %2571 = vperm.xlu0 %2570, %v1837
          %v2572 = vpop.permute.xlu0 %2571
          %2574 = vset.pattern.permute.xlu0 1
          %2575 = vperm.xlu0 %2574, %v1838
          %v2576 = vpop.permute.xlu0 %2575
          %2578 = vset.pattern.permute.xlu0 1
          %2579 = vperm.xlu0 %2578, %v1839
          %v2580 = vpop.permute.xlu0 %2579
          %2582 = vset.pattern.permute.xlu0 1
          %2583 = vperm.xlu0 %2582, %v1840
          %v2584 = vpop.permute.xlu0 %2583
          %2586 = vset.pattern.permute.xlu0 1
          %2587 = vperm.xlu0 %2586, %v1841
          %v2588 = vpop.permute.xlu0 %2587
          %2590 = vset.pattern.permute.xlu0 1
          %2591 = vperm.xlu0 %2590, %v1842
          %v2592 = vpop.permute.xlu0 %2591
          %2594 = vset.pattern.permute.xlu0 1
          %2595 = vperm.xlu0 %2594, %v1843
          %v2596 = vpop.permute.xlu0 %2595
          %2598 = vset.pattern.permute.xlu0 1
          %2599 = vperm.xlu0 %2598, %v1844
          %v2600 = vpop.permute.xlu0 %2599
          %2602 = vset.pattern.permute.xlu0 1
          %2603 = vperm.xlu0 %2602, %v1845
          %v2604 = vpop.permute.xlu0 %2603
          %2606 = vset.pattern.permute.xlu0 1
          %2607 = vperm.xlu0 %2606, %v1846
          %v2608 = vpop.permute.xlu0 %2607
          %2610 = vset.pattern.permute.xlu0 1
          %2611 = vperm.xlu0 %2610, %v1847
          %v2612 = vpop.permute.xlu0 %2611
          %2614 = vset.pattern.permute.xlu0 1
          %2615 = vperm.xlu0 %2614, %v1848
          %v2616 = vpop.permute.xlu0 %2615
          %2618 = vset.pattern.permute.xlu0 1
          %2619 = vperm.xlu0 %2618, %v1849
          %v2620 = vpop.permute.xlu0 %2619
          %2622 = vset.pattern.permute.xlu0 1
          %2623 = vperm.xlu0 %2622, %v1850
          %v2624 = vpop.permute.xlu0 %2623
          %2626 = vset.pattern.permute.xlu0 1
          %2627 = vperm.xlu0 %2626, %v1851
          %v2628 = vpop.permute.xlu0 %2627
          %2630 = vset.pattern.permute.xlu0 1
          %2631 = vperm.xlu0 %2630, %v1852
          %v2632 = vpop.permute.xlu0 %2631
          %2634 = vset.pattern.permute.xlu0 1
          %2635 = vperm.xlu0 %2634, %v1853
          %v2636 = vpop.permute.xlu0 %2635
          %2638 = vset.pattern.permute.xlu0 1
          %2639 = vperm.xlu0 %2638, %v1854
          %v2640 = vpop.permute.xlu0 %2639
          %2642 = vset.pattern.permute.xlu0 1
          %2643 = vperm.xlu0 %2642, %v1855
          %v2644 = vpop.permute.xlu0 %2643
          %2646 = vset.pattern.permute.xlu0 1
          %2647 = vperm.xlu0 %2646, %v1856
          %v2648 = vpop.permute.xlu0 %2647
          %2650 = vset.pattern.permute.xlu0 1
          %2651 = vperm.xlu0 %2650, %v1857
          %v2652 = vpop.permute.xlu0 %2651
          %2654 = vset.pattern.permute.xlu0 1
          %2655 = vperm.xlu0 %2654, %v1858
          %v2656 = vpop.permute.xlu0 %2655
          %2658 = vset.pattern.permute.xlu0 1
          %2659 = vperm.xlu0 %2658, %v1859
          %v2660 = vpop.permute.xlu0 %2659
          %2662 = vset.pattern.permute.xlu0 1
          %2663 = vperm.xlu0 %2662, %v1860
          %v2664 = vpop.permute.xlu0 %2663
          %2666 = vset.pattern.permute.xlu0 1
          %2667 = vperm.xlu0 %2666, %v1861
          %v2668 = vpop.permute.xlu0 %2667
          %2670 = vset.pattern.permute.xlu0 1
          %2671 = vperm.xlu0 %2670, %v1862
          %v2672 = vpop.permute.xlu0 %2671
          %2674 = vset.pattern.permute.xlu0 1
          %2675 = vperm.xlu0 %2674, %v1863
          %v2676 = vpop.permute.xlu0 %2675
          %2678 = vset.pattern.permute.xlu0 1
          %2679 = vperm.xlu0 %2678, %v1864
          %v2680 = vpop.permute.xlu0 %2679
          %2682 = vset.pattern.permute.xlu0 1
          %2683 = vperm.xlu0 %2682, %v1865
          %v2684 = vpop.permute.xlu0 %2683
          %2686 = vset.pattern.permute.xlu0 1
          %2687 = vperm.xlu0 %2686, %v1866
          %v2688 = vpop.permute.xlu0 %2687
          %2690 = vset.pattern.permute.xlu0 1
          %2691 = vperm.xlu0 %2690, %v1867
          %v2692 = vpop.permute.xlu0 %2691
          %2694 = vset.pattern.permute.xlu0 1
          %2695 = vperm.xlu0 %2694, %v1868
          %v2696 = vpop.permute.xlu0 %2695
          %2698 = vset.pattern.permute.xlu0 1
          %2699 = vperm.xlu0 %2698, %v1869
          %v2700 = vpop.permute.xlu0 %2699
          %2702 = vset.pattern.permute.xlu0 1
          %2703 = vperm.xlu0 %2702, %v1870
          %v2704 = vpop.permute.xlu0 %2703
          %2706 = vset.pattern.permute.xlu0 1
          %2707 = vperm.xlu0 %2706, %v1871
          %v2708 = vpop.permute.xlu0 %2707
          %2710 = vset.pattern.permute.xlu0 1
          %2711 = vperm.xlu0 %2710, %v1872
          %v2712 = vpop.permute.xlu0 %2711
          %2714 = vset.pattern.permute.xlu0 1
          %2715 = vperm.xlu0 %2714, %v1873
          %v2716 = vpop.permute.xlu0 %2715
          %2718 = vset.pattern.permute.xlu0 1
          %2719 = vperm.xlu0 %2718, %v1874
          %v2720 = vpop.permute.xlu0 %2719
          %2722 = vset.pattern.permute.xlu0 1
          %2723 = vperm.xlu0 %2722, %v1875
          %v2724 = vpop.permute.xlu0 %2723
          %2726 = vset.pattern.permute.xlu0 1
          %2727 = vperm.xlu0 %2726, %v1876
          %v2728 = vpop.permute.xlu0 %2727
          %2730 = vset.pattern.permute.xlu0 1
          %2731 = vperm.xlu0 %2730, %v1877
          %v2732 = vpop.permute.xlu0 %2731
          %2734 = vset.pattern.permute.xlu0 1
          %2735 = vperm.xlu0 %2734, %v1878
          %v2736 = vpop.permute.xlu0 %2735
          %2738 = vset.pattern.permute.xlu0 1
          %2739 = vperm.xlu0 %2738, %v1879
          %v2740 = vpop.permute.xlu0 %2739
          %2742 = vset.pattern.permute.xlu0 1
          %2743 = vperm.xlu0 %2742, %v1880
          %v2744 = vpop.permute.xlu0 %2743
          %2746 = vset.pattern.permute.xlu0 1
          %2747 = vperm.xlu0 %2746, %v1881
          %v2748 = vpop.permute.xlu0 %2747
          %2750 = vset.pattern.permute.xlu0 1
          %2751 = vperm.xlu0 %2750, %v1882
          %v2752 = vpop.permute.xlu0 %2751
          %2754 = vset.pattern.permute.xlu0 1
          %2755 = vperm.xlu0 %2754, %v1883
          %v2756 = vpop.permute.xlu0 %2755
          %2758 = vset.pattern.permute.xlu0 1
          %2759 = vperm.xlu0 %2758, %v1884
          %v2760 = vpop.permute.xlu0 %2759
          %2762 = vset.pattern.permute.xlu0 1
          %2763 = vperm.xlu0 %2762, %v1885
          %v2764 = vpop.permute.xlu0 %2763
          %2766 = vset.pattern.permute.xlu0 1
          %2767 = vperm.xlu0 %2766, %v1886
          %v2768 = vpop.permute.xlu0 %2767
          %2770 = vset.pattern.permute.xlu0 1
          %2771 = vperm.xlu0 %2770, %v1887
          %v2772 = vpop.permute.xlu0 %2771
          %2774 = vset.pattern.permute.xlu0 1
          %2775 = vperm.xlu0 %2774, %v1888
          %v2776 = vpop.permute.xlu0 %2775
          %2778 = vset.pattern.permute.xlu0 1
          %2779 = vperm.xlu0 %2778, %v1889
          %v2780 = vpop.permute.xlu0 %2779
          %2782 = vset.pattern.permute.xlu0 1
          %2783 = vperm.xlu0 %2782, %v1890
          %v2784 = vpop.permute.xlu0 %2783
          %2786 = vset.pattern.permute.xlu0 1
          %2787 = vperm.xlu0 %2786, %v1891
          %v2788 = vpop.permute.xlu0 %2787
          %2790 = vset.pattern.permute.xlu0 1
          %2791 = vperm.xlu0 %2790, %v1892
          %v2792 = vpop.permute.xlu0 %2791
          %2794 = vset.pattern.permute.xlu0 1
          %2795 = vperm.xlu0 %2794, %v1893
          %v2796 = vpop.permute.xlu0 %2795
          %v2798 = vmul.f32 %v2544, %v2478
          %v2799 = vmul.f32 %v2548, %v2479
          %v2800 = vmul.f32 %v2552, %v2480
          %v2801 = vmul.f32 %v2556, %v2481
          %v2802 = vmul.f32 %v2560, %v2482
          %v2803 = vmul.f32 %v2564, %v2483
          %v2804 = vmul.f32 %v2568, %v2484
          %v2805 = vmul.f32 %v2572, %v2485
          %v2806 = vmul.f32 %v2576, %v2486
          %v2807 = vmul.f32 %v2580, %v2487
          %v2808 = vmul.f32 %v2584, %v2488
          %v2809 = vmul.f32 %v2588, %v2489
          %v2810 = vmul.f32 %v2592, %v2490
          %v2811 = vmul.f32 %v2596, %v2491
          %v2812 = vmul.f32 %v2600, %v2492
          %v2813 = vmul.f32 %v2604, %v2493
          %v2814 = vmul.f32 %v2608, %v2494
          %v2815 = vmul.f32 %v2612, %v2495
          %v2816 = vmul.f32 %v2616, %v2496
          %v2817 = vmul.f32 %v2620, %v2497
          %v2818 = vmul.f32 %v2624, %v2498
          %v2819 = vmul.f32 %v2628, %v2499
          %v2820 = vmul.f32 %v2632, %v2500
          %v2821 = vmul.f32 %v2636, %v2501
          %v2822 = vmul.f32 %v2640, %v2502
          %v2823 = vmul.f32 %v2644, %v2503
          %v2824 = vmul.f32 %v2648, %v2504
          %v2825 = vmul.f32 %v2652, %v2505
          %v2826 = vmul.f32 %v2656, %v2506
          %v2827 = vmul.f32 %v2660, %v2507
          %v2828 = vmul.f32 %v2664, %v2508
          %v2829 = vmul.f32 %v2668, %v2509
          %v2830 = vmul.f32 %v2672, %v2510
          %v2831 = vmul.f32 %v2676, %v2511
          %v2832 = vmul.f32 %v2680, %v2512
          %v2833 = vmul.f32 %v2684, %v2513
          %v2834 = vmul.f32 %v2688, %v2514
          %v2835 = vmul.f32 %v2692, %v2515
          %v2836 = vmul.f32 %v2696, %v2516
          %v2837 = vmul.f32 %v2700, %v2517
          %v2838 = vmul.f32 %v2704, %v2518
          %v2839 = vmul.f32 %v2708, %v2519
          %v2840 = vmul.f32 %v2712, %v2520
          %v2841 = vmul.f32 %v2716, %v2521
          %v2842 = vmul.f32 %v2720, %v2522
          %v2843 = vmul.f32 %v2724, %v2523
          %v2844 = vmul.f32 %v2728, %v2524
          %v2845 = vmul.f32 %v2732, %v2525
          %v2846 = vmul.f32 %v2736, %v2526
          %v2847 = vmul.f32 %v2740, %v2527
          %v2848 = vmul.f32 %v2744, %v2528
          %v2849 = vmul.f32 %v2748, %v2529
          %v2850 = vmul.f32 %v2752, %v2530
          %v2851 = vmul.f32 %v2756, %v2531
          %v2852 = vmul.f32 %v2760, %v2532
          %v2853 = vmul.f32 %v2764, %v2533
          %v2854 = vmul.f32 %v2768, %v2534
          %v2855 = vmul.f32 %v2772, %v2535
          %v2856 = vmul.f32 %v2776, %v2536
          %v2857 = vmul.f32 %v2780, %v2537
          %v2858 = vmul.f32 %v2784, %v2538
          %v2859 = vmul.f32 %v2788, %v2539
          %v2860 = vmul.f32 %v2792, %v2540
          %v2861 = vmul.f32 %v2796, %v2541
          %v2862 = vsel %vm2342, %v2798, 0.0
          %v2863 = vsel %vm2342, %v2799, 0.0
          %v2864 = vadd.f32 %v2862, %v2863
          %v2865 = vsel %vm2342, %v2800, 0.0
          %v2866 = vadd.f32 %v2864, %v2865
          %v2867 = vsel %vm2342, %v2801, 0.0
          %v2868 = vadd.f32 %v2866, %v2867
          %v2869 = vsel %vm2342, %v2802, 0.0
          %v2870 = vadd.f32 %v2868, %v2869
          %v2871 = vsel %vm2342, %v2803, 0.0
          %v2872 = vadd.f32 %v2870, %v2871
          %v2873 = vsel %vm2342, %v2804, 0.0
          %v2874 = vadd.f32 %v2872, %v2873
          %v2875 = vsel %vm2342, %v2805, 0.0
          %v2876 = vadd.f32 %v2874, %v2875
          %v2877 = vsel %vm2342, %v2806, 0.0
          %v2878 = vadd.f32 %v2876, %v2877
          %v2879 = vsel %vm2342, %v2807, 0.0
          %v2880 = vadd.f32 %v2878, %v2879
          %v2881 = vsel %vm2342, %v2808, 0.0
          %v2882 = vadd.f32 %v2880, %v2881
          %v2883 = vsel %vm2342, %v2809, 0.0
          %v2884 = vadd.f32 %v2882, %v2883
          %v2885 = vsel %vm2342, %v2810, 0.0
          %v2886 = vadd.f32 %v2884, %v2885
          %v2887 = vsel %vm2342, %v2811, 0.0
          %v2888 = vadd.f32 %v2886, %v2887
          %v2889 = vsel %vm2342, %v2812, 0.0
          %v2890 = vadd.f32 %v2888, %v2889
          %v2891 = vsel %vm2342, %v2813, 0.0
          %v2892 = vadd.f32 %v2890, %v2891
          %v2893 = vsel %vm2342, %v2814, 0.0
          %v2894 = vadd.f32 %v2892, %v2893
          %v2895 = vsel %vm2342, %v2815, 0.0
          %v2896 = vadd.f32 %v2894, %v2895
          %v2897 = vsel %vm2342, %v2816, 0.0
          %v2898 = vadd.f32 %v2896, %v2897
          %v2899 = vsel %vm2342, %v2817, 0.0
          %v2900 = vadd.f32 %v2898, %v2899
          %v2901 = vsel %vm2342, %v2818, 0.0
          %v2902 = vadd.f32 %v2900, %v2901
          %v2903 = vsel %vm2342, %v2819, 0.0
          %v2904 = vadd.f32 %v2902, %v2903
          %v2905 = vsel %vm2342, %v2820, 0.0
          %v2906 = vadd.f32 %v2904, %v2905
          %v2907 = vsel %vm2342, %v2821, 0.0
          %v2908 = vadd.f32 %v2906, %v2907
          %v2909 = vsel %vm2342, %v2822, 0.0
          %v2910 = vadd.f32 %v2908, %v2909
          %v2911 = vsel %vm2342, %v2823, 0.0
          %v2912 = vadd.f32 %v2910, %v2911
          %v2913 = vsel %vm2342, %v2824, 0.0
          %v2914 = vadd.f32 %v2912, %v2913
          %v2915 = vsel %vm2342, %v2825, 0.0
          %v2916 = vadd.f32 %v2914, %v2915
          %v2917 = vsel %vm2342, %v2826, 0.0
          %v2918 = vadd.f32 %v2916, %v2917
          %v2919 = vsel %vm2342, %v2827, 0.0
          %v2920 = vadd.f32 %v2918, %v2919
          %v2921 = vsel %vm2342, %v2828, 0.0
          %v2922 = vadd.f32 %v2920, %v2921
          %v2923 = vsel %vm2342, %v2829, 0.0
          %v2924 = vadd.f32 %v2922, %v2923
          %v2925 = vsel %vm2342, %v2830, 0.0
          %v2926 = vadd.f32 %v2924, %v2925
          %v2927 = vsel %vm2342, %v2831, 0.0
          %v2928 = vadd.f32 %v2926, %v2927
          %v2929 = vsel %vm2342, %v2832, 0.0
          %v2930 = vadd.f32 %v2928, %v2929
          %v2931 = vsel %vm2342, %v2833, 0.0
          %v2932 = vadd.f32 %v2930, %v2931
          %v2933 = vsel %vm2342, %v2834, 0.0
          %v2934 = vadd.f32 %v2932, %v2933
          %v2935 = vsel %vm2342, %v2835, 0.0
          %v2936 = vadd.f32 %v2934, %v2935
          %v2937 = vsel %vm2342, %v2836, 0.0
          %v2938 = vadd.f32 %v2936, %v2937
          %v2939 = vsel %vm2342, %v2837, 0.0
          %v2940 = vadd.f32 %v2938, %v2939
          %v2941 = vsel %vm2342, %v2838, 0.0
          %v2942 = vadd.f32 %v2940, %v2941
          %v2943 = vsel %vm2342, %v2839, 0.0
          %v2944 = vadd.f32 %v2942, %v2943
          %v2945 = vsel %vm2342, %v2840, 0.0
          %v2946 = vadd.f32 %v2944, %v2945
          %v2947 = vsel %vm2342, %v2841, 0.0
          %v2948 = vadd.f32 %v2946, %v2947
          %v2949 = vsel %vm2342, %v2842, 0.0
          %v2950 = vadd.f32 %v2948, %v2949
          %v2951 = vsel %vm2342, %v2843, 0.0
          %v2952 = vadd.f32 %v2950, %v2951
          %v2953 = vsel %vm2342, %v2844, 0.0
          %v2954 = vadd.f32 %v2952, %v2953
          %v2955 = vsel %vm2342, %v2845, 0.0
          %v2956 = vadd.f32 %v2954, %v2955
          %v2957 = vsel %vm2342, %v2846, 0.0
          %v2958 = vadd.f32 %v2956, %v2957
          %v2959 = vsel %vm2342, %v2847, 0.0
          %v2960 = vadd.f32 %v2958, %v2959
          %v2961 = vsel %vm2342, %v2848, 0.0
          %v2962 = vadd.f32 %v2960, %v2961
          %v2963 = vsel %vm2342, %v2849, 0.0
          %v2964 = vadd.f32 %v2962, %v2963
          %v2965 = vsel %vm2342, %v2850, 0.0
          %v2966 = vadd.f32 %v2964, %v2965
          %v2967 = vsel %vm2342, %v2851, 0.0
          %v2968 = vadd.f32 %v2966, %v2967
          %v2969 = vsel %vm2342, %v2852, 0.0
          %v2970 = vadd.f32 %v2968, %v2969
          %v2971 = vsel %vm2342, %v2853, 0.0
          %v2972 = vadd.f32 %v2970, %v2971
          %v2973 = vsel %vm2342, %v2854, 0.0
          %v2974 = vadd.f32 %v2972, %v2973
          %v2975 = vsel %vm2342, %v2855, 0.0
          %v2976 = vadd.f32 %v2974, %v2975
          %v2977 = vsel %vm2342, %v2856, 0.0
          %v2978 = vadd.f32 %v2976, %v2977
          %v2979 = vsel %vm2342, %v2857, 0.0
          %v2980 = vadd.f32 %v2978, %v2979
          %v2981 = vsel %vm2342, %v2858, 0.0
          %v2982 = vadd.f32 %v2980, %v2981
          %v2983 = vsel %vm2342, %v2859, 0.0
          %v2984 = vadd.f32 %v2982, %v2983
          %v2985 = vsel %vm2342, %v2860, 0.0
          %v2986 = vadd.f32 %v2984, %v2985
          %v2987 = vsel %vm2342, %v2861, 0.0
          %v2988 = vadd.f32 %v2986, %v2987
          %v2989 = vrot.slane %v2988, 4
          %v2990 = vadd.f32 %v2988, %v2989
          %v2991 = vrot.slane %v2990, 2
          %v2992 = vadd.f32 %v2990, %v2991
          %v2993 = vrot.slane %v2992, 1
          %v2994 = vadd.f32 %v2992, %v2993
          %v2995 = vadd.f32 %v2476, %v2994
          %s2996 = scalar_lea.vmem %s3, 1024
          %v2997 = vld [vmem:[%s2996] sm:$0xff]
          %v2998 = vld [vmem:[%s2996 + $0x8] sm:$0xff]
          %v2999 = vld [vmem:[%s2996 + $0x10] sm:$0xff]
          %v3000 = vld [vmem:[%s2996 + $0x18] sm:$0xff]
          %v3001 = vld [vmem:[%s2996 + $0x20] sm:$0xff]
          %v3002 = vld [vmem:[%s2996 + $0x28] sm:$0xff]
          %v3003 = vld [vmem:[%s2996 + $0x30] sm:$0xff]
          %v3004 = vld [vmem:[%s2996 + $0x38] sm:$0xff]
          %v3005 = vld [vmem:[%s2996 + $0x40] sm:$0xff]
          %v3006 = vld [vmem:[%s2996 + $0x48] sm:$0xff]
          %v3007 = vld [vmem:[%s2996 + $0x50] sm:$0xff]
          %v3008 = vld [vmem:[%s2996 + $0x58] sm:$0xff]
          %v3009 = vld [vmem:[%s2996 + $0x60] sm:$0xff]
          %v3010 = vld [vmem:[%s2996 + $0x68] sm:$0xff]
          %v3011 = vld [vmem:[%s2996 + $0x70] sm:$0xff]
          %v3012 = vld [vmem:[%s2996 + $0x78] sm:$0xff]
          %v3013 = vld [vmem:[%s2996 + $0x80] sm:$0xff]
          %v3014 = vld [vmem:[%s2996 + $0x88] sm:$0xff]
          %v3015 = vld [vmem:[%s2996 + $0x90] sm:$0xff]
          %v3016 = vld [vmem:[%s2996 + $0x98] sm:$0xff]
          %v3017 = vld [vmem:[%s2996 + $0xa0] sm:$0xff]
          %v3018 = vld [vmem:[%s2996 + $0xa8] sm:$0xff]
          %v3019 = vld [vmem:[%s2996 + $0xb0] sm:$0xff]
          %v3020 = vld [vmem:[%s2996 + $0xb8] sm:$0xff]
          %v3021 = vld [vmem:[%s2996 + $0xc0] sm:$0xff]
          %v3022 = vld [vmem:[%s2996 + $0xc8] sm:$0xff]
          %v3023 = vld [vmem:[%s2996 + $0xd0] sm:$0xff]
          %v3024 = vld [vmem:[%s2996 + $0xd8] sm:$0xff]
          %v3025 = vld [vmem:[%s2996 + $0xe0] sm:$0xff]
          %v3026 = vld [vmem:[%s2996 + $0xe8] sm:$0xff]
          %v3027 = vld [vmem:[%s2996 + $0xf0] sm:$0xff]
          %v3028 = vld [vmem:[%s2996 + $0xf8] sm:$0xff]
          %v3029 = vld [vmem:[%s2996 + $0x100] sm:$0xff]
          %v3030 = vld [vmem:[%s2996 + $0x108] sm:$0xff]
          %v3031 = vld [vmem:[%s2996 + $0x110] sm:$0xff]
          %v3032 = vld [vmem:[%s2996 + $0x118] sm:$0xff]
          %v3033 = vld [vmem:[%s2996 + $0x120] sm:$0xff]
          %v3034 = vld [vmem:[%s2996 + $0x128] sm:$0xff]
          %v3035 = vld [vmem:[%s2996 + $0x130] sm:$0xff]
          %v3036 = vld [vmem:[%s2996 + $0x138] sm:$0xff]
          %v3037 = vld [vmem:[%s2996 + $0x140] sm:$0xff]
          %v3038 = vld [vmem:[%s2996 + $0x148] sm:$0xff]
          %v3039 = vld [vmem:[%s2996 + $0x150] sm:$0xff]
          %v3040 = vld [vmem:[%s2996 + $0x158] sm:$0xff]
          %v3041 = vld [vmem:[%s2996 + $0x160] sm:$0xff]
          %v3042 = vld [vmem:[%s2996 + $0x168] sm:$0xff]
          %v3043 = vld [vmem:[%s2996 + $0x170] sm:$0xff]
          %v3044 = vld [vmem:[%s2996 + $0x178] sm:$0xff]
          %v3045 = vld [vmem:[%s2996 + $0x180] sm:$0xff]
          %v3046 = vld [vmem:[%s2996 + $0x188] sm:$0xff]
          %v3047 = vld [vmem:[%s2996 + $0x190] sm:$0xff]
          %v3048 = vld [vmem:[%s2996 + $0x198] sm:$0xff]
          %v3049 = vld [vmem:[%s2996 + $0x1a0] sm:$0xff]
          %v3050 = vld [vmem:[%s2996 + $0x1a8] sm:$0xff]
          %v3051 = vld [vmem:[%s2996 + $0x1b0] sm:$0xff]
          %v3052 = vld [vmem:[%s2996 + $0x1b8] sm:$0xff]
          %v3053 = vld [vmem:[%s2996 + $0x1c0] sm:$0xff]
          %v3054 = vld [vmem:[%s2996 + $0x1c8] sm:$0xff]
          %v3055 = vld [vmem:[%s2996 + $0x1d0] sm:$0xff]
          %v3056 = vld [vmem:[%s2996 + $0x1d8] sm:$0xff]
          %v3057 = vld [vmem:[%s2996 + $0x1e0] sm:$0xff]
          %v3058 = vld [vmem:[%s2996 + $0x1e8] sm:$0xff]
          %v3059 = vld [vmem:[%s2996 + $0x1f0] sm:$0xff]
          %v3060 = vld [vmem:[%s2996 + $0x1f8] sm:$0xff]
          %3061 = vset.pattern.permute.xlu0 2
          %3062 = vperm.xlu0 %3061, %v1830
          %v3063 = vpop.permute.xlu0 %3062
          %3065 = vset.pattern.permute.xlu0 2
          %3066 = vperm.xlu0 %3065, %v1831
          %v3067 = vpop.permute.xlu0 %3066
          %3069 = vset.pattern.permute.xlu0 2
          %3070 = vperm.xlu0 %3069, %v1832
          %v3071 = vpop.permute.xlu0 %3070
          %3073 = vset.pattern.permute.xlu0 2
          %3074 = vperm.xlu0 %3073, %v1833
          %v3075 = vpop.permute.xlu0 %3074
          %3077 = vset.pattern.permute.xlu0 2
          %3078 = vperm.xlu0 %3077, %v1834
          %v3079 = vpop.permute.xlu0 %3078
          %3081 = vset.pattern.permute.xlu0 2
          %3082 = vperm.xlu0 %3081, %v1835
          %v3083 = vpop.permute.xlu0 %3082
          %3085 = vset.pattern.permute.xlu0 2
          %3086 = vperm.xlu0 %3085, %v1836
          %v3087 = vpop.permute.xlu0 %3086
          %3089 = vset.pattern.permute.xlu0 2
          %3090 = vperm.xlu0 %3089, %v1837
          %v3091 = vpop.permute.xlu0 %3090
          %3093 = vset.pattern.permute.xlu0 2
          %3094 = vperm.xlu0 %3093, %v1838
          %v3095 = vpop.permute.xlu0 %3094
          %3097 = vset.pattern.permute.xlu0 2
          %3098 = vperm.xlu0 %3097, %v1839
          %v3099 = vpop.permute.xlu0 %3098
          %3101 = vset.pattern.permute.xlu0 2
          %3102 = vperm.xlu0 %3101, %v1840
          %v3103 = vpop.permute.xlu0 %3102
          %3105 = vset.pattern.permute.xlu0 2
          %3106 = vperm.xlu0 %3105, %v1841
          %v3107 = vpop.permute.xlu0 %3106
          %3109 = vset.pattern.permute.xlu0 2
          %3110 = vperm.xlu0 %3109, %v1842
          %v3111 = vpop.permute.xlu0 %3110
          %3113 = vset.pattern.permute.xlu0 2
          %3114 = vperm.xlu0 %3113, %v1843
          %v3115 = vpop.permute.xlu0 %3114
          %3117 = vset.pattern.permute.xlu0 2
          %3118 = vperm.xlu0 %3117, %v1844
          %v3119 = vpop.permute.xlu0 %3118
          %3121 = vset.pattern.permute.xlu0 2
          %3122 = vperm.xlu0 %3121, %v1845
          %v3123 = vpop.permute.xlu0 %3122
          %3125 = vset.pattern.permute.xlu0 2
          %3126 = vperm.xlu0 %3125, %v1846
          %v3127 = vpop.permute.xlu0 %3126
          %3129 = vset.pattern.permute.xlu0 2
          %3130 = vperm.xlu0 %3129, %v1847
          %v3131 = vpop.permute.xlu0 %3130
          %3133 = vset.pattern.permute.xlu0 2
          %3134 = vperm.xlu0 %3133, %v1848
          %v3135 = vpop.permute.xlu0 %3134
          %3137 = vset.pattern.permute.xlu0 2
          %3138 = vperm.xlu0 %3137, %v1849
          %v3139 = vpop.permute.xlu0 %3138
          %3141 = vset.pattern.permute.xlu0 2
          %3142 = vperm.xlu0 %3141, %v1850
          %v3143 = vpop.permute.xlu0 %3142
          %3145 = vset.pattern.permute.xlu0 2
          %3146 = vperm.xlu0 %3145, %v1851
          %v3147 = vpop.permute.xlu0 %3146
          %3149 = vset.pattern.permute.xlu0 2
          %3150 = vperm.xlu0 %3149, %v1852
          %v3151 = vpop.permute.xlu0 %3150
          %3153 = vset.pattern.permute.xlu0 2
          %3154 = vperm.xlu0 %3153, %v1853
          %v3155 = vpop.permute.xlu0 %3154
          %3157 = vset.pattern.permute.xlu0 2
          %3158 = vperm.xlu0 %3157, %v1854
          %v3159 = vpop.permute.xlu0 %3158
          %3161 = vset.pattern.permute.xlu0 2
          %3162 = vperm.xlu0 %3161, %v1855
          %v3163 = vpop.permute.xlu0 %3162
          %3165 = vset.pattern.permute.xlu0 2
          %3166 = vperm.xlu0 %3165, %v1856
          %v3167 = vpop.permute.xlu0 %3166
          %3169 = vset.pattern.permute.xlu0 2
          %3170 = vperm.xlu0 %3169, %v1857
          %v3171 = vpop.permute.xlu0 %3170
          %3173 = vset.pattern.permute.xlu0 2
          %3174 = vperm.xlu0 %3173, %v1858
          %v3175 = vpop.permute.xlu0 %3174
          %3177 = vset.pattern.permute.xlu0 2
          %3178 = vperm.xlu0 %3177, %v1859
          %v3179 = vpop.permute.xlu0 %3178
          %3181 = vset.pattern.permute.xlu0 2
          %3182 = vperm.xlu0 %3181, %v1860
          %v3183 = vpop.permute.xlu0 %3182
          %3185 = vset.pattern.permute.xlu0 2
          %3186 = vperm.xlu0 %3185, %v1861
          %v3187 = vpop.permute.xlu0 %3186
          %3189 = vset.pattern.permute.xlu0 2
          %3190 = vperm.xlu0 %3189, %v1862
          %v3191 = vpop.permute.xlu0 %3190
          %3193 = vset.pattern.permute.xlu0 2
          %3194 = vperm.xlu0 %3193, %v1863
          %v3195 = vpop.permute.xlu0 %3194
          %3197 = vset.pattern.permute.xlu0 2
          %3198 = vperm.xlu0 %3197, %v1864
          %v3199 = vpop.permute.xlu0 %3198
          %3201 = vset.pattern.permute.xlu0 2
          %3202 = vperm.xlu0 %3201, %v1865
          %v3203 = vpop.permute.xlu0 %3202
          %3205 = vset.pattern.permute.xlu0 2
          %3206 = vperm.xlu0 %3205, %v1866
          %v3207 = vpop.permute.xlu0 %3206
          %3209 = vset.pattern.permute.xlu0 2
          %3210 = vperm.xlu0 %3209, %v1867
          %v3211 = vpop.permute.xlu0 %3210
          %3213 = vset.pattern.permute.xlu0 2
          %3214 = vperm.xlu0 %3213, %v1868
          %v3215 = vpop.permute.xlu0 %3214
          %3217 = vset.pattern.permute.xlu0 2
          %3218 = vperm.xlu0 %3217, %v1869
          %v3219 = vpop.permute.xlu0 %3218
          %3221 = vset.pattern.permute.xlu0 2
          %3222 = vperm.xlu0 %3221, %v1870
          %v3223 = vpop.permute.xlu0 %3222
          %3225 = vset.pattern.permute.xlu0 2
          %3226 = vperm.xlu0 %3225, %v1871
          %v3227 = vpop.permute.xlu0 %3226
          %3229 = vset.pattern.permute.xlu0 2
          %3230 = vperm.xlu0 %3229, %v1872
          %v3231 = vpop.permute.xlu0 %3230
          %3233 = vset.pattern.permute.xlu0 2
          %3234 = vperm.xlu0 %3233, %v1873
          %v3235 = vpop.permute.xlu0 %3234
          %3237 = vset.pattern.permute.xlu0 2
          %3238 = vperm.xlu0 %3237, %v1874
          %v3239 = vpop.permute.xlu0 %3238
          %3241 = vset.pattern.permute.xlu0 2
          %3242 = vperm.xlu0 %3241, %v1875
          %v3243 = vpop.permute.xlu0 %3242
          %3245 = vset.pattern.permute.xlu0 2
          %3246 = vperm.xlu0 %3245, %v1876
          %v3247 = vpop.permute.xlu0 %3246
          %3249 = vset.pattern.permute.xlu0 2
          %3250 = vperm.xlu0 %3249, %v1877
          %v3251 = vpop.permute.xlu0 %3250
          %3253 = vset.pattern.permute.xlu0 2
          %3254 = vperm.xlu0 %3253, %v1878
          %v3255 = vpop.permute.xlu0 %3254
          %3257 = vset.pattern.permute.xlu0 2
          %3258 = vperm.xlu0 %3257, %v1879
          %v3259 = vpop.permute.xlu0 %3258
          %3261 = vset.pattern.permute.xlu0 2
          %3262 = vperm.xlu0 %3261, %v1880
          %v3263 = vpop.permute.xlu0 %3262
          %3265 = vset.pattern.permute.xlu0 2
          %3266 = vperm.xlu0 %3265, %v1881
          %v3267 = vpop.permute.xlu0 %3266
          %3269 = vset.pattern.permute.xlu0 2
          %3270 = vperm.xlu0 %3269, %v1882
          %v3271 = vpop.permute.xlu0 %3270
          %3273 = vset.pattern.permute.xlu0 2
          %3274 = vperm.xlu0 %3273, %v1883
          %v3275 = vpop.permute.xlu0 %3274
          %3277 = vset.pattern.permute.xlu0 2
          %3278 = vperm.xlu0 %3277, %v1884
          %v3279 = vpop.permute.xlu0 %3278
          %3281 = vset.pattern.permute.xlu0 2
          %3282 = vperm.xlu0 %3281, %v1885
          %v3283 = vpop.permute.xlu0 %3282
          %3285 = vset.pattern.permute.xlu0 2
          %3286 = vperm.xlu0 %3285, %v1886
          %v3287 = vpop.permute.xlu0 %3286
          %3289 = vset.pattern.permute.xlu0 2
          %3290 = vperm.xlu0 %3289, %v1887
          %v3291 = vpop.permute.xlu0 %3290
          %3293 = vset.pattern.permute.xlu0 2
          %3294 = vperm.xlu0 %3293, %v1888
          %v3295 = vpop.permute.xlu0 %3294
          %3297 = vset.pattern.permute.xlu0 2
          %3298 = vperm.xlu0 %3297, %v1889
          %v3299 = vpop.permute.xlu0 %3298
          %3301 = vset.pattern.permute.xlu0 2
          %3302 = vperm.xlu0 %3301, %v1890
          %v3303 = vpop.permute.xlu0 %3302
          %3305 = vset.pattern.permute.xlu0 2
          %3306 = vperm.xlu0 %3305, %v1891
          %v3307 = vpop.permute.xlu0 %3306
          %3309 = vset.pattern.permute.xlu0 2
          %3310 = vperm.xlu0 %3309, %v1892
          %v3311 = vpop.permute.xlu0 %3310
          %3313 = vset.pattern.permute.xlu0 2
          %3314 = vperm.xlu0 %3313, %v1893
          %v3315 = vpop.permute.xlu0 %3314
          %v3317 = vmul.f32 %v3063, %v2997
          %v3318 = vmul.f32 %v3067, %v2998
          %v3319 = vmul.f32 %v3071, %v2999
          %v3320 = vmul.f32 %v3075, %v3000
          %v3321 = vmul.f32 %v3079, %v3001
          %v3322 = vmul.f32 %v3083, %v3002
          %v3323 = vmul.f32 %v3087, %v3003
          %v3324 = vmul.f32 %v3091, %v3004
          %v3325 = vmul.f32 %v3095, %v3005
          %v3326 = vmul.f32 %v3099, %v3006
          %v3327 = vmul.f32 %v3103, %v3007
          %v3328 = vmul.f32 %v3107, %v3008
          %v3329 = vmul.f32 %v3111, %v3009
          %v3330 = vmul.f32 %v3115, %v3010
          %v3331 = vmul.f32 %v3119, %v3011
          %v3332 = vmul.f32 %v3123, %v3012
          %v3333 = vmul.f32 %v3127, %v3013
          %v3334 = vmul.f32 %v3131, %v3014
          %v3335 = vmul.f32 %v3135, %v3015
          %v3336 = vmul.f32 %v3139, %v3016
          %v3337 = vmul.f32 %v3143, %v3017
          %v3338 = vmul.f32 %v3147, %v3018
          %v3339 = vmul.f32 %v3151, %v3019
          %v3340 = vmul.f32 %v3155, %v3020
          %v3341 = vmul.f32 %v3159, %v3021
          %v3342 = vmul.f32 %v3163, %v3022
          %v3343 = vmul.f32 %v3167, %v3023
          %v3344 = vmul.f32 %v3171, %v3024
          %v3345 = vmul.f32 %v3175, %v3025
          %v3346 = vmul.f32 %v3179, %v3026
          %v3347 = vmul.f32 %v3183, %v3027
          %v3348 = vmul.f32 %v3187, %v3028
          %v3349 = vmul.f32 %v3191, %v3029
          %v3350 = vmul.f32 %v3195, %v3030
          %v3351 = vmul.f32 %v3199, %v3031
          %v3352 = vmul.f32 %v3203, %v3032
          %v3353 = vmul.f32 %v3207, %v3033
          %v3354 = vmul.f32 %v3211, %v3034
          %v3355 = vmul.f32 %v3215, %v3035
          %v3356 = vmul.f32 %v3219, %v3036
          %v3357 = vmul.f32 %v3223, %v3037
          %v3358 = vmul.f32 %v3227, %v3038
          %v3359 = vmul.f32 %v3231, %v3039
          %v3360 = vmul.f32 %v3235, %v3040
          %v3361 = vmul.f32 %v3239, %v3041
          %v3362 = vmul.f32 %v3243, %v3042
          %v3363 = vmul.f32 %v3247, %v3043
          %v3364 = vmul.f32 %v3251, %v3044
          %v3365 = vmul.f32 %v3255, %v3045
          %v3366 = vmul.f32 %v3259, %v3046
          %v3367 = vmul.f32 %v3263, %v3047
          %v3368 = vmul.f32 %v3267, %v3048
          %v3369 = vmul.f32 %v3271, %v3049
          %v3370 = vmul.f32 %v3275, %v3050
          %v3371 = vmul.f32 %v3279, %v3051
          %v3372 = vmul.f32 %v3283, %v3052
          %v3373 = vmul.f32 %v3287, %v3053
          %v3374 = vmul.f32 %v3291, %v3054
          %v3375 = vmul.f32 %v3295, %v3055
          %v3376 = vmul.f32 %v3299, %v3056
          %v3377 = vmul.f32 %v3303, %v3057
          %v3378 = vmul.f32 %v3307, %v3058
          %v3379 = vmul.f32 %v3311, %v3059
          %v3380 = vmul.f32 %v3315, %v3060
          %v3381 = vsel %vm2342, %v3317, 0.0
          %v3382 = vsel %vm2342, %v3318, 0.0
          %v3383 = vadd.f32 %v3381, %v3382
          %v3384 = vsel %vm2342, %v3319, 0.0
          %v3385 = vadd.f32 %v3383, %v3384
          %v3386 = vsel %vm2342, %v3320, 0.0
          %v3387 = vadd.f32 %v3385, %v3386
          %v3388 = vsel %vm2342, %v3321, 0.0
          %v3389 = vadd.f32 %v3387, %v3388
          %v3390 = vsel %vm2342, %v3322, 0.0
          %v3391 = vadd.f32 %v3389, %v3390
          %v3392 = vsel %vm2342, %v3323, 0.0
          %v3393 = vadd.f32 %v3391, %v3392
          %v3394 = vsel %vm2342, %v3324, 0.0
          %v3395 = vadd.f32 %v3393, %v3394
          %v3396 = vsel %vm2342, %v3325, 0.0
          %v3397 = vadd.f32 %v3395, %v3396
          %v3398 = vsel %vm2342, %v3326, 0.0
          %v3399 = vadd.f32 %v3397, %v3398
          %v3400 = vsel %vm2342, %v3327, 0.0
          %v3401 = vadd.f32 %v3399, %v3400
          %v3402 = vsel %vm2342, %v3328, 0.0
          %v3403 = vadd.f32 %v3401, %v3402
          %v3404 = vsel %vm2342, %v3329, 0.0
          %v3405 = vadd.f32 %v3403, %v3404
          %v3406 = vsel %vm2342, %v3330, 0.0
          %v3407 = vadd.f32 %v3405, %v3406
          %v3408 = vsel %vm2342, %v3331, 0.0
          %v3409 = vadd.f32 %v3407, %v3408
          %v3410 = vsel %vm2342, %v3332, 0.0
          %v3411 = vadd.f32 %v3409, %v3410
          %v3412 = vsel %vm2342, %v3333, 0.0
          %v3413 = vadd.f32 %v3411, %v3412
          %v3414 = vsel %vm2342, %v3334, 0.0
          %v3415 = vadd.f32 %v3413, %v3414
          %v3416 = vsel %vm2342, %v3335, 0.0
          %v3417 = vadd.f32 %v3415, %v3416
          %v3418 = vsel %vm2342, %v3336, 0.0
          %v3419 = vadd.f32 %v3417, %v3418
          %v3420 = vsel %vm2342, %v3337, 0.0
          %v3421 = vadd.f32 %v3419, %v3420
          %v3422 = vsel %vm2342, %v3338, 0.0
          %v3423 = vadd.f32 %v3421, %v3422
          %v3424 = vsel %vm2342, %v3339, 0.0
          %v3425 = vadd.f32 %v3423, %v3424
          %v3426 = vsel %vm2342, %v3340, 0.0
          %v3427 = vadd.f32 %v3425, %v3426
          %v3428 = vsel %vm2342, %v3341, 0.0
          %v3429 = vadd.f32 %v3427, %v3428
          %v3430 = vsel %vm2342, %v3342, 0.0
          %v3431 = vadd.f32 %v3429, %v3430
          %v3432 = vsel %vm2342, %v3343, 0.0
          %v3433 = vadd.f32 %v3431, %v3432
          %v3434 = vsel %vm2342, %v3344, 0.0
          %v3435 = vadd.f32 %v3433, %v3434
          %v3436 = vsel %vm2342, %v3345, 0.0
          %v3437 = vadd.f32 %v3435, %v3436
          %v3438 = vsel %vm2342, %v3346, 0.0
          %v3439 = vadd.f32 %v3437, %v3438
          %v3440 = vsel %vm2342, %v3347, 0.0
          %v3441 = vadd.f32 %v3439, %v3440
          %v3442 = vsel %vm2342, %v3348, 0.0
          %v3443 = vadd.f32 %v3441, %v3442
          %v3444 = vsel %vm2342, %v3349, 0.0
          %v3445 = vadd.f32 %v3443, %v3444
          %v3446 = vsel %vm2342, %v3350, 0.0
          %v3447 = vadd.f32 %v3445, %v3446
          %v3448 = vsel %vm2342, %v3351, 0.0
          %v3449 = vadd.f32 %v3447, %v3448
          %v3450 = vsel %vm2342, %v3352, 0.0
          %v3451 = vadd.f32 %v3449, %v3450
          %v3452 = vsel %vm2342, %v3353, 0.0
          %v3453 = vadd.f32 %v3451, %v3452
          %v3454 = vsel %vm2342, %v3354, 0.0
          %v3455 = vadd.f32 %v3453, %v3454
          %v3456 = vsel %vm2342, %v3355, 0.0
          %v3457 = vadd.f32 %v3455, %v3456
          %v3458 = vsel %vm2342, %v3356, 0.0
          %v3459 = vadd.f32 %v3457, %v3458
          %v3460 = vsel %vm2342, %v3357, 0.0
          %v3461 = vadd.f32 %v3459, %v3460
          %v3462 = vsel %vm2342, %v3358, 0.0
          %v3463 = vadd.f32 %v3461, %v3462
          %v3464 = vsel %vm2342, %v3359, 0.0
          %v3465 = vadd.f32 %v3463, %v3464
          %v3466 = vsel %vm2342, %v3360, 0.0
          %v3467 = vadd.f32 %v3465, %v3466
          %v3468 = vsel %vm2342, %v3361, 0.0
          %v3469 = vadd.f32 %v3467, %v3468
          %v3470 = vsel %vm2342, %v3362, 0.0
          %v3471 = vadd.f32 %v3469, %v3470
          %v3472 = vsel %vm2342, %v3363, 0.0
          %v3473 = vadd.f32 %v3471, %v3472
          %v3474 = vsel %vm2342, %v3364, 0.0
          %v3475 = vadd.f32 %v3473, %v3474
          %v3476 = vsel %vm2342, %v3365, 0.0
          %v3477 = vadd.f32 %v3475, %v3476
          %v3478 = vsel %vm2342, %v3366, 0.0
          %v3479 = vadd.f32 %v3477, %v3478
          %v3480 = vsel %vm2342, %v3367, 0.0
          %v3481 = vadd.f32 %v3479, %v3480
          %v3482 = vsel %vm2342, %v3368, 0.0
          %v3483 = vadd.f32 %v3481, %v3482
          %v3484 = vsel %vm2342, %v3369, 0.0
          %v3485 = vadd.f32 %v3483, %v3484
          %v3486 = vsel %vm2342, %v3370, 0.0
          %v3487 = vadd.f32 %v3485, %v3486
          %v3488 = vsel %vm2342, %v3371, 0.0
          %v3489 = vadd.f32 %v3487, %v3488
          %v3490 = vsel %vm2342, %v3372, 0.0
          %v3491 = vadd.f32 %v3489, %v3490
          %v3492 = vsel %vm2342, %v3373, 0.0
          %v3493 = vadd.f32 %v3491, %v3492
          %v3494 = vsel %vm2342, %v3374, 0.0
          %v3495 = vadd.f32 %v3493, %v3494
          %v3496 = vsel %vm2342, %v3375, 0.0
          %v3497 = vadd.f32 %v3495, %v3496
          %v3498 = vsel %vm2342, %v3376, 0.0
          %v3499 = vadd.f32 %v3497, %v3498
          %v3500 = vsel %vm2342, %v3377, 0.0
          %v3501 = vadd.f32 %v3499, %v3500
          %v3502 = vsel %vm2342, %v3378, 0.0
          %v3503 = vadd.f32 %v3501, %v3502
          %v3504 = vsel %vm2342, %v3379, 0.0
          %v3505 = vadd.f32 %v3503, %v3504
          %v3506 = vsel %vm2342, %v3380, 0.0
          %v3507 = vadd.f32 %v3505, %v3506
          %v3508 = vrot.slane %v3507, 4
          %v3509 = vadd.f32 %v3507, %v3508
          %v3510 = vrot.slane %v3509, 2
          %v3511 = vadd.f32 %v3509, %v3510
          %v3512 = vrot.slane %v3511, 1
          %v3513 = vadd.f32 %v3511, %v3512
          %v3514 = vadd.f32 %v2995, %v3513
          %s3515 = scalar_lea.vmem %s3, 1536
          %v3516 = vld [vmem:[%s3515] sm:$0xff]
          %v3517 = vld [vmem:[%s3515 + $0x8] sm:$0xff]
          %v3518 = vld [vmem:[%s3515 + $0x10] sm:$0xff]
          %v3519 = vld [vmem:[%s3515 + $0x18] sm:$0xff]
          %v3520 = vld [vmem:[%s3515 + $0x20] sm:$0xff]
          %v3521 = vld [vmem:[%s3515 + $0x28] sm:$0xff]
          %v3522 = vld [vmem:[%s3515 + $0x30] sm:$0xff]
          %v3523 = vld [vmem:[%s3515 + $0x38] sm:$0xff]
          %v3524 = vld [vmem:[%s3515 + $0x40] sm:$0xff]
          %v3525 = vld [vmem:[%s3515 + $0x48] sm:$0xff]
          %v3526 = vld [vmem:[%s3515 + $0x50] sm:$0xff]
          %v3527 = vld [vmem:[%s3515 + $0x58] sm:$0xff]
          %v3528 = vld [vmem:[%s3515 + $0x60] sm:$0xff]
          %v3529 = vld [vmem:[%s3515 + $0x68] sm:$0xff]
          %v3530 = vld [vmem:[%s3515 + $0x70] sm:$0xff]
          %v3531 = vld [vmem:[%s3515 + $0x78] sm:$0xff]
          %v3532 = vld [vmem:[%s3515 + $0x80] sm:$0xff]
          %v3533 = vld [vmem:[%s3515 + $0x88] sm:$0xff]
          %v3534 = vld [vmem:[%s3515 + $0x90] sm:$0xff]
          %v3535 = vld [vmem:[%s3515 + $0x98] sm:$0xff]
          %v3536 = vld [vmem:[%s3515 + $0xa0] sm:$0xff]
          %v3537 = vld [vmem:[%s3515 + $0xa8] sm:$0xff]
          %v3538 = vld [vmem:[%s3515 + $0xb0] sm:$0xff]
          %v3539 = vld [vmem:[%s3515 + $0xb8] sm:$0xff]
          %v3540 = vld [vmem:[%s3515 + $0xc0] sm:$0xff]
          %v3541 = vld [vmem:[%s3515 + $0xc8] sm:$0xff]
          %v3542 = vld [vmem:[%s3515 + $0xd0] sm:$0xff]
          %v3543 = vld [vmem:[%s3515 + $0xd8] sm:$0xff]
          %v3544 = vld [vmem:[%s3515 + $0xe0] sm:$0xff]
          %v3545 = vld [vmem:[%s3515 + $0xe8] sm:$0xff]
          %v3546 = vld [vmem:[%s3515 + $0xf0] sm:$0xff]
          %v3547 = vld [vmem:[%s3515 + $0xf8] sm:$0xff]
          %v3548 = vld [vmem:[%s3515 + $0x100] sm:$0xff]
          %v3549 = vld [vmem:[%s3515 + $0x108] sm:$0xff]
          %v3550 = vld [vmem:[%s3515 + $0x110] sm:$0xff]
          %v3551 = vld [vmem:[%s3515 + $0x118] sm:$0xff]
          %v3552 = vld [vmem:[%s3515 + $0x120] sm:$0xff]
          %v3553 = vld [vmem:[%s3515 + $0x128] sm:$0xff]
          %v3554 = vld [vmem:[%s3515 + $0x130] sm:$0xff]
          %v3555 = vld [vmem:[%s3515 + $0x138] sm:$0xff]
          %v3556 = vld [vmem:[%s3515 + $0x140] sm:$0xff]
          %v3557 = vld [vmem:[%s3515 + $0x148] sm:$0xff]
          %v3558 = vld [vmem:[%s3515 + $0x150] sm:$0xff]
          %v3559 = vld [vmem:[%s3515 + $0x158] sm:$0xff]
          %v3560 = vld [vmem:[%s3515 + $0x160] sm:$0xff]
          %v3561 = vld [vmem:[%s3515 + $0x168] sm:$0xff]
          %v3562 = vld [vmem:[%s3515 + $0x170] sm:$0xff]
          %v3563 = vld [vmem:[%s3515 + $0x178] sm:$0xff]
          %v3564 = vld [vmem:[%s3515 + $0x180] sm:$0xff]
          %v3565 = vld [vmem:[%s3515 + $0x188] sm:$0xff]
          %v3566 = vld [vmem:[%s3515 + $0x190] sm:$0xff]
          %v3567 = vld [vmem:[%s3515 + $0x198] sm:$0xff]
          %v3568 = vld [vmem:[%s3515 + $0x1a0] sm:$0xff]
          %v3569 = vld [vmem:[%s3515 + $0x1a8] sm:$0xff]
          %v3570 = vld [vmem:[%s3515 + $0x1b0] sm:$0xff]
          %v3571 = vld [vmem:[%s3515 + $0x1b8] sm:$0xff]
          %v3572 = vld [vmem:[%s3515 + $0x1c0] sm:$0xff]
          %v3573 = vld [vmem:[%s3515 + $0x1c8] sm:$0xff]
          %v3574 = vld [vmem:[%s3515 + $0x1d0] sm:$0xff]
          %v3575 = vld [vmem:[%s3515 + $0x1d8] sm:$0xff]
          %v3576 = vld [vmem:[%s3515 + $0x1e0] sm:$0xff]
          %v3577 = vld [vmem:[%s3515 + $0x1e8] sm:$0xff]
          %v3578 = vld [vmem:[%s3515 + $0x1f0] sm:$0xff]
          %v3579 = vld [vmem:[%s3515 + $0x1f8] sm:$0xff]
          %3580 = vset.pattern.permute.xlu0 3
          %3581 = vperm.xlu0 %3580, %v1830
          %v3582 = vpop.permute.xlu0 %3581
          %3584 = vset.pattern.permute.xlu0 3
          %3585 = vperm.xlu0 %3584, %v1831
          %v3586 = vpop.permute.xlu0 %3585
          %3588 = vset.pattern.permute.xlu0 3
          %3589 = vperm.xlu0 %3588, %v1832
          %v3590 = vpop.permute.xlu0 %3589
          %3592 = vset.pattern.permute.xlu0 3
          %3593 = vperm.xlu0 %3592, %v1833
          %v3594 = vpop.permute.xlu0 %3593
          %3596 = vset.pattern.permute.xlu0 3
          %3597 = vperm.xlu0 %3596, %v1834
          %v3598 = vpop.permute.xlu0 %3597
          %3600 = vset.pattern.permute.xlu0 3
          %3601 = vperm.xlu0 %3600, %v1835
          %v3602 = vpop.permute.xlu0 %3601
          %3604 = vset.pattern.permute.xlu0 3
          %3605 = vperm.xlu0 %3604, %v1836
          %v3606 = vpop.permute.xlu0 %3605
          %3608 = vset.pattern.permute.xlu0 3
          %3609 = vperm.xlu0 %3608, %v1837
          %v3610 = vpop.permute.xlu0 %3609
          %3612 = vset.pattern.permute.xlu0 3
          %3613 = vperm.xlu0 %3612, %v1838
          %v3614 = vpop.permute.xlu0 %3613
          %3616 = vset.pattern.permute.xlu0 3
          %3617 = vperm.xlu0 %3616, %v1839
          %v3618 = vpop.permute.xlu0 %3617
          %3620 = vset.pattern.permute.xlu0 3
          %3621 = vperm.xlu0 %3620, %v1840
          %v3622 = vpop.permute.xlu0 %3621
          %3624 = vset.pattern.permute.xlu0 3
          %3625 = vperm.xlu0 %3624, %v1841
          %v3626 = vpop.permute.xlu0 %3625
          %3628 = vset.pattern.permute.xlu0 3
          %3629 = vperm.xlu0 %3628, %v1842
          %v3630 = vpop.permute.xlu0 %3629
          %3632 = vset.pattern.permute.xlu0 3
          %3633 = vperm.xlu0 %3632, %v1843
          %v3634 = vpop.permute.xlu0 %3633
          %3636 = vset.pattern.permute.xlu0 3
          %3637 = vperm.xlu0 %3636, %v1844
          %v3638 = vpop.permute.xlu0 %3637
          %3640 = vset.pattern.permute.xlu0 3
          %3641 = vperm.xlu0 %3640, %v1845
          %v3642 = vpop.permute.xlu0 %3641
          %3644 = vset.pattern.permute.xlu0 3
          %3645 = vperm.xlu0 %3644, %v1846
          %v3646 = vpop.permute.xlu0 %3645
          %3648 = vset.pattern.permute.xlu0 3
          %3649 = vperm.xlu0 %3648, %v1847
          %v3650 = vpop.permute.xlu0 %3649
          %3652 = vset.pattern.permute.xlu0 3
          %3653 = vperm.xlu0 %3652, %v1848
          %v3654 = vpop.permute.xlu0 %3653
          %3656 = vset.pattern.permute.xlu0 3
          %3657 = vperm.xlu0 %3656, %v1849
          %v3658 = vpop.permute.xlu0 %3657
          %3660 = vset.pattern.permute.xlu0 3
          %3661 = vperm.xlu0 %3660, %v1850
          %v3662 = vpop.permute.xlu0 %3661
          %3664 = vset.pattern.permute.xlu0 3
          %3665 = vperm.xlu0 %3664, %v1851
          %v3666 = vpop.permute.xlu0 %3665
          %3668 = vset.pattern.permute.xlu0 3
          %3669 = vperm.xlu0 %3668, %v1852
          %v3670 = vpop.permute.xlu0 %3669
          %3672 = vset.pattern.permute.xlu0 3
          %3673 = vperm.xlu0 %3672, %v1853
          %v3674 = vpop.permute.xlu0 %3673
          %3676 = vset.pattern.permute.xlu0 3
          %3677 = vperm.xlu0 %3676, %v1854
          %v3678 = vpop.permute.xlu0 %3677
          %3680 = vset.pattern.permute.xlu0 3
          %3681 = vperm.xlu0 %3680, %v1855
          %v3682 = vpop.permute.xlu0 %3681
          %3684 = vset.pattern.permute.xlu0 3
          %3685 = vperm.xlu0 %3684, %v1856
          %v3686 = vpop.permute.xlu0 %3685
          %3688 = vset.pattern.permute.xlu0 3
          %3689 = vperm.xlu0 %3688, %v1857
          %v3690 = vpop.permute.xlu0 %3689
          %3692 = vset.pattern.permute.xlu0 3
          %3693 = vperm.xlu0 %3692, %v1858
          %v3694 = vpop.permute.xlu0 %3693
          %3696 = vset.pattern.permute.xlu0 3
          %3697 = vperm.xlu0 %3696, %v1859
          %v3698 = vpop.permute.xlu0 %3697
          %3700 = vset.pattern.permute.xlu0 3
          %3701 = vperm.xlu0 %3700, %v1860
          %v3702 = vpop.permute.xlu0 %3701
          %3704 = vset.pattern.permute.xlu0 3
          %3705 = vperm.xlu0 %3704, %v1861
          %v3706 = vpop.permute.xlu0 %3705
          %3708 = vset.pattern.permute.xlu0 3
          %3709 = vperm.xlu0 %3708, %v1862
          %v3710 = vpop.permute.xlu0 %3709
          %3712 = vset.pattern.permute.xlu0 3
          %3713 = vperm.xlu0 %3712, %v1863
          %v3714 = vpop.permute.xlu0 %3713
          %3716 = vset.pattern.permute.xlu0 3
          %3717 = vperm.xlu0 %3716, %v1864
          %v3718 = vpop.permute.xlu0 %3717
          %3720 = vset.pattern.permute.xlu0 3
          %3721 = vperm.xlu0 %3720, %v1865
          %v3722 = vpop.permute.xlu0 %3721
          %3724 = vset.pattern.permute.xlu0 3
          %3725 = vperm.xlu0 %3724, %v1866
          %v3726 = vpop.permute.xlu0 %3725
          %3728 = vset.pattern.permute.xlu0 3
          %3729 = vperm.xlu0 %3728, %v1867
          %v3730 = vpop.permute.xlu0 %3729
          %3732 = vset.pattern.permute.xlu0 3
          %3733 = vperm.xlu0 %3732, %v1868
          %v3734 = vpop.permute.xlu0 %3733
          %3736 = vset.pattern.permute.xlu0 3
          %3737 = vperm.xlu0 %3736, %v1869
          %v3738 = vpop.permute.xlu0 %3737
          %3740 = vset.pattern.permute.xlu0 3
          %3741 = vperm.xlu0 %3740, %v1870
          %v3742 = vpop.permute.xlu0 %3741
          %3744 = vset.pattern.permute.xlu0 3
          %3745 = vperm.xlu0 %3744, %v1871
          %v3746 = vpop.permute.xlu0 %3745
          %3748 = vset.pattern.permute.xlu0 3
          %3749 = vperm.xlu0 %3748, %v1872
          %v3750 = vpop.permute.xlu0 %3749
          %3752 = vset.pattern.permute.xlu0 3
          %3753 = vperm.xlu0 %3752, %v1873
          %v3754 = vpop.permute.xlu0 %3753
          %3756 = vset.pattern.permute.xlu0 3
          %3757 = vperm.xlu0 %3756, %v1874
          %v3758 = vpop.permute.xlu0 %3757
          %3760 = vset.pattern.permute.xlu0 3
          %3761 = vperm.xlu0 %3760, %v1875
          %v3762 = vpop.permute.xlu0 %3761
          %3764 = vset.pattern.permute.xlu0 3
          %3765 = vperm.xlu0 %3764, %v1876
          %v3766 = vpop.permute.xlu0 %3765
          %3768 = vset.pattern.permute.xlu0 3
          %3769 = vperm.xlu0 %3768, %v1877
          %v3770 = vpop.permute.xlu0 %3769
          %3772 = vset.pattern.permute.xlu0 3
          %3773 = vperm.xlu0 %3772, %v1878
          %v3774 = vpop.permute.xlu0 %3773
          %3776 = vset.pattern.permute.xlu0 3
          %3777 = vperm.xlu0 %3776, %v1879
          %v3778 = vpop.permute.xlu0 %3777
          %3780 = vset.pattern.permute.xlu0 3
          %3781 = vperm.xlu0 %3780, %v1880
          %v3782 = vpop.permute.xlu0 %3781
          %3784 = vset.pattern.permute.xlu0 3
          %3785 = vperm.xlu0 %3784, %v1881
          %v3786 = vpop.permute.xlu0 %3785
          %3788 = vset.pattern.permute.xlu0 3
          %3789 = vperm.xlu0 %3788, %v1882
          %v3790 = vpop.permute.xlu0 %3789
          %3792 = vset.pattern.permute.xlu0 3
          %3793 = vperm.xlu0 %3792, %v1883
          %v3794 = vpop.permute.xlu0 %3793
          %3796 = vset.pattern.permute.xlu0 3
          %3797 = vperm.xlu0 %3796, %v1884
          %v3798 = vpop.permute.xlu0 %3797
          %3800 = vset.pattern.permute.xlu0 3
          %3801 = vperm.xlu0 %3800, %v1885
          %v3802 = vpop.permute.xlu0 %3801
          %3804 = vset.pattern.permute.xlu0 3
          %3805 = vperm.xlu0 %3804, %v1886
          %v3806 = vpop.permute.xlu0 %3805
          %3808 = vset.pattern.permute.xlu0 3
          %3809 = vperm.xlu0 %3808, %v1887
          %v3810 = vpop.permute.xlu0 %3809
          %3812 = vset.pattern.permute.xlu0 3
          %3813 = vperm.xlu0 %3812, %v1888
          %v3814 = vpop.permute.xlu0 %3813
          %3816 = vset.pattern.permute.xlu0 3
          %3817 = vperm.xlu0 %3816, %v1889
          %v3818 = vpop.permute.xlu0 %3817
          %3820 = vset.pattern.permute.xlu0 3
          %3821 = vperm.xlu0 %3820, %v1890
          %v3822 = vpop.permute.xlu0 %3821
          %3824 = vset.pattern.permute.xlu0 3
          %3825 = vperm.xlu0 %3824, %v1891
          %v3826 = vpop.permute.xlu0 %3825
          %3828 = vset.pattern.permute.xlu0 3
          %3829 = vperm.xlu0 %3828, %v1892
          %v3830 = vpop.permute.xlu0 %3829
          %3832 = vset.pattern.permute.xlu0 3
          %3833 = vperm.xlu0 %3832, %v1893
          %v3834 = vpop.permute.xlu0 %3833
          %v3836 = vmul.f32 %v3582, %v3516
          %v3837 = vmul.f32 %v3586, %v3517
          %v3838 = vmul.f32 %v3590, %v3518
          %v3839 = vmul.f32 %v3594, %v3519
          %v3840 = vmul.f32 %v3598, %v3520
          %v3841 = vmul.f32 %v3602, %v3521
          %v3842 = vmul.f32 %v3606, %v3522
          %v3843 = vmul.f32 %v3610, %v3523
          %v3844 = vmul.f32 %v3614, %v3524
          %v3845 = vmul.f32 %v3618, %v3525
          %v3846 = vmul.f32 %v3622, %v3526
          %v3847 = vmul.f32 %v3626, %v3527
          %v3848 = vmul.f32 %v3630, %v3528
          %v3849 = vmul.f32 %v3634, %v3529
          %v3850 = vmul.f32 %v3638, %v3530
          %v3851 = vmul.f32 %v3642, %v3531
          %v3852 = vmul.f32 %v3646, %v3532
          %v3853 = vmul.f32 %v3650, %v3533
          %v3854 = vmul.f32 %v3654, %v3534
          %v3855 = vmul.f32 %v3658, %v3535
          %v3856 = vmul.f32 %v3662, %v3536
          %v3857 = vmul.f32 %v3666, %v3537
          %v3858 = vmul.f32 %v3670, %v3538
          %v3859 = vmul.f32 %v3674, %v3539
          %v3860 = vmul.f32 %v3678, %v3540
          %v3861 = vmul.f32 %v3682, %v3541
          %v3862 = vmul.f32 %v3686, %v3542
          %v3863 = vmul.f32 %v3690, %v3543
          %v3864 = vmul.f32 %v3694, %v3544
          %v3865 = vmul.f32 %v3698, %v3545
          %v3866 = vmul.f32 %v3702, %v3546
          %v3867 = vmul.f32 %v3706, %v3547
          %v3868 = vmul.f32 %v3710, %v3548
          %v3869 = vmul.f32 %v3714, %v3549
          %v3870 = vmul.f32 %v3718, %v3550
          %v3871 = vmul.f32 %v3722, %v3551
          %v3872 = vmul.f32 %v3726, %v3552
          %v3873 = vmul.f32 %v3730, %v3553
          %v3874 = vmul.f32 %v3734, %v3554
          %v3875 = vmul.f32 %v3738, %v3555
          %v3876 = vmul.f32 %v3742, %v3556
          %v3877 = vmul.f32 %v3746, %v3557
          %v3878 = vmul.f32 %v3750, %v3558
          %v3879 = vmul.f32 %v3754, %v3559
          %v3880 = vmul.f32 %v3758, %v3560
          %v3881 = vmul.f32 %v3762, %v3561
          %v3882 = vmul.f32 %v3766, %v3562
          %v3883 = vmul.f32 %v3770, %v3563
          %v3884 = vmul.f32 %v3774, %v3564
          %v3885 = vmul.f32 %v3778, %v3565
          %v3886 = vmul.f32 %v3782, %v3566
          %v3887 = vmul.f32 %v3786, %v3567
          %v3888 = vmul.f32 %v3790, %v3568
          %v3889 = vmul.f32 %v3794, %v3569
          %v3890 = vmul.f32 %v3798, %v3570
          %v3891 = vmul.f32 %v3802, %v3571
          %v3892 = vmul.f32 %v3806, %v3572
          %v3893 = vmul.f32 %v3810, %v3573
          %v3894 = vmul.f32 %v3814, %v3574
          %v3895 = vmul.f32 %v3818, %v3575
          %v3896 = vmul.f32 %v3822, %v3576
          %v3897 = vmul.f32 %v3826, %v3577
          %v3898 = vmul.f32 %v3830, %v3578
          %v3899 = vmul.f32 %v3834, %v3579
          %v3900 = vsel %vm2342, %v3836, 0.0
          %v3901 = vsel %vm2342, %v3837, 0.0
          %v3902 = vadd.f32 %v3900, %v3901
          %v3903 = vsel %vm2342, %v3838, 0.0
          %v3904 = vadd.f32 %v3902, %v3903
          %v3905 = vsel %vm2342, %v3839, 0.0
          %v3906 = vadd.f32 %v3904, %v3905
          %v3907 = vsel %vm2342, %v3840, 0.0
          %v3908 = vadd.f32 %v3906, %v3907
          %v3909 = vsel %vm2342, %v3841, 0.0
          %v3910 = vadd.f32 %v3908, %v3909
          %v3911 = vsel %vm2342, %v3842, 0.0
          %v3912 = vadd.f32 %v3910, %v3911
          %v3913 = vsel %vm2342, %v3843, 0.0
          %v3914 = vadd.f32 %v3912, %v3913
          %v3915 = vsel %vm2342, %v3844, 0.0
          %v3916 = vadd.f32 %v3914, %v3915
          %v3917 = vsel %vm2342, %v3845, 0.0
          %v3918 = vadd.f32 %v3916, %v3917
          %v3919 = vsel %vm2342, %v3846, 0.0
          %v3920 = vadd.f32 %v3918, %v3919
          %v3921 = vsel %vm2342, %v3847, 0.0
          %v3922 = vadd.f32 %v3920, %v3921
          %v3923 = vsel %vm2342, %v3848, 0.0
          %v3924 = vadd.f32 %v3922, %v3923
          %v3925 = vsel %vm2342, %v3849, 0.0
          %v3926 = vadd.f32 %v3924, %v3925
          %v3927 = vsel %vm2342, %v3850, 0.0
          %v3928 = vadd.f32 %v3926, %v3927
          %v3929 = vsel %vm2342, %v3851, 0.0
          %v3930 = vadd.f32 %v3928, %v3929
          %v3931 = vsel %vm2342, %v3852, 0.0
          %v3932 = vadd.f32 %v3930, %v3931
          %v3933 = vsel %vm2342, %v3853, 0.0
          %v3934 = vadd.f32 %v3932, %v3933
          %v3935 = vsel %vm2342, %v3854, 0.0
          %v3936 = vadd.f32 %v3934, %v3935
          %v3937 = vsel %vm2342, %v3855, 0.0
          %v3938 = vadd.f32 %v3936, %v3937
          %v3939 = vsel %vm2342, %v3856, 0.0
          %v3940 = vadd.f32 %v3938, %v3939
          %v3941 = vsel %vm2342, %v3857, 0.0
          %v3942 = vadd.f32 %v3940, %v3941
          %v3943 = vsel %vm2342, %v3858, 0.0
          %v3944 = vadd.f32 %v3942, %v3943
          %v3945 = vsel %vm2342, %v3859, 0.0
          %v3946 = vadd.f32 %v3944, %v3945
          %v3947 = vsel %vm2342, %v3860, 0.0
          %v3948 = vadd.f32 %v3946, %v3947
          %v3949 = vsel %vm2342, %v3861, 0.0
          %v3950 = vadd.f32 %v3948, %v3949
          %v3951 = vsel %vm2342, %v3862, 0.0
          %v3952 = vadd.f32 %v3950, %v3951
          %v3953 = vsel %vm2342, %v3863, 0.0
          %v3954 = vadd.f32 %v3952, %v3953
          %v3955 = vsel %vm2342, %v3864, 0.0
          %v3956 = vadd.f32 %v3954, %v3955
          %v3957 = vsel %vm2342, %v3865, 0.0
          %v3958 = vadd.f32 %v3956, %v3957
          %v3959 = vsel %vm2342, %v3866, 0.0
          %v3960 = vadd.f32 %v3958, %v3959
          %v3961 = vsel %vm2342, %v3867, 0.0
          %v3962 = vadd.f32 %v3960, %v3961
          %v3963 = vsel %vm2342, %v3868, 0.0
          %v3964 = vadd.f32 %v3962, %v3963
          %v3965 = vsel %vm2342, %v3869, 0.0
          %v3966 = vadd.f32 %v3964, %v3965
          %v3967 = vsel %vm2342, %v3870, 0.0
          %v3968 = vadd.f32 %v3966, %v3967
          %v3969 = vsel %vm2342, %v3871, 0.0
          %v3970 = vadd.f32 %v3968, %v3969
          %v3971 = vsel %vm2342, %v3872, 0.0
          %v3972 = vadd.f32 %v3970, %v3971
          %v3973 = vsel %vm2342, %v3873, 0.0
          %v3974 = vadd.f32 %v3972, %v3973
          %v3975 = vsel %vm2342, %v3874, 0.0
          %v3976 = vadd.f32 %v3974, %v3975
          %v3977 = vsel %vm2342, %v3875, 0.0
          %v3978 = vadd.f32 %v3976, %v3977
          %v3979 = vsel %vm2342, %v3876, 0.0
          %v3980 = vadd.f32 %v3978, %v3979
          %v3981 = vsel %vm2342, %v3877, 0.0
          %v3982 = vadd.f32 %v3980, %v3981
          %v3983 = vsel %vm2342, %v3878, 0.0
          %v3984 = vadd.f32 %v3982, %v3983
          %v3985 = vsel %vm2342, %v3879, 0.0
          %v3986 = vadd.f32 %v3984, %v3985
          %v3987 = vsel %vm2342, %v3880, 0.0
          %v3988 = vadd.f32 %v3986, %v3987
          %v3989 = vsel %vm2342, %v3881, 0.0
          %v3990 = vadd.f32 %v3988, %v3989
          %v3991 = vsel %vm2342, %v3882, 0.0
          %v3992 = vadd.f32 %v3990, %v3991
          %v3993 = vsel %vm2342, %v3883, 0.0
          %v3994 = vadd.f32 %v3992, %v3993
          %v3995 = vsel %vm2342, %v3884, 0.0
          %v3996 = vadd.f32 %v3994, %v3995
          %v3997 = vsel %vm2342, %v3885, 0.0
          %v3998 = vadd.f32 %v3996, %v3997
          %v3999 = vsel %vm2342, %v3886, 0.0
          %v4000 = vadd.f32 %v3998, %v3999
          %v4001 = vsel %vm2342, %v3887, 0.0
          %v4002 = vadd.f32 %v4000, %v4001
          %v4003 = vsel %vm2342, %v3888, 0.0
          %v4004 = vadd.f32 %v4002, %v4003
          %v4005 = vsel %vm2342, %v3889, 0.0
          %v4006 = vadd.f32 %v4004, %v4005
          %v4007 = vsel %vm2342, %v3890, 0.0
          %v4008 = vadd.f32 %v4006, %v4007
          %v4009 = vsel %vm2342, %v3891, 0.0
          %v4010 = vadd.f32 %v4008, %v4009
          %v4011 = vsel %vm2342, %v3892, 0.0
          %v4012 = vadd.f32 %v4010, %v4011
          %v4013 = vsel %vm2342, %v3893, 0.0
          %v4014 = vadd.f32 %v4012, %v4013
          %v4015 = vsel %vm2342, %v3894, 0.0
          %v4016 = vadd.f32 %v4014, %v4015
          %v4017 = vsel %vm2342, %v3895, 0.0
          %v4018 = vadd.f32 %v4016, %v4017
          %v4019 = vsel %vm2342, %v3896, 0.0
          %v4020 = vadd.f32 %v4018, %v4019
          %v4021 = vsel %vm2342, %v3897, 0.0
          %v4022 = vadd.f32 %v4020, %v4021
          %v4023 = vsel %vm2342, %v3898, 0.0
          %v4024 = vadd.f32 %v4022, %v4023
          %v4025 = vsel %vm2342, %v3899, 0.0
          %v4026 = vadd.f32 %v4024, %v4025
          %v4027 = vrot.slane %v4026, 4
          %v4028 = vadd.f32 %v4026, %v4027
          %v4029 = vrot.slane %v4028, 2
          %v4030 = vadd.f32 %v4028, %v4029
          %v4031 = vrot.slane %v4030, 1
          %v4032 = vadd.f32 %v4030, %v4031
          %v4033 = vadd.f32 %v3514, %v4032
          %s4034 = scalar_lea.vmem %s3, 2048
          %v4035 = vld [vmem:[%s4034] sm:$0xff]
          %v4036 = vld [vmem:[%s4034 + $0x8] sm:$0xff]
          %v4037 = vld [vmem:[%s4034 + $0x10] sm:$0xff]
          %v4038 = vld [vmem:[%s4034 + $0x18] sm:$0xff]
          %v4039 = vld [vmem:[%s4034 + $0x20] sm:$0xff]
          %v4040 = vld [vmem:[%s4034 + $0x28] sm:$0xff]
          %v4041 = vld [vmem:[%s4034 + $0x30] sm:$0xff]
          %v4042 = vld [vmem:[%s4034 + $0x38] sm:$0xff]
          %v4043 = vld [vmem:[%s4034 + $0x40] sm:$0xff]
          %v4044 = vld [vmem:[%s4034 + $0x48] sm:$0xff]
          %v4045 = vld [vmem:[%s4034 + $0x50] sm:$0xff]
          %v4046 = vld [vmem:[%s4034 + $0x58] sm:$0xff]
          %v4047 = vld [vmem:[%s4034 + $0x60] sm:$0xff]
          %v4048 = vld [vmem:[%s4034 + $0x68] sm:$0xff]
          %v4049 = vld [vmem:[%s4034 + $0x70] sm:$0xff]
          %v4050 = vld [vmem:[%s4034 + $0x78] sm:$0xff]
          %v4051 = vld [vmem:[%s4034 + $0x80] sm:$0xff]
          %v4052 = vld [vmem:[%s4034 + $0x88] sm:$0xff]
          %v4053 = vld [vmem:[%s4034 + $0x90] sm:$0xff]
          %v4054 = vld [vmem:[%s4034 + $0x98] sm:$0xff]
          %v4055 = vld [vmem:[%s4034 + $0xa0] sm:$0xff]
          %v4056 = vld [vmem:[%s4034 + $0xa8] sm:$0xff]
          %v4057 = vld [vmem:[%s4034 + $0xb0] sm:$0xff]
          %v4058 = vld [vmem:[%s4034 + $0xb8] sm:$0xff]
          %v4059 = vld [vmem:[%s4034 + $0xc0] sm:$0xff]
          %v4060 = vld [vmem:[%s4034 + $0xc8] sm:$0xff]
          %v4061 = vld [vmem:[%s4034 + $0xd0] sm:$0xff]
          %v4062 = vld [vmem:[%s4034 + $0xd8] sm:$0xff]
          %v4063 = vld [vmem:[%s4034 + $0xe0] sm:$0xff]
          %v4064 = vld [vmem:[%s4034 + $0xe8] sm:$0xff]
          %v4065 = vld [vmem:[%s4034 + $0xf0] sm:$0xff]
          %v4066 = vld [vmem:[%s4034 + $0xf8] sm:$0xff]
          %v4067 = vld [vmem:[%s4034 + $0x100] sm:$0xff]
          %v4068 = vld [vmem:[%s4034 + $0x108] sm:$0xff]
          %v4069 = vld [vmem:[%s4034 + $0x110] sm:$0xff]
          %v4070 = vld [vmem:[%s4034 + $0x118] sm:$0xff]
          %v4071 = vld [vmem:[%s4034 + $0x120] sm:$0xff]
          %v4072 = vld [vmem:[%s4034 + $0x128] sm:$0xff]
          %v4073 = vld [vmem:[%s4034 + $0x130] sm:$0xff]
          %v4074 = vld [vmem:[%s4034 + $0x138] sm:$0xff]
          %v4075 = vld [vmem:[%s4034 + $0x140] sm:$0xff]
          %v4076 = vld [vmem:[%s4034 + $0x148] sm:$0xff]
          %v4077 = vld [vmem:[%s4034 + $0x150] sm:$0xff]
          %v4078 = vld [vmem:[%s4034 + $0x158] sm:$0xff]
          %v4079 = vld [vmem:[%s4034 + $0x160] sm:$0xff]
          %v4080 = vld [vmem:[%s4034 + $0x168] sm:$0xff]
          %v4081 = vld [vmem:[%s4034 + $0x170] sm:$0xff]
          %v4082 = vld [vmem:[%s4034 + $0x178] sm:$0xff]
          %v4083 = vld [vmem:[%s4034 + $0x180] sm:$0xff]
          %v4084 = vld [vmem:[%s4034 + $0x188] sm:$0xff]
          %v4085 = vld [vmem:[%s4034 + $0x190] sm:$0xff]
          %v4086 = vld [vmem:[%s4034 + $0x198] sm:$0xff]
          %v4087 = vld [vmem:[%s4034 + $0x1a0] sm:$0xff]
          %v4088 = vld [vmem:[%s4034 + $0x1a8] sm:$0xff]
          %v4089 = vld [vmem:[%s4034 + $0x1b0] sm:$0xff]
          %v4090 = vld [vmem:[%s4034 + $0x1b8] sm:$0xff]
          %v4091 = vld [vmem:[%s4034 + $0x1c0] sm:$0xff]
          %v4092 = vld [vmem:[%s4034 + $0x1c8] sm:$0xff]
          %v4093 = vld [vmem:[%s4034 + $0x1d0] sm:$0xff]
          %v4094 = vld [vmem:[%s4034 + $0x1d8] sm:$0xff]
          %v4095 = vld [vmem:[%s4034 + $0x1e0] sm:$0xff]
          %v4096 = vld [vmem:[%s4034 + $0x1e8] sm:$0xff]
          %v4097 = vld [vmem:[%s4034 + $0x1f0] sm:$0xff]
          %v4098 = vld [vmem:[%s4034 + $0x1f8] sm:$0xff]
          %4099 = vset.pattern.permute.xlu0 4
          %4100 = vperm.xlu0 %4099, %v1830
          %v4101 = vpop.permute.xlu0 %4100
          %4103 = vset.pattern.permute.xlu0 4
          %4104 = vperm.xlu0 %4103, %v1831
          %v4105 = vpop.permute.xlu0 %4104
          %4107 = vset.pattern.permute.xlu0 4
          %4108 = vperm.xlu0 %4107, %v1832
          %v4109 = vpop.permute.xlu0 %4108
          %4111 = vset.pattern.permute.xlu0 4
          %4112 = vperm.xlu0 %4111, %v1833
          %v4113 = vpop.permute.xlu0 %4112
          %4115 = vset.pattern.permute.xlu0 4
          %4116 = vperm.xlu0 %4115, %v1834
          %v4117 = vpop.permute.xlu0 %4116
          %4119 = vset.pattern.permute.xlu0 4
          %4120 = vperm.xlu0 %4119, %v1835
          %v4121 = vpop.permute.xlu0 %4120
          %4123 = vset.pattern.permute.xlu0 4
          %4124 = vperm.xlu0 %4123, %v1836
          %v4125 = vpop.permute.xlu0 %4124
          %4127 = vset.pattern.permute.xlu0 4
          %4128 = vperm.xlu0 %4127, %v1837
          %v4129 = vpop.permute.xlu0 %4128
          %4131 = vset.pattern.permute.xlu0 4
          %4132 = vperm.xlu0 %4131, %v1838
          %v4133 = vpop.permute.xlu0 %4132
          %4135 = vset.pattern.permute.xlu0 4
          %4136 = vperm.xlu0 %4135, %v1839
          %v4137 = vpop.permute.xlu0 %4136
          %4139 = vset.pattern.permute.xlu0 4
          %4140 = vperm.xlu0 %4139, %v1840
          %v4141 = vpop.permute.xlu0 %4140
          %4143 = vset.pattern.permute.xlu0 4
          %4144 = vperm.xlu0 %4143, %v1841
          %v4145 = vpop.permute.xlu0 %4144
          %4147 = vset.pattern.permute.xlu0 4
          %4148 = vperm.xlu0 %4147, %v1842
          %v4149 = vpop.permute.xlu0 %4148
          %4151 = vset.pattern.permute.xlu0 4
          %4152 = vperm.xlu0 %4151, %v1843
          %v4153 = vpop.permute.xlu0 %4152
          %4155 = vset.pattern.permute.xlu0 4
          %4156 = vperm.xlu0 %4155, %v1844
          %v4157 = vpop.permute.xlu0 %4156
          %4159 = vset.pattern.permute.xlu0 4
          %4160 = vperm.xlu0 %4159, %v1845
          %v4161 = vpop.permute.xlu0 %4160
          %4163 = vset.pattern.permute.xlu0 4
          %4164 = vperm.xlu0 %4163, %v1846
          %v4165 = vpop.permute.xlu0 %4164
          %4167 = vset.pattern.permute.xlu0 4
          %4168 = vperm.xlu0 %4167, %v1847
          %v4169 = vpop.permute.xlu0 %4168
          %4171 = vset.pattern.permute.xlu0 4
          %4172 = vperm.xlu0 %4171, %v1848
          %v4173 = vpop.permute.xlu0 %4172
          %4175 = vset.pattern.permute.xlu0 4
          %4176 = vperm.xlu0 %4175, %v1849
          %v4177 = vpop.permute.xlu0 %4176
          %4179 = vset.pattern.permute.xlu0 4
          %4180 = vperm.xlu0 %4179, %v1850
          %v4181 = vpop.permute.xlu0 %4180
          %4183 = vset.pattern.permute.xlu0 4
          %4184 = vperm.xlu0 %4183, %v1851
          %v4185 = vpop.permute.xlu0 %4184
          %4187 = vset.pattern.permute.xlu0 4
          %4188 = vperm.xlu0 %4187, %v1852
          %v4189 = vpop.permute.xlu0 %4188
          %4191 = vset.pattern.permute.xlu0 4
          %4192 = vperm.xlu0 %4191, %v1853
          %v4193 = vpop.permute.xlu0 %4192
          %4195 = vset.pattern.permute.xlu0 4
          %4196 = vperm.xlu0 %4195, %v1854
          %v4197 = vpop.permute.xlu0 %4196
          %4199 = vset.pattern.permute.xlu0 4
          %4200 = vperm.xlu0 %4199, %v1855
          %v4201 = vpop.permute.xlu0 %4200
          %4203 = vset.pattern.permute.xlu0 4
          %4204 = vperm.xlu0 %4203, %v1856
          %v4205 = vpop.permute.xlu0 %4204
          %4207 = vset.pattern.permute.xlu0 4
          %4208 = vperm.xlu0 %4207, %v1857
          %v4209 = vpop.permute.xlu0 %4208
          %4211 = vset.pattern.permute.xlu0 4
          %4212 = vperm.xlu0 %4211, %v1858
          %v4213 = vpop.permute.xlu0 %4212
          %4215 = vset.pattern.permute.xlu0 4
          %4216 = vperm.xlu0 %4215, %v1859
          %v4217 = vpop.permute.xlu0 %4216
          %4219 = vset.pattern.permute.xlu0 4
          %4220 = vperm.xlu0 %4219, %v1860
          %v4221 = vpop.permute.xlu0 %4220
          %4223 = vset.pattern.permute.xlu0 4
          %4224 = vperm.xlu0 %4223, %v1861
          %v4225 = vpop.permute.xlu0 %4224
          %4227 = vset.pattern.permute.xlu0 4
          %4228 = vperm.xlu0 %4227, %v1862
          %v4229 = vpop.permute.xlu0 %4228
          %4231 = vset.pattern.permute.xlu0 4
          %4232 = vperm.xlu0 %4231, %v1863
          %v4233 = vpop.permute.xlu0 %4232
          %4235 = vset.pattern.permute.xlu0 4
          %4236 = vperm.xlu0 %4235, %v1864
          %v4237 = vpop.permute.xlu0 %4236
          %4239 = vset.pattern.permute.xlu0 4
          %4240 = vperm.xlu0 %4239, %v1865
          %v4241 = vpop.permute.xlu0 %4240
          %4243 = vset.pattern.permute.xlu0 4
          %4244 = vperm.xlu0 %4243, %v1866
          %v4245 = vpop.permute.xlu0 %4244
          %4247 = vset.pattern.permute.xlu0 4
          %4248 = vperm.xlu0 %4247, %v1867
          %v4249 = vpop.permute.xlu0 %4248
          %4251 = vset.pattern.permute.xlu0 4
          %4252 = vperm.xlu0 %4251, %v1868
          %v4253 = vpop.permute.xlu0 %4252
          %4255 = vset.pattern.permute.xlu0 4
          %4256 = vperm.xlu0 %4255, %v1869
          %v4257 = vpop.permute.xlu0 %4256
          %4259 = vset.pattern.permute.xlu0 4
          %4260 = vperm.xlu0 %4259, %v1870
          %v4261 = vpop.permute.xlu0 %4260
          %4263 = vset.pattern.permute.xlu0 4
          %4264 = vperm.xlu0 %4263, %v1871
          %v4265 = vpop.permute.xlu0 %4264
          %4267 = vset.pattern.permute.xlu0 4
          %4268 = vperm.xlu0 %4267, %v1872
          %v4269 = vpop.permute.xlu0 %4268
          %4271 = vset.pattern.permute.xlu0 4
          %4272 = vperm.xlu0 %4271, %v1873
          %v4273 = vpop.permute.xlu0 %4272
          %4275 = vset.pattern.permute.xlu0 4
          %4276 = vperm.xlu0 %4275, %v1874
          %v4277 = vpop.permute.xlu0 %4276
          %4279 = vset.pattern.permute.xlu0 4
          %4280 = vperm.xlu0 %4279, %v1875
          %v4281 = vpop.permute.xlu0 %4280
          %4283 = vset.pattern.permute.xlu0 4
          %4284 = vperm.xlu0 %4283, %v1876
          %v4285 = vpop.permute.xlu0 %4284
          %4287 = vset.pattern.permute.xlu0 4
          %4288 = vperm.xlu0 %4287, %v1877
          %v4289 = vpop.permute.xlu0 %4288
          %4291 = vset.pattern.permute.xlu0 4
          %4292 = vperm.xlu0 %4291, %v1878
          %v4293 = vpop.permute.xlu0 %4292
          %4295 = vset.pattern.permute.xlu0 4
          %4296 = vperm.xlu0 %4295, %v1879
          %v4297 = vpop.permute.xlu0 %4296
          %4299 = vset.pattern.permute.xlu0 4
          %4300 = vperm.xlu0 %4299, %v1880
          %v4301 = vpop.permute.xlu0 %4300
          %4303 = vset.pattern.permute.xlu0 4
          %4304 = vperm.xlu0 %4303, %v1881
          %v4305 = vpop.permute.xlu0 %4304
          %4307 = vset.pattern.permute.xlu0 4
          %4308 = vperm.xlu0 %4307, %v1882
          %v4309 = vpop.permute.xlu0 %4308
          %4311 = vset.pattern.permute.xlu0 4
          %4312 = vperm.xlu0 %4311, %v1883
          %v4313 = vpop.permute.xlu0 %4312
          %4315 = vset.pattern.permute.xlu0 4
          %4316 = vperm.xlu0 %4315, %v1884
          %v4317 = vpop.permute.xlu0 %4316
          %4319 = vset.pattern.permute.xlu0 4
          %4320 = vperm.xlu0 %4319, %v1885
          %v4321 = vpop.permute.xlu0 %4320
          %4323 = vset.pattern.permute.xlu0 4
          %4324 = vperm.xlu0 %4323, %v1886
          %v4325 = vpop.permute.xlu0 %4324
          %4327 = vset.pattern.permute.xlu0 4
          %4328 = vperm.xlu0 %4327, %v1887
          %v4329 = vpop.permute.xlu0 %4328
          %4331 = vset.pattern.permute.xlu0 4
          %4332 = vperm.xlu0 %4331, %v1888
          %v4333 = vpop.permute.xlu0 %4332
          %4335 = vset.pattern.permute.xlu0 4
          %4336 = vperm.xlu0 %4335, %v1889
          %v4337 = vpop.permute.xlu0 %4336
          %4339 = vset.pattern.permute.xlu0 4
          %4340 = vperm.xlu0 %4339, %v1890
          %v4341 = vpop.permute.xlu0 %4340
          %4343 = vset.pattern.permute.xlu0 4
          %4344 = vperm.xlu0 %4343, %v1891
          %v4345 = vpop.permute.xlu0 %4344
          %4347 = vset.pattern.permute.xlu0 4
          %4348 = vperm.xlu0 %4347, %v1892
          %v4349 = vpop.permute.xlu0 %4348
          %4351 = vset.pattern.permute.xlu0 4
          %4352 = vperm.xlu0 %4351, %v1893
          %v4353 = vpop.permute.xlu0 %4352
          %v4355 = vmul.f32 %v4101, %v4035
          %v4356 = vmul.f32 %v4105, %v4036
          %v4357 = vmul.f32 %v4109, %v4037
          %v4358 = vmul.f32 %v4113, %v4038
          %v4359 = vmul.f32 %v4117, %v4039
          %v4360 = vmul.f32 %v4121, %v4040
          %v4361 = vmul.f32 %v4125, %v4041
          %v4362 = vmul.f32 %v4129, %v4042
          %v4363 = vmul.f32 %v4133, %v4043
          %v4364 = vmul.f32 %v4137, %v4044
          %v4365 = vmul.f32 %v4141, %v4045
          %v4366 = vmul.f32 %v4145, %v4046
          %v4367 = vmul.f32 %v4149, %v4047
          %v4368 = vmul.f32 %v4153, %v4048
          %v4369 = vmul.f32 %v4157, %v4049
          %v4370 = vmul.f32 %v4161, %v4050
          %v4371 = vmul.f32 %v4165, %v4051
          %v4372 = vmul.f32 %v4169, %v4052
          %v4373 = vmul.f32 %v4173, %v4053
          %v4374 = vmul.f32 %v4177, %v4054
          %v4375 = vmul.f32 %v4181, %v4055
          %v4376 = vmul.f32 %v4185, %v4056
          %v4377 = vmul.f32 %v4189, %v4057
          %v4378 = vmul.f32 %v4193, %v4058
          %v4379 = vmul.f32 %v4197, %v4059
          %v4380 = vmul.f32 %v4201, %v4060
          %v4381 = vmul.f32 %v4205, %v4061
          %v4382 = vmul.f32 %v4209, %v4062
          %v4383 = vmul.f32 %v4213, %v4063
          %v4384 = vmul.f32 %v4217, %v4064
          %v4385 = vmul.f32 %v4221, %v4065
          %v4386 = vmul.f32 %v4225, %v4066
          %v4387 = vmul.f32 %v4229, %v4067
          %v4388 = vmul.f32 %v4233, %v4068
          %v4389 = vmul.f32 %v4237, %v4069
          %v4390 = vmul.f32 %v4241, %v4070
          %v4391 = vmul.f32 %v4245, %v4071
          %v4392 = vmul.f32 %v4249, %v4072
          %v4393 = vmul.f32 %v4253, %v4073
          %v4394 = vmul.f32 %v4257, %v4074
          %v4395 = vmul.f32 %v4261, %v4075
          %v4396 = vmul.f32 %v4265, %v4076
          %v4397 = vmul.f32 %v4269, %v4077
          %v4398 = vmul.f32 %v4273, %v4078
          %v4399 = vmul.f32 %v4277, %v4079
          %v4400 = vmul.f32 %v4281, %v4080
          %v4401 = vmul.f32 %v4285, %v4081
          %v4402 = vmul.f32 %v4289, %v4082
          %v4403 = vmul.f32 %v4293, %v4083
          %v4404 = vmul.f32 %v4297, %v4084
          %v4405 = vmul.f32 %v4301, %v4085
          %v4406 = vmul.f32 %v4305, %v4086
          %v4407 = vmul.f32 %v4309, %v4087
          %v4408 = vmul.f32 %v4313, %v4088
          %v4409 = vmul.f32 %v4317, %v4089
          %v4410 = vmul.f32 %v4321, %v4090
          %v4411 = vmul.f32 %v4325, %v4091
          %v4412 = vmul.f32 %v4329, %v4092
          %v4413 = vmul.f32 %v4333, %v4093
          %v4414 = vmul.f32 %v4337, %v4094
          %v4415 = vmul.f32 %v4341, %v4095
          %v4416 = vmul.f32 %v4345, %v4096
          %v4417 = vmul.f32 %v4349, %v4097
          %v4418 = vmul.f32 %v4353, %v4098
          %v4419 = vsel %vm2342, %v4355, 0.0
          %v4420 = vsel %vm2342, %v4356, 0.0
          %v4421 = vadd.f32 %v4419, %v4420
          %v4422 = vsel %vm2342, %v4357, 0.0
          %v4423 = vadd.f32 %v4421, %v4422
          %v4424 = vsel %vm2342, %v4358, 0.0
          %v4425 = vadd.f32 %v4423, %v4424
          %v4426 = vsel %vm2342, %v4359, 0.0
          %v4427 = vadd.f32 %v4425, %v4426
          %v4428 = vsel %vm2342, %v4360, 0.0
          %v4429 = vadd.f32 %v4427, %v4428
          %v4430 = vsel %vm2342, %v4361, 0.0
          %v4431 = vadd.f32 %v4429, %v4430
          %v4432 = vsel %vm2342, %v4362, 0.0
          %v4433 = vadd.f32 %v4431, %v4432
          %v4434 = vsel %vm2342, %v4363, 0.0
          %v4435 = vadd.f32 %v4433, %v4434
          %v4436 = vsel %vm2342, %v4364, 0.0
          %v4437 = vadd.f32 %v4435, %v4436
          %v4438 = vsel %vm2342, %v4365, 0.0
          %v4439 = vadd.f32 %v4437, %v4438
          %v4440 = vsel %vm2342, %v4366, 0.0
          %v4441 = vadd.f32 %v4439, %v4440
          %v4442 = vsel %vm2342, %v4367, 0.0
          %v4443 = vadd.f32 %v4441, %v4442
          %v4444 = vsel %vm2342, %v4368, 0.0
          %v4445 = vadd.f32 %v4443, %v4444
          %v4446 = vsel %vm2342, %v4369, 0.0
          %v4447 = vadd.f32 %v4445, %v4446
          %v4448 = vsel %vm2342, %v4370, 0.0
          %v4449 = vadd.f32 %v4447, %v4448
          %v4450 = vsel %vm2342, %v4371, 0.0
          %v4451 = vadd.f32 %v4449, %v4450
          %v4452 = vsel %vm2342, %v4372, 0.0
          %v4453 = vadd.f32 %v4451, %v4452
          %v4454 = vsel %vm2342, %v4373, 0.0
          %v4455 = vadd.f32 %v4453, %v4454
          %v4456 = vsel %vm2342, %v4374, 0.0
          %v4457 = vadd.f32 %v4455, %v4456
          %v4458 = vsel %vm2342, %v4375, 0.0
          %v4459 = vadd.f32 %v4457, %v4458
          %v4460 = vsel %vm2342, %v4376, 0.0
          %v4461 = vadd.f32 %v4459, %v4460
          %v4462 = vsel %vm2342, %v4377, 0.0
          %v4463 = vadd.f32 %v4461, %v4462
          %v4464 = vsel %vm2342, %v4378, 0.0
          %v4465 = vadd.f32 %v4463, %v4464
          %v4466 = vsel %vm2342, %v4379, 0.0
          %v4467 = vadd.f32 %v4465, %v4466
          %v4468 = vsel %vm2342, %v4380, 0.0
          %v4469 = vadd.f32 %v4467, %v4468
          %v4470 = vsel %vm2342, %v4381, 0.0
          %v4471 = vadd.f32 %v4469, %v4470
          %v4472 = vsel %vm2342, %v4382, 0.0
          %v4473 = vadd.f32 %v4471, %v4472
          %v4474 = vsel %vm2342, %v4383, 0.0
          %v4475 = vadd.f32 %v4473, %v4474
          %v4476 = vsel %vm2342, %v4384, 0.0
          %v4477 = vadd.f32 %v4475, %v4476
          %v4478 = vsel %vm2342, %v4385, 0.0
          %v4479 = vadd.f32 %v4477, %v4478
          %v4480 = vsel %vm2342, %v4386, 0.0
          %v4481 = vadd.f32 %v4479, %v4480
          %v4482 = vsel %vm2342, %v4387, 0.0
          %v4483 = vadd.f32 %v4481, %v4482
          %v4484 = vsel %vm2342, %v4388, 0.0
          %v4485 = vadd.f32 %v4483, %v4484
          %v4486 = vsel %vm2342, %v4389, 0.0
          %v4487 = vadd.f32 %v4485, %v4486
          %v4488 = vsel %vm2342, %v4390, 0.0
          %v4489 = vadd.f32 %v4487, %v4488
          %v4490 = vsel %vm2342, %v4391, 0.0
          %v4491 = vadd.f32 %v4489, %v4490
          %v4492 = vsel %vm2342, %v4392, 0.0
          %v4493 = vadd.f32 %v4491, %v4492
          %v4494 = vsel %vm2342, %v4393, 0.0
          %v4495 = vadd.f32 %v4493, %v4494
          %v4496 = vsel %vm2342, %v4394, 0.0
          %v4497 = vadd.f32 %v4495, %v4496
          %v4498 = vsel %vm2342, %v4395, 0.0
          %v4499 = vadd.f32 %v4497, %v4498
          %v4500 = vsel %vm2342, %v4396, 0.0
          %v4501 = vadd.f32 %v4499, %v4500
          %v4502 = vsel %vm2342, %v4397, 0.0
          %v4503 = vadd.f32 %v4501, %v4502
          %v4504 = vsel %vm2342, %v4398, 0.0
          %v4505 = vadd.f32 %v4503, %v4504
          %v4506 = vsel %vm2342, %v4399, 0.0
          %v4507 = vadd.f32 %v4505, %v4506
          %v4508 = vsel %vm2342, %v4400, 0.0
          %v4509 = vadd.f32 %v4507, %v4508
          %v4510 = vsel %vm2342, %v4401, 0.0
          %v4511 = vadd.f32 %v4509, %v4510
          %v4512 = vsel %vm2342, %v4402, 0.0
          %v4513 = vadd.f32 %v4511, %v4512
          %v4514 = vsel %vm2342, %v4403, 0.0
          %v4515 = vadd.f32 %v4513, %v4514
          %v4516 = vsel %vm2342, %v4404, 0.0
          %v4517 = vadd.f32 %v4515, %v4516
          %v4518 = vsel %vm2342, %v4405, 0.0
          %v4519 = vadd.f32 %v4517, %v4518
          %v4520 = vsel %vm2342, %v4406, 0.0
          %v4521 = vadd.f32 %v4519, %v4520
          %v4522 = vsel %vm2342, %v4407, 0.0
          %v4523 = vadd.f32 %v4521, %v4522
          %v4524 = vsel %vm2342, %v4408, 0.0
          %v4525 = vadd.f32 %v4523, %v4524
          %v4526 = vsel %vm2342, %v4409, 0.0
          %v4527 = vadd.f32 %v4525, %v4526
          %v4528 = vsel %vm2342, %v4410, 0.0
          %v4529 = vadd.f32 %v4527, %v4528
          %v4530 = vsel %vm2342, %v4411, 0.0
          %v4531 = vadd.f32 %v4529, %v4530
          %v4532 = vsel %vm2342, %v4412, 0.0
          %v4533 = vadd.f32 %v4531, %v4532
          %v4534 = vsel %vm2342, %v4413, 0.0
          %v4535 = vadd.f32 %v4533, %v4534
          %v4536 = vsel %vm2342, %v4414, 0.0
          %v4537 = vadd.f32 %v4535, %v4536
          %v4538 = vsel %vm2342, %v4415, 0.0
          %v4539 = vadd.f32 %v4537, %v4538
          %v4540 = vsel %vm2342, %v4416, 0.0
          %v4541 = vadd.f32 %v4539, %v4540
          %v4542 = vsel %vm2342, %v4417, 0.0
          %v4543 = vadd.f32 %v4541, %v4542
          %v4544 = vsel %vm2342, %v4418, 0.0
          %v4545 = vadd.f32 %v4543, %v4544
          %v4546 = vrot.slane %v4545, 4
          %v4547 = vadd.f32 %v4545, %v4546
          %v4548 = vrot.slane %v4547, 2
          %v4549 = vadd.f32 %v4547, %v4548
          %v4550 = vrot.slane %v4549, 1
          %v4551 = vadd.f32 %v4549, %v4550
          %v4552 = vadd.f32 %v4033, %v4551
          %vm4553 = vcmask 516096
          %4554 = vst.msk [vmem:[%s252] sm:$0x1] %vm4553, %v4552
        $region48: #{main_model_forward.1} parent=39 // pred_fallthru
          _
        %s4555 = sand.u32 %s156, 1
        %s4556 = scalar_lea.sflag [#allocation4], %s4555
        %s4557 = sand.u32 %s156, 1
        %s4558 = scalar_lea.vmem [#allocation3], %s4557
        // Predicated region
        $region49: #{main_model_forward.1} parent=39 // pred_check
          %p4559 = pneg %p166
        $region50: #{main_model_forward.1} parent=39 // pred_check_branch
          %4561 = sbr.rel (%p4559) target = $region52
        $region51: #{main_model_forward.1} parent=39 // pred_region
          %s4563 = ssub.s32 16, 16
          %4564 = vsyncadd %s4556, %s4563
          %s4565 = smul.addr %s23, 16
          %s4566 = scalar_lea.hbm %s5, %s4565
          %s4568 = sshll.u32 %s4558, 4
          %s4569 = int_to_ptr.vmem [resolvable:$true] %s4568
          %4571 = dma.vmem_to_hbm [thread:$0]  %s4569, 16, %s4566, %s4556
        $region52: #{main_model_forward.1} parent=39 // pred_fallthru
          _
      $region40: #{main_model_forward.1} parent=5 // pred_fallthru
        _
      %p4572 = scmp.le.s32.totalorder 2, %s14
      // Predicated region
      $region53: #{main_model_forward.1} parent=5 // pred_check
        %p4573 = pneg %p4572
      $region54: #{main_model_forward.1} parent=5 // pred_check_branch
        %4575 = sbr.rel (%p4573) target = $region56
      $region55: #{main_model_forward.1} parent=5 // pred_region
        %s4576 = ssub.s32 %s14, 2
        // Predicated region
        $region57: #{main_model_forward.1} parent=55 // pred_check
          %p4577 = pneg %p172
        $region58: #{main_model_forward.1} parent=55 // pred_check_branch
          %4579 = sbr.rel (%p4577) target = $region60
        $region59: #{main_model_forward.1} parent=55 // pred_region
          %s4580 = sand.u32 %s157, 1
          %s4581 = scalar_lea.sflag [#allocation4], %s4580
          %s4582 = sand.u32 %s157, 1
          %s4583 = scalar_lea.vmem [#allocation3], %s4582
          %4584 = dma.done %s4581, 16
        $region60: #{main_model_forward.1} parent=55 // pred_fallthru
          _
      $region56: #{main_model_forward.1} parent=5 // pred_fallthru
        _
    $region6: #{main_model_forward.1} parent=1 // loop_footer
      %s18 = sadd.s32 1, %s14
    $region7: #{main_model_forward.1} parent=1 // loop_footer_branch
      %13 = sbr.rel target = $region3
    $region8: #{main_model_forward.1} parent=1 // loop_exit
      _
    %4585 = vsyncpa [#allocation4], 1
    %s4586 = scalar_lea.sflag [#allocation4], 1
    %4587 = vsyncpa %s4586, 1

</llo_original>
